<compile_context>
chip_gen: v7x
topology: tpu7x:2x2x1
jax: 0.10.0
libtpu: 0.0.40
codegen_flags: <defaults>
</compile_context>

<pallas_src>
import jax
import jax.numpy as jnp
from jax.experimental import pallas as pl
from jax.experimental.pallas import tpu as pltpu

# ----- model hyper-parameters (module defaults) -----
D_MODEL = 128
NHEAD = 4
HEAD_DIM = D_MODEL // NHEAD
DFF = 512
NUM_LAYERS = 4
NUM_CLASSES = 30
CONV_CHANNELS = 64
LN_EPS = 1e-5
BN_EPS = 1e-5


def _round_up(x, m):
    return ((x + m - 1) // m) * m


def _attn_chunk(s, target=256):
    """Largest divisor of s that is <= target and a multiple of 8 (else s)."""
    if s <= target:
        return s
    for t in range(target, 7, -1):
        if s % t == 0 and t % 8 == 0:
            return t
    return s


# ----------------------------------------------------------------------------
# Kernels
# ----------------------------------------------------------------------------
def _conv_bn_relu_compute(x_ref, w_ref, b_ref, scale_ref, shift_ref, o_ref):
    """Strided conv as Kp accumulated unit-stride matmul taps + BN(eval) + ReLU."""
    li = pl.program_id(1)
    T, Cout = o_ref.shape[1], o_ref.shape[2]
    Kp = w_ref.shape[0]
    base = pl.multiple_of(li * T, 8)
    bias = b_ref[...]
    scale = scale_ref[...]
    shift = shift_ref[...]
    acc = jnp.zeros((T, Cout), jnp.float32)
    for j in range(Kp):                                   # static tap unroll
        xs = x_ref[0, pl.ds(base + j, T), :].astype(jnp.bfloat16)
        acc = acc + jnp.dot(xs, w_ref[j], preferred_element_type=jnp.float32)
    y = (acc + bias) * scale + shift
    return jnp.maximum(y, 0.0)


def _conv_bn_relu_kernel(x_ref, w_ref, b_ref, scale_ref, shift_ref, o_ref):
    o_ref[0] = _conv_bn_relu_compute(x_ref, w_ref, b_ref, scale_ref, shift_ref, o_ref)


def _conv_bn_relu_pos_kernel(x_ref, w_ref, b_ref, scale_ref, shift_ref, pos_ref, o_ref):
    # positional embedding fused into the conv2 epilogue
    o_ref[0] = (_conv_bn_relu_compute(x_ref, w_ref, b_ref, scale_ref, shift_ref, o_ref)
                + pos_ref[...])


def encoder_layer_kernel(x_ref, wqkv_ref, bqkv_ref, wo3_ref, bo_ref,
                         g1_ref, be1_ref, w1_ref, b1_ref, w2_ref, b2_ref,
                         g2_ref, be2_ref, o_ref):
    """One post-norm TransformerEncoderLayer (MHA + FFN) for one batch element."""
    S, D = x_ref.shape[1], x_ref.shape[2]
    x = x_ref[0]                                          # (S, D) f32
    xb = x.astype(jnp.bfloat16)

    # Fused QKV projection: one MXU matmul, lane-dense N = 3*D = 384.
    qkv = jnp.dot(xb, wqkv_ref[...], preferred_element_type=jnp.float32)
    qkv = qkv + bqkv_ref[...]                             # (S, 3D) f32

    # Split heads once (static slices), bf16 operands for the MXU.
    q_h = [qkv[:, h * HEAD_DIM:(h + 1) * HEAD_DIM].astype(jnp.bfloat16)
           for h in range(NHEAD)]
    k_h = [qkv[:, D + h * HEAD_DIM:D + (h + 1) * HEAD_DIM].astype(jnp.bfloat16)
           for h in range(NHEAD)]
    v_h = [qkv[:, 2 * D + h * HEAD_DIM:2 * D + (h + 1) * HEAD_DIM].astype(jnp.bfloat16)
           for h in range(NHEAD)]

    # Hoist small per-layer constants out of the chunk loop (broadcasts are
    # not CSE'd by JAX).
    bo = bo_ref[...]
    g1, be1 = g1_ref[...], be1_ref[...]
    g2, be2 = g2_ref[...], be2_ref[...]
    b1, b2 = b1_ref[...], b2_ref[...]

    inv_sqrt_d = 1.0 / jnp.sqrt(jnp.float32(HEAD_DIM))
    tq = _attn_chunk(S)                                   # query-row chunk
    nt = (((1,), (1,)), ((), ()))                         # 'qd,kd->qk'

    for c in range(S // tq):                              # static chunk loop
        r0 = c * tq
        attn = jnp.zeros((tq, D), jnp.float32)
        for h in range(NHEAD):                            # static head unroll
            qc = q_h[h][r0:r0 + tq]                       # (tq, HD) bf16
            s = jax.lax.dot_general(qc, k_h[h], nt,
                                    preferred_element_type=jnp.float32)
            s = s * inv_sqrt_d                            # (tq, S) f32
            s = s - jnp.max(s, axis=-1, keepdims=True)
            p = jnp.exp(s)
            p = p * pl.reciprocal(jnp.sum(p, axis=-1, keepdims=True), approx=True)
            hv = jnp.dot(p.astype(jnp.bfloat16), v_h[h],
                         preferred_element_type=jnp.float32)      # (tq, HD)
            # accumulate straight through the output projection (no concat)
            attn = attn + jnp.dot(hv.astype(jnp.bfloat16), wo3_ref[h],
                                  preferred_element_type=jnp.float32)

        # residual + LayerNorm 1 (f32).  TODO(synk): dropout omitted (eval).
        x1 = x[r0:r0 + tq] + attn + bo
        mu = jnp.mean(x1, axis=-1, keepdims=True)
        var = jnp.mean((x1 - mu) ** 2, axis=-1, keepdims=True)
        x1 = (x1 - mu) * jax.lax.rsqrt(var + LN_EPS) * g1 + be1

        # feed-forward on this row chunk (bf16 matmuls, f32 accumulation)
        hdn = jnp.dot(x1.astype(jnp.bfloat16), w1_ref[...],
                      preferred_element_type=jnp.float32) + b1
        hdn = jnp.maximum(hdn, 0.0)
        y = jnp.dot(hdn.astype(jnp.bfloat16), w2_ref[...],
                    preferred_element_type=jnp.float32) + b2

        # residual + LayerNorm 2
        x2 = x1 + y
        mu = jnp.mean(x2, axis=-1, keepdims=True)
        var = jnp.mean((x2 - mu) ** 2, axis=-1, keepdims=True)
        o_ref[0, r0:r0 + tq, :] = ((x2 - mu) * jax.lax.rsqrt(var + LN_EPS)
                                   * g2 + be2)


def classifier_kernel(x_ref, g_ref, b_ref, w_ref, bc_ref, o_ref):
    """AdaptiveAvgPool1d(1) over seq + Flatten + LayerNorm + Linear (per batch)."""
    x = x_ref[0]                                          # (S, D) f32
    pooled = jnp.mean(x, axis=0, keepdims=True)           # (1, D)
    mu = jnp.mean(pooled, axis=-1, keepdims=True)
    var = jnp.mean((pooled - mu) ** 2, axis=-1, keepdims=True)
    ln = (pooled - mu) * jax.lax.rsqrt(var + LN_EPS) * g_ref[...] + b_ref[...]
    o_ref[0] = jnp.dot(ln.astype(jnp.bfloat16), w_ref[...],
                       preferred_element_type=jnp.float32) + bc_ref[...]


# ----------------------------------------------------------------------------
# Wrappers (layout plumbing in plain JAX, hot path in Pallas)
# ----------------------------------------------------------------------------
def conv_bn_relu(x_blc, cp, *, stride, padding, pos=None):
    """x_blc: (B, L, Cin) -> (B, Lout, Cout); optionally fuses the positional add.

    No im2col: the padded input (B, L', Cin) is reshaped (free) to
    (B, L'/s, s*Cin) and the conv becomes ceil(K/s) unit-stride matmul taps.
    """
    B, L, Cin = x_blc.shape
    Cout, _, K = cp["w"].shape

    Lout = (L + 2 * padding - K) // stride + 1
    # Tile choice: minimise padding waste while keeping tiles <= ~256 rows.
    n_lt = pl.cdiv(Lout, 256)
    T = _round_up(pl.cdiv(Lout, n_lt), 8)                 # output row tile
    Lout_pad = T * n_lt

    Kp_total = _round_up(K, stride)
    Kp = Kp_total // stride                               # taps after collapse
    Cs = Cin * stride
    Lr = Lout_pad + Kp                                    # reshaped rows in VMEM
    L_total = Lr * stride

    xp = jnp.pad(x_blc, ((0, 0), (padding, L_total - L - padding), (0, 0)))
    xr = xp.reshape(B, Lr, Cs)

    w = jnp.pad(cp["w"], ((0, 0), (0, 0), (0, Kp_total - K)))
    w3 = (w.reshape(Cout, Cin, Kp, stride).transpose(2, 3, 1, 0)
           .reshape(Kp, Cs, Cout).astype(jnp.bfloat16))

    scale = (cp["gamma"] / jnp.sqrt(cp["var"] + BN_EPS)).reshape(1, Cout)
    shift = cp["beta"].reshape(1, Cout) - cp["mean"].reshape(1, Cout) * scale
    bias = cp["b"].reshape(1, Cout)

    in_specs = [
        pl.BlockSpec((1, Lr, Cs), lambda bi, li: (bi, 0, 0)),     # resident per b
        pl.BlockSpec((Kp, Cs, Cout), lambda bi, li: (0, 0, 0)),
        pl.BlockSpec((1, Cout), lambda bi, li: (0, 0)),
        pl.BlockSpec((1, Cout), lambda bi, li: (0, 0)),
        pl.BlockSpec((1, Cout), lambda bi, li: (0, 0)),
    ]
    args = [xr, w3, bias, scale, shift]
    kernel_fn = _conv_bn_relu_kernel
    if pos is not None:
        pos_pad = jnp.pad(pos[:Lout], ((0, Lout_pad - Lout), (0, 0)))
        in_specs.append(pl.BlockSpec((T, Cout), lambda bi, li: (li, 0)))
        args.append(pos_pad)
        kernel_fn = _conv_bn_relu_pos_kernel

    # NOTE: conv1 output is 64-lane wide (masked stores) — acceptable, tiny.
    out = pl.pallas_call(
        kernel_fn,
        grid=(B, n_lt),
        in_specs=in_specs,
        out_specs=pl.BlockSpec((1, T, Cout), lambda bi, li: (bi, li, 0)),
        out_shape=jax.ShapeDtypeStruct((B, Lout_pad, Cout), jnp.float32),
        compiler_params=pltpu.CompilerParams(
            dimension_semantics=("parallel", "parallel"),
            vmem_limit_bytes=64 * 1024 * 1024),
    )(*args)
    return out[:, :Lout, :]


def _pack_layer(p):
    """Fuse / cast per-layer weights once (outside the pallas_call)."""
    return [
        jnp.concatenate([p["wq"], p["wk"], p["wv"]], axis=1).astype(jnp.bfloat16),
        jnp.concatenate([p["bq"], p["bk"], p["bv"]], axis=1),
        p["wo"].reshape(NHEAD, HEAD_DIM, D_MODEL).astype(jnp.bfloat16),
        p["bo"], p["ln1_g"], p["ln1_b"],
        p["w1"].astype(jnp.bfloat16), p["b1"],
        p["w2"].astype(jnp.bfloat16), p["b2"],
        p["ln2_g"], p["ln2_b"],
    ]


def encoder_layer(x, wlist):
    """x: (B, S, D) -> (B, S, D); one grid step per batch element."""
    B, S, D = x.shape
    x_spec = pl.BlockSpec((1, S, D), lambda b: (b, 0, 0))
    w_specs = [pl.BlockSpec(w.shape, (lambda b, n=w.ndim: (0,) * n)) for w in wlist]
    return pl.pallas_call(
        encoder_layer_kernel,
        grid=(B,),
        in_specs=[x_spec] + w_specs,
        out_specs=pl.BlockSpec((1, S, D), lambda b: (b, 0, 0)),
        out_shape=jax.ShapeDtypeStruct((B, S, D), jnp.float32),
        compiler_params=pltpu.CompilerParams(
            dimension_semantics=("parallel",),
            vmem_limit_bytes=64 * 1024 * 1024),
    )(x, *wlist)


def classifier(h, params):
    B, S, D = h.shape
    w = params["cls_w"].astype(jnp.bfloat16)
    out = pl.pallas_call(
        classifier_kernel,
        grid=(B,),
        in_specs=[pl.BlockSpec((1, S, D), lambda b: (b, 0, 0)),
                  pl.BlockSpec((1, D), lambda b: (0, 0)),
                  pl.BlockSpec((1, D), lambda b: (0, 0)),
                  pl.BlockSpec((D, NUM_CLASSES), lambda b: (0, 0)),
                  pl.BlockSpec((1, NUM_CLASSES), lambda b: (0, 0))],
        out_specs=pl.BlockSpec((1, 1, NUM_CLASSES), lambda b: (b, 0, 0)),
        out_shape=jax.ShapeDtypeStruct((B, 1, NUM_CLASSES), jnp.float32),
        compiler_params=pltpu.CompilerParams(dimension_semantics=("parallel",)),
    )(h, params["cls_ln_g"], params["cls_ln_b"], w, params["cls_b"])
    return out[:, 0, :]


def forward(params, x):
    """x: (B, 1, L) raw audio in PyTorch NCL layout."""
    x_blc = x.transpose(0, 2, 1)                                       # (B, L, 1)
    h = conv_bn_relu(x_blc, params["c1"], stride=4, padding=6)         # (B, L1, 64)
    # conv2 with the positional-embedding add fused into its epilogue
    h = conv_bn_relu(h, params["c2"], stride=2, padding=3,
                     pos=params["pos_emb"][0])                         # (B, S, 128)
    for lp in params["layers"]:
        h = encoder_layer(h, _pack_layer(lp))
    return classifier(h, params)                                       # (B, classes)


# ----------------------------------------------------------------------------
# Deterministic parameter initialization (synthetic; matches module shapes)
# ----------------------------------------------------------------------------
def init_params(key):
    ks = iter(jax.random.split(key, 256))

    def nrm(shape, scale=0.02):
        return scale * jax.random.normal(next(ks), shape, jnp.float32)

    f32z = lambda s: jnp.zeros(s, jnp.float32)
    f32o = lambda s: jnp.ones(s, jnp.float32)

    params = {
        "c1": dict(w=nrm((CONV_CHANNELS, 1, 16)), b=f32z((CONV_CHANNELS,)),
                   gamma=f32o((CONV_CHANNELS,)), beta=f32z((CONV_CHANNELS,)),
                   mean=f32z((CONV_CHANNELS,)), var=f32o((CONV_CHANNELS,))),
        "c2": dict(w=nrm((D_MODEL, CONV_CHANNELS, 8)), b=f32z((D_MODEL,)),
                   gamma=f32o((D_MODEL,)), beta=f32z((D_MODEL,)),
                   mean=f32z((D_MODEL,)), var=f32o((D_MODEL,))),
        "pos_emb": nrm((1, 2000, D_MODEL), scale=1.0),
        "cls_ln_g": f32o((1, D_MODEL)),
        "cls_ln_b": f32z((1, D_MODEL)),
        "cls_w": nrm((D_MODEL, NUM_CLASSES)),
        "cls_b": f32z((1, NUM_CLASSES)),
    }
    layers = []
    for _ in range(NUM_LAYERS):
        layers.append(dict(
            wq=nrm((D_MODEL, D_MODEL)), wk=nrm((D_MODEL, D_MODEL)),
            wv=nrm((D_MODEL, D_MODEL)), wo=nrm((D_MODEL, D_MODEL)),
            bq=f32z((1, D_MODEL)), bk=f32z((1, D_MODEL)),
            bv=f32z((1, D_MODEL)), bo=f32z((1, D_MODEL)),
            ln1_g=f32o((1, D_MODEL)), ln1_b=f32z((1, D_MODEL)),
            w1=nrm((D_MODEL, DFF)), b1=f32z((1, DFF)),
            w2=nrm((DFF, D_MODEL)), b2=f32z((1, D_MODEL)),
            ln2_g=f32o((1, D_MODEL)), ln2_b=f32z((1, D_MODEL)),
        ))
    params["layers"] = layers
    return params


if __name__ == "__main__":
    # Small input: B=2, 1 channel, 128 samples -> conv1 L=32 -> conv2 seq=16.
    x = jax.random.normal(jax.random.PRNGKey(0), (2, 1, 128), jnp.float32)
    params = init_params(jax.random.PRNGKey(1))

    out = jax.jit(forward)(params, x)
    out = jax.block_until_ready(out)

    assert out.shape == (2, NUM_CLASSES), out.shape
    assert bool(jnp.all(jnp.isfinite(out)))
    print("KERNEL_OK")
</pallas_src>

<mosaic_0001>
module attributes {stable_mosaic.version = 11 : i64} {
  func.func @_conv_bn_relu_kernel(%arg0: i32, %arg1: i32, %arg2: memref<1x36x4xf32, #tpu.memory_space<vmem>>, %arg3: memref<4x4x64xbf16, #tpu.memory_space<vmem>>, %arg4: memref<1x64xf32, #tpu.memory_space<vmem>>, %arg5: memref<1x64xf32, #tpu.memory_space<vmem>>, %arg6: memref<1x64xf32, #tpu.memory_space<vmem>>, %arg7: memref<1x32x64xf32, #tpu.memory_space<vmem>>) attributes {dimension_semantics = [#tpu.dimension_semantics<parallel>, #tpu.dimension_semantics<parallel>], iteration_bounds = array<i64: 2, 1>, scalar_prefetch = 0 : i64, scratch_operands = 0 : i64, tpu.core_type = #tpu.core_type<tc>, window_params = [{transform_indices = @transform_0, window_bounds = array<i64: 1, 36, 4>}, {pipeline_mode = #tpu.pipeline_mode<synchronous>, transform_indices = @transform_1, window_bounds = array<i64: 4, 4, 64>}, {pipeline_mode = #tpu.pipeline_mode<synchronous>, transform_indices = @transform_2, window_bounds = array<i64: 1, 64>}, {pipeline_mode = #tpu.pipeline_mode<synchronous>, transform_indices = @transform_3, window_bounds = array<i64: 1, 64>}, {pipeline_mode = #tpu.pipeline_mode<synchronous>, transform_indices = @transform_4, window_bounds = array<i64: 1, 64>}, {transform_indices = @transform_5, window_bounds = array<i64: 1, 32, 64>}]} {
    %c32_i32 = arith.constant 32 : i32
    %0 = arith.muli %arg1, %c32_i32 : i32
    %1 = tpu.assume_multiple %0, 8 : i32
    %c0 = arith.constant 0 : index
    %c0_0 = arith.constant 0 : index
    %2 = vector.load %arg4[%c0, %c0_0] : memref<1x64xf32, #tpu.memory_space<vmem>>, vector<1x64xf32>
    %c0_1 = arith.constant 0 : index
    %c0_2 = arith.constant 0 : index
    %3 = vector.load %arg5[%c0_1, %c0_2] : memref<1x64xf32, #tpu.memory_space<vmem>>, vector<1x64xf32>
    %c0_3 = arith.constant 0 : index
    %c0_4 = arith.constant 0 : index
    %4 = vector.load %arg6[%c0_3, %c0_4] : memref<1x64xf32, #tpu.memory_space<vmem>>, vector<1x64xf32>
    %cst = arith.constant 0.000000e+00 : f32
    %5 = vector.broadcast %cst : f32 to vector<32x64xf32>
    %c0_i32 = arith.constant 0 : i32
    %6 = arith.addi %1, %c0_i32 : i32
    %c0_5 = arith.constant 0 : index
    %7 = arith.index_cast %6 : i32 to index
    %c0_6 = arith.constant 0 : index
    %8 = vector.load %arg2[%c0_5, %7, %c0_6] : memref<1x36x4xf32, #tpu.memory_space<vmem>>, vector<1x32x4xf32>
    %9 = vector.shape_cast %8 : vector<1x32x4xf32> to vector<32x4xf32>
    %10 = arith.truncf %9 : vector<32x4xf32> to vector<32x4xbf16>
    %c0_7 = arith.constant 0 : index
    %c0_8 = arith.constant 0 : index
    %c0_9 = arith.constant 0 : index
    %11 = vector.load %arg3[%c0_7, %c0_8, %c0_9] : memref<4x4x64xbf16, #tpu.memory_space<vmem>>, vector<1x4x64xbf16>
    %12 = vector.shape_cast %11 : vector<1x4x64xbf16> to vector<4x64xbf16>
    %cst_10 = arith.constant dense<0.000000e+00> : vector<32x64xf32>
    %13 = tpu.matmul %10, %12, %cst_10 {dimension_numbers = #tpu.dot_dimension_numbers<[1], [0], [0], [1], [0, 0, 1, 1], [], []>} : vector<32x4xbf16>, vector<4x64xbf16>, vector<32x64xf32> -> vector<32x64xf32>
    %14 = arith.addf %5, %13 : vector<32x64xf32>
    %c1_i32 = arith.constant 1 : i32
    %15 = arith.addi %1, %c1_i32 : i32
    %c0_11 = arith.constant 0 : index
    %16 = arith.index_cast %15 : i32 to index
    %c0_12 = arith.constant 0 : index
    %17 = vector.load %arg2[%c0_11, %16, %c0_12] : memref<1x36x4xf32, #tpu.memory_space<vmem>>, vector<1x32x4xf32>
    %18 = vector.shape_cast %17 : vector<1x32x4xf32> to vector<32x4xf32>
    %19 = arith.truncf %18 : vector<32x4xf32> to vector<32x4xbf16>
    %c1 = arith.constant 1 : index
    %c0_13 = arith.constant 0 : index
    %c0_14 = arith.constant 0 : index
    %20 = vector.load %arg3[%c1, %c0_13, %c0_14] : memref<4x4x64xbf16, #tpu.memory_space<vmem>>, vector<1x4x64xbf16>
    %21 = vector.shape_cast %20 : vector<1x4x64xbf16> to vector<4x64xbf16>
    %cst_15 = arith.constant dense<0.000000e+00> : vector<32x64xf32>
    %22 = tpu.matmul %19, %21, %cst_15 {dimension_numbers = #tpu.dot_dimension_numbers<[1], [0], [0], [1], [0, 0, 1, 1], [], []>} : vector<32x4xbf16>, vector<4x64xbf16>, vector<32x64xf32> -> vector<32x64xf32>
    %23 = arith.addf %14, %22 : vector<32x64xf32>
    %c2_i32 = arith.constant 2 : i32
    %24 = arith.addi %1, %c2_i32 : i32
    %c0_16 = arith.constant 0 : index
    %25 = arith.index_cast %24 : i32 to index
    %c0_17 = arith.constant 0 : index
    %26 = vector.load %arg2[%c0_16, %25, %c0_17] : memref<1x36x4xf32, #tpu.memory_space<vmem>>, vector<1x32x4xf32>
    %27 = vector.shape_cast %26 : vector<1x32x4xf32> to vector<32x4xf32>
    %28 = arith.truncf %27 : vector<32x4xf32> to vector<32x4xbf16>
    %c2 = arith.constant 2 : index
    %c0_18 = arith.constant 0 : index
    %c0_19 = arith.constant 0 : index
    %29 = vector.load %arg3[%c2, %c0_18, %c0_19] : memref<4x4x64xbf16, #tpu.memory_space<vmem>>, vector<1x4x64xbf16>
    %30 = vector.shape_cast %29 : vector<1x4x64xbf16> to vector<4x64xbf16>
    %cst_20 = arith.constant dense<0.000000e+00> : vector<32x64xf32>
    %31 = tpu.matmul %28, %30, %cst_20 {dimension_numbers = #tpu.dot_dimension_numbers<[1], [0], [0], [1], [0, 0, 1, 1], [], []>} : vector<32x4xbf16>, vector<4x64xbf16>, vector<32x64xf32> -> vector<32x64xf32>
    %32 = arith.addf %23, %31 : vector<32x64xf32>
    %c3_i32 = arith.constant 3 : i32
    %33 = arith.addi %1, %c3_i32 : i32
    %c0_21 = arith.constant 0 : index
    %34 = arith.index_cast %33 : i32 to index
    %c0_22 = arith.constant 0 : index
    %35 = vector.load %arg2[%c0_21, %34, %c0_22] : memref<1x36x4xf32, #tpu.memory_space<vmem>>, vector<1x32x4xf32>
    %36 = vector.shape_cast %35 : vector<1x32x4xf32> to vector<32x4xf32>
    %37 = arith.truncf %36 : vector<32x4xf32> to vector<32x4xbf16>
    %c3 = arith.constant 3 : index
    %c0_23 = arith.constant 0 : index
    %c0_24 = arith.constant 0 : index
    %38 = vector.load %arg3[%c3, %c0_23, %c0_24] : memref<4x4x64xbf16, #tpu.memory_space<vmem>>, vector<1x4x64xbf16>
    %39 = vector.shape_cast %38 : vector<1x4x64xbf16> to vector<4x64xbf16>
    %cst_25 = arith.constant dense<0.000000e+00> : vector<32x64xf32>
    %40 = tpu.matmul %37, %39, %cst_25 {dimension_numbers = #tpu.dot_dimension_numbers<[1], [0], [0], [1], [0, 0, 1, 1], [], []>} : vector<32x4xbf16>, vector<4x64xbf16>, vector<32x64xf32> -> vector<32x64xf32>
    %41 = arith.addf %32, %40 : vector<32x64xf32>
    %42 = vector.broadcast %2 : vector<1x64xf32> to vector<32x64xf32>
    %43 = arith.addf %41, %42 : vector<32x64xf32>
    %44 = vector.broadcast %3 : vector<1x64xf32> to vector<32x64xf32>
    %45 = arith.mulf %43, %44 : vector<32x64xf32>
    %46 = vector.broadcast %4 : vector<1x64xf32> to vector<32x64xf32>
    %47 = arith.addf %45, %46 : vector<32x64xf32>
    %cst_26 = arith.constant 0.000000e+00 : f32
    %48 = vector.broadcast %cst_26 : f32 to vector<32x64xf32>
    %49 = arith.maximumf %47, %48 : vector<32x64xf32>
    %c0_27 = arith.constant 0 : index
    %c0_28 = arith.constant 0 : index
    %c0_29 = arith.constant 0 : index
    %50 = vector.load %arg7[%c0_27, %c0_28, %c0_29] : memref<1x32x64xf32, #tpu.memory_space<vmem>>, vector<1x32x64xf32>
    %51 = vector.shape_cast %50 : vector<1x32x64xf32> to vector<32x64xf32>
    %52 = vector.shape_cast %49 : vector<32x64xf32> to vector<1x32x64xf32>
    tpu.vector_store %arg7[%c0_27, %c0_28, %c0_29], %52 {strides = array<i32>} : memref<1x32x64xf32, #tpu.memory_space<vmem>>, vector<1x32x64xf32>,
    return
  }
  func.func @transform_0(%arg0: i32, %arg1: i32) -> (i32, i32, i32) {
    %c0_i32 = arith.constant 0 : i32
    %c0_i32_0 = arith.constant 0 : i32
    %c0_i32_1 = arith.constant 0 : i32
    return %arg0, %c0_i32, %c0_i32_0 : i32, i32, i32
  }
  func.func @transform_1(%arg0: i32, %arg1: i32) -> (i32, i32, i32) {
    %c0_i32 = arith.constant 0 : i32
    %c0_i32_0 = arith.constant 0 : i32
    %c0_i32_1 = arith.constant 0 : i32
    %c0_i32_2 = arith.constant 0 : i32
    return %c0_i32, %c0_i32_0, %c0_i32_1 : i32, i32, i32
  }
  func.func @transform_2(%arg0: i32, %arg1: i32) -> (i32, i32) {
    %c0_i32 = arith.constant 0 : i32
    %c0_i32_0 = arith.constant 0 : i32
    %c0_i32_1 = arith.constant 0 : i32
    return %c0_i32, %c0_i32_0 : i32, i32
  }
  func.func @transform_3(%arg0: i32, %arg1: i32) -> (i32, i32) {
    %c0_i32 = arith.constant 0 : i32
    %c0_i32_0 = arith.constant 0 : i32
    %c0_i32_1 = arith.constant 0 : i32
    return %c0_i32, %c0_i32_0 : i32, i32
  }
  func.func @transform_4(%arg0: i32, %arg1: i32) -> (i32, i32) {
    %c0_i32 = arith.constant 0 : i32
    %c0_i32_0 = arith.constant 0 : i32
    %c0_i32_1 = arith.constant 0 : i32
    return %c0_i32, %c0_i32_0 : i32, i32
  }
  func.func @transform_5(%arg0: i32, %arg1: i32) -> (i32, i32, i32) {
    %c0_i32 = arith.constant 0 : i32
    %c0_i32_0 = arith.constant 0 : i32
    return %arg0, %arg1, %c0_i32 : i32, i32, i32
  }
}

module attributes {stable_mosaic.version = 11 : i64} {
  func.func @_conv_bn_relu_pos_kernel(%arg0: i32, %arg1: i32, %arg2: memref<1x20x128xf32, #tpu.memory_space<vmem>>, %arg3: memref<4x128x128xbf16, #tpu.memory_space<vmem>>, %arg4: memref<1x128xf32, #tpu.memory_space<vmem>>, %arg5: memref<1x128xf32, #tpu.memory_space<vmem>>, %arg6: memref<1x128xf32, #tpu.memory_space<vmem>>, %arg7: memref<16x128xf32, #tpu.memory_space<vmem>>, %arg8: memref<1x16x128xf32, #tpu.memory_space<vmem>>) attributes {dimension_semantics = [#tpu.dimension_semantics<parallel>, #tpu.dimension_semantics<parallel>], iteration_bounds = array<i64: 2, 1>, scalar_prefetch = 0 : i64, scratch_operands = 0 : i64, tpu.core_type = #tpu.core_type<tc>, window_params = [{transform_indices = @transform_0, window_bounds = array<i64: 1, 20, 128>}, {pipeline_mode = #tpu.pipeline_mode<synchronous>, transform_indices = @transform_1, window_bounds = array<i64: 4, 128, 128>}, {pipeline_mode = #tpu.pipeline_mode<synchronous>, transform_indices = @transform_2, window_bounds = array<i64: 1, 128>}, {pipeline_mode = #tpu.pipeline_mode<synchronous>, transform_indices = @transform_3, window_bounds = array<i64: 1, 128>}, {pipeline_mode = #tpu.pipeline_mode<synchronous>, transform_indices = @transform_4, window_bounds = array<i64: 1, 128>}, {transform_indices = @transform_5, window_bounds = array<i64: 16, 128>}, {transform_indices = @transform_6, window_bounds = array<i64: 1, 16, 128>}]} {
    %c16_i32 = arith.constant 16 : i32
    %0 = arith.muli %arg1, %c16_i32 : i32
    %1 = tpu.assume_multiple %0, 8 : i32
    %c0 = arith.constant 0 : index
    %c0_0 = arith.constant 0 : index
    %2 = vector.load %arg4[%c0, %c0_0] : memref<1x128xf32, #tpu.memory_space<vmem>>, vector<1x128xf32>
    %c0_1 = arith.constant 0 : index
    %c0_2 = arith.constant 0 : index
    %3 = vector.load %arg5[%c0_1, %c0_2] : memref<1x128xf32, #tpu.memory_space<vmem>>, vector<1x128xf32>
    %c0_3 = arith.constant 0 : index
    %c0_4 = arith.constant 0 : index
    %4 = vector.load %arg6[%c0_3, %c0_4] : memref<1x128xf32, #tpu.memory_space<vmem>>, vector<1x128xf32>
    %cst = arith.constant 0.000000e+00 : f32
    %5 = vector.broadcast %cst : f32 to vector<16x128xf32>
    %c0_i32 = arith.constant 0 : i32
    %6 = arith.addi %1, %c0_i32 : i32
    %c0_5 = arith.constant 0 : index
    %7 = arith.index_cast %6 : i32 to index
    %c0_6 = arith.constant 0 : index
    %8 = vector.load %arg2[%c0_5, %7, %c0_6] : memref<1x20x128xf32, #tpu.memory_space<vmem>>, vector<1x16x128xf32>
    %9 = vector.shape_cast %8 : vector<1x16x128xf32> to vector<16x128xf32>
    %10 = arith.truncf %9 : vector<16x128xf32> to vector<16x128xbf16>
    %c0_7 = arith.constant 0 : index
    %c0_8 = arith.constant 0 : index
    %c0_9 = arith.constant 0 : index
    %11 = vector.load %arg3[%c0_7, %c0_8, %c0_9] : memref<4x128x128xbf16, #tpu.memory_space<vmem>>, vector<1x128x128xbf16>
    %12 = vector.shape_cast %11 : vector<1x128x128xbf16> to vector<128x128xbf16>
    %cst_10 = arith.constant dense<0.000000e+00> : vector<16x128xf32>
    %13 = tpu.matmul %10, %12, %cst_10 {dimension_numbers = #tpu.dot_dimension_numbers<[1], [0], [0], [1], [0, 0, 1, 1], [], []>} : vector<16x128xbf16>, vector<128x128xbf16>, vector<16x128xf32> -> vector<16x128xf32>
    %14 = arith.addf %5, %13 : vector<16x128xf32>
    %c1_i32 = arith.constant 1 : i32
    %15 = arith.addi %1, %c1_i32 : i32
    %c0_11 = arith.constant 0 : index
    %16 = arith.index_cast %15 : i32 to index
    %c0_12 = arith.constant 0 : index
    %17 = vector.load %arg2[%c0_11, %16, %c0_12] : memref<1x20x128xf32, #tpu.memory_space<vmem>>, vector<1x16x128xf32>
    %18 = vector.shape_cast %17 : vector<1x16x128xf32> to vector<16x128xf32>
    %19 = arith.truncf %18 : vector<16x128xf32> to vector<16x128xbf16>
    %c1 = arith.constant 1 : index
    %c0_13 = arith.constant 0 : index
    %c0_14 = arith.constant 0 : index
    %20 = vector.load %arg3[%c1, %c0_13, %c0_14] : memref<4x128x128xbf16, #tpu.memory_space<vmem>>, vector<1x128x128xbf16>
    %21 = vector.shape_cast %20 : vector<1x128x128xbf16> to vector<128x128xbf16>
    %cst_15 = arith.constant dense<0.000000e+00> : vector<16x128xf32>
    %22 = tpu.matmul %19, %21, %cst_15 {dimension_numbers = #tpu.dot_dimension_numbers<[1], [0], [0], [1], [0, 0, 1, 1], [], []>} : vector<16x128xbf16>, vector<128x128xbf16>, vector<16x128xf32> -> vector<16x128xf32>
    %23 = arith.addf %14, %22 : vector<16x128xf32>
    %c2_i32 = arith.constant 2 : i32
    %24 = arith.addi %1, %c2_i32 : i32
    %c0_16 = arith.constant 0 : index
    %25 = arith.index_cast %24 : i32 to index
    %c0_17 = arith.constant 0 : index
    %26 = vector.load %arg2[%c0_16, %25, %c0_17] : memref<1x20x128xf32, #tpu.memory_space<vmem>>, vector<1x16x128xf32>
    %27 = vector.shape_cast %26 : vector<1x16x128xf32> to vector<16x128xf32>
    %28 = arith.truncf %27 : vector<16x128xf32> to vector<16x128xbf16>
    %c2 = arith.constant 2 : index
    %c0_18 = arith.constant 0 : index
    %c0_19 = arith.constant 0 : index
    %29 = vector.load %arg3[%c2, %c0_18, %c0_19] : memref<4x128x128xbf16, #tpu.memory_space<vmem>>, vector<1x128x128xbf16>
    %30 = vector.shape_cast %29 : vector<1x128x128xbf16> to vector<128x128xbf16>
    %cst_20 = arith.constant dense<0.000000e+00> : vector<16x128xf32>
    %31 = tpu.matmul %28, %30, %cst_20 {dimension_numbers = #tpu.dot_dimension_numbers<[1], [0], [0], [1], [0, 0, 1, 1], [], []>} : vector<16x128xbf16>, vector<128x128xbf16>, vector<16x128xf32> -> vector<16x128xf32>
    %32 = arith.addf %23, %31 : vector<16x128xf32>
    %c3_i32 = arith.constant 3 : i32
    %33 = arith.addi %1, %c3_i32 : i32
    %c0_21 = arith.constant 0 : index
    %34 = arith.index_cast %33 : i32 to index
    %c0_22 = arith.constant 0 : index
    %35 = vector.load %arg2[%c0_21, %34, %c0_22] : memref<1x20x128xf32, #tpu.memory_space<vmem>>, vector<1x16x128xf32>
    %36 = vector.shape_cast %35 : vector<1x16x128xf32> to vector<16x128xf32>
    %37 = arith.truncf %36 : vector<16x128xf32> to vector<16x128xbf16>
    %c3 = arith.constant 3 : index
    %c0_23 = arith.constant 0 : index
    %c0_24 = arith.constant 0 : index
    %38 = vector.load %arg3[%c3, %c0_23, %c0_24] : memref<4x128x128xbf16, #tpu.memory_space<vmem>>, vector<1x128x128xbf16>
    %39 = vector.shape_cast %38 : vector<1x128x128xbf16> to vector<128x128xbf16>
    %cst_25 = arith.constant dense<0.000000e+00> : vector<16x128xf32>
    %40 = tpu.matmul %37, %39, %cst_25 {dimension_numbers = #tpu.dot_dimension_numbers<[1], [0], [0], [1], [0, 0, 1, 1], [], []>} : vector<16x128xbf16>, vector<128x128xbf16>, vector<16x128xf32> -> vector<16x128xf32>
    %41 = arith.addf %32, %40 : vector<16x128xf32>
    %42 = vector.broadcast %2 : vector<1x128xf32> to vector<16x128xf32>
    %43 = arith.addf %41, %42 : vector<16x128xf32>
    %44 = vector.broadcast %3 : vector<1x128xf32> to vector<16x128xf32>
    %45 = arith.mulf %43, %44 : vector<16x128xf32>
    %46 = vector.broadcast %4 : vector<1x128xf32> to vector<16x128xf32>
    %47 = arith.addf %45, %46 : vector<16x128xf32>
    %cst_26 = arith.constant 0.000000e+00 : f32
    %48 = vector.broadcast %cst_26 : f32 to vector<16x128xf32>
    %49 = arith.maximumf %47, %48 : vector<16x128xf32>
    %c0_27 = arith.constant 0 : index
    %c0_28 = arith.constant 0 : index
    %50 = vector.load %arg7[%c0_27, %c0_28] : memref<16x128xf32, #tpu.memory_space<vmem>>, vector<16x128xf32>
    %51 = arith.addf %49, %50 : vector<16x128xf32>
    %c0_29 = arith.constant 0 : index
    %c0_30 = arith.constant 0 : index
    %c0_31 = arith.constant 0 : index
    %52 = vector.load %arg8[%c0_29, %c0_30, %c0_31] : memref<1x16x128xf32, #tpu.memory_space<vmem>>, vector<1x16x128xf32>
    %53 = vector.shape_cast %52 : vector<1x16x128xf32> to vector<16x128xf32>
    %54 = vector.shape_cast %51 : vector<16x128xf32> to vector<1x16x128xf32>
    tpu.vector_store %arg8[%c0_29, %c0_30, %c0_31], %54 {strides = array<i32>} : memref<1x16x128xf32, #tpu.memory_space<vmem>>, vector<1x16x128xf32>,
    return
  }
  func.func @transform_0(%arg0: i32, %arg1: i32) -> (i32, i32, i32) {
    %c0_i32 = arith.constant 0 : i32
    %c0_i32_0 = arith.constant 0 : i32
    %c0_i32_1 = arith.constant 0 : i32
    return %arg0, %c0_i32, %c0_i32_0 : i32, i32, i32
  }
  func.func @transform_1(%arg0: i32, %arg1: i32) -> (i32, i32, i32) {
    %c0_i32 = arith.constant 0 : i32
    %c0_i32_0 = arith.constant 0 : i32
    %c0_i32_1 = arith.constant 0 : i32
    %c0_i32_2 = arith.constant 0 : i32
    return %c0_i32, %c0_i32_0, %c0_i32_1 : i32, i32, i32
  }
  func.func @transform_2(%arg0: i32, %arg1: i32) -> (i32, i32) {
    %c0_i32 = arith.constant 0 : i32
    %c0_i32_0 = arith.constant 0 : i32
    %c0_i32_1 = arith.constant 0 : i32
    return %c0_i32, %c0_i32_0 : i32, i32
  }
  func.func @transform_3(%arg0: i32, %arg1: i32) -> (i32, i32) {
    %c0_i32 = arith.constant 0 : i32
    %c0_i32_0 = arith.constant 0 : i32
    %c0_i32_1 = arith.constant 0 : i32
    return %c0_i32, %c0_i32_0 : i32, i32
  }
  func.func @transform_4(%arg0: i32, %arg1: i32) -> (i32, i32) {
    %c0_i32 = arith.constant 0 : i32
    %c0_i32_0 = arith.constant 0 : i32
    %c0_i32_1 = arith.constant 0 : i32
    return %c0_i32, %c0_i32_0 : i32, i32
  }
  func.func @transform_5(%arg0: i32, %arg1: i32) -> (i32, i32) {
    %c0_i32 = arith.constant 0 : i32
    %c0_i32_0 = arith.constant 0 : i32
    return %arg1, %c0_i32 : i32, i32
  }
  func.func @transform_6(%arg0: i32, %arg1: i32) -> (i32, i32, i32) {
    %c0_i32 = arith.constant 0 : i32
    %c0_i32_0 = arith.constant 0 : i32
    return %arg0, %arg1, %c0_i32 : i32, i32, i32
  }
}

module attributes {stable_mosaic.version = 11 : i64} {
  func.func @encoder_layer_kernel(%arg0: i32, %arg1: memref<1x16x128xf32, #tpu.memory_space<vmem>>, %arg2: memref<128x384xbf16, #tpu.memory_space<vmem>>, %arg3: memref<1x384xf32, #tpu.memory_space<vmem>>, %arg4: memref<4x32x128xbf16, #tpu.memory_space<vmem>>, %arg5: memref<1x128xf32, #tpu.memory_space<vmem>>, %arg6: memref<1x128xf32, #tpu.memory_space<vmem>>, %arg7: memref<1x128xf32, #tpu.memory_space<vmem>>, %arg8: memref<128x512xbf16, #tpu.memory_space<vmem>>, %arg9: memref<1x512xf32, #tpu.memory_space<vmem>>, %arg10: memref<512x128xbf16, #tpu.memory_space<vmem>>, %arg11: memref<1x128xf32, #tpu.memory_space<vmem>>, %arg12: memref<1x128xf32, #tpu.memory_space<vmem>>, %arg13: memref<1x128xf32, #tpu.memory_space<vmem>>, %arg14: memref<1x16x128xf32, #tpu.memory_space<vmem>>) attributes {dimension_semantics = [#tpu.dimension_semantics<parallel>], iteration_bounds = array<i64: 2>, scalar_prefetch = 0 : i64, scratch_operands = 0 : i64, tpu.core_type = #tpu.core_type<tc>, window_params = [{transform_indices = @transform_0, window_bounds = array<i64: 1, 16, 128>}, {pipeline_mode = #tpu.pipeline_mode<synchronous>, transform_indices = @transform_1, window_bounds = array<i64: 128, 384>}, {pipeline_mode = #tpu.pipeline_mode<synchronous>, transform_indices = @transform_2, window_bounds = array<i64: 1, 384>}, {pipeline_mode = #tpu.pipeline_mode<synchronous>, transform_indices = @transform_3, window_bounds = array<i64: 4, 32, 128>}, {pipeline_mode = #tpu.pipeline_mode<synchronous>, transform_indices = @transform_4, window_bounds = array<i64: 1, 128>}, {pipeline_mode = #tpu.pipeline_mode<synchronous>, transform_indices = @transform_5, window_bounds = array<i64: 1, 128>}, {pipeline_mode = #tpu.pipeline_mode<synchronous>, transform_indices = @transform_6, window_bounds = array<i64: 1, 128>}, {pipeline_mode = #tpu.pipeline_mode<synchronous>, transform_indices = @transform_7, window_bounds = array<i64: 128, 512>}, {pipeline_mode = #tpu.pipeline_mode<synchronous>, transform_indices = @transform_8, window_bounds = array<i64: 1, 512>}, {pipeline_mode = #tpu.pipeline_mode<synchronous>, transform_indices = @transform_9, window_bounds = array<i64: 512, 128>}, {pipeline_mode = #tpu.pipeline_mode<synchronous>, transform_indices = @transform_10, window_bounds = array<i64: 1, 128>}, {pipeline_mode = #tpu.pipeline_mode<synchronous>, transform_indices = @transform_11, window_bounds = array<i64: 1, 128>}, {pipeline_mode = #tpu.pipeline_mode<synchronous>, transform_indices = @transform_12, window_bounds = array<i64: 1, 128>}, {transform_indices = @transform_13, window_bounds = array<i64: 1, 16, 128>}]} {
    %c0 = arith.constant 0 : index
    %c0_0 = arith.constant 0 : index
    %c0_1 = arith.constant 0 : index
    %0 = vector.load %arg1[%c0, %c0_0, %c0_1] : memref<1x16x128xf32, #tpu.memory_space<vmem>>, vector<1x16x128xf32>
    %1 = vector.shape_cast %0 : vector<1x16x128xf32> to vector<16x128xf32>
    %2 = arith.truncf %1 : vector<16x128xf32> to vector<16x128xbf16>
    %c0_2 = arith.constant 0 : index
    %c0_3 = arith.constant 0 : index
    %3 = vector.load %arg2[%c0_2, %c0_3] : memref<128x384xbf16, #tpu.memory_space<vmem>>, vector<128x384xbf16>
    %cst = arith.constant dense<0.000000e+00> : vector<16x384xf32>
    %4 = tpu.matmul %2, %3, %cst {dimension_numbers = #tpu.dot_dimension_numbers<[1], [0], [0], [1], [0, 0, 1, 1], [], []>} : vector<16x128xbf16>, vector<128x384xbf16>, vector<16x384xf32> -> vector<16x384xf32>
    %c0_4 = arith.constant 0 : index
    %c0_5 = arith.constant 0 : index
    %5 = vector.load %arg3[%c0_4, %c0_5] : memref<1x384xf32, #tpu.memory_space<vmem>>, vector<1x384xf32>
    %6 = vector.broadcast %5 : vector<1x384xf32> to vector<16x384xf32>
    %7 = arith.addf %4, %6 : vector<16x384xf32>
    %8 = vector.extract_strided_slice %7 {offsets = [0, 0], sizes = [16, 32], strides = [1, 1]} : vector<16x384xf32> to vector<16x32xf32>
    %9 = arith.truncf %8 : vector<16x32xf32> to vector<16x32xbf16>
    %10 = vector.extract_strided_slice %7 {offsets = [0, 32], sizes = [16, 32], strides = [1, 1]} : vector<16x384xf32> to vector<16x32xf32>
    %11 = arith.truncf %10 : vector<16x32xf32> to vector<16x32xbf16>
    %12 = vector.extract_strided_slice %7 {offsets = [0, 64], sizes = [16, 32], strides = [1, 1]} : vector<16x384xf32> to vector<16x32xf32>
    %13 = arith.truncf %12 : vector<16x32xf32> to vector<16x32xbf16>
    %14 = vector.extract_strided_slice %7 {offsets = [0, 96], sizes = [16, 32], strides = [1, 1]} : vector<16x384xf32> to vector<16x32xf32>
    %15 = arith.truncf %14 : vector<16x32xf32> to vector<16x32xbf16>
    %16 = vector.extract_strided_slice %7 {offsets = [0, 128], sizes = [16, 32], strides = [1, 1]} : vector<16x384xf32> to vector<16x32xf32>
    %17 = arith.truncf %16 : vector<16x32xf32> to vector<16x32xbf16>
    %18 = vector.extract_strided_slice %7 {offsets = [0, 160], sizes = [16, 32], strides = [1, 1]} : vector<16x384xf32> to vector<16x32xf32>
    %19 = arith.truncf %18 : vector<16x32xf32> to vector<16x32xbf16>
    %20 = vector.extract_strided_slice %7 {offsets = [0, 192], sizes = [16, 32], strides = [1, 1]} : vector<16x384xf32> to vector<16x32xf32>
    %21 = arith.truncf %20 : vector<16x32xf32> to vector<16x32xbf16>
    %22 = vector.extract_strided_slice %7 {offsets = [0, 224], sizes = [16, 32], strides = [1, 1]} : vector<16x384xf32> to vector<16x32xf32>
    %23 = arith.truncf %22 : vector<16x32xf32> to vector<16x32xbf16>
    %24 = vector.extract_strided_slice %7 {offsets = [0, 256], sizes = [16, 32], strides = [1, 1]} : vector<16x384xf32> to vector<16x32xf32>
    %25 = arith.truncf %24 : vector<16x32xf32> to vector<16x32xbf16>
    %26 = vector.extract_strided_slice %7 {offsets = [0, 288], sizes = [16, 32], strides = [1, 1]} : vector<16x384xf32> to vector<16x32xf32>
    %27 = arith.truncf %26 : vector<16x32xf32> to vector<16x32xbf16>
    %28 = vector.extract_strided_slice %7 {offsets = [0, 320], sizes = [16, 32], strides = [1, 1]} : vector<16x384xf32> to vector<16x32xf32>
    %29 = arith.truncf %28 : vector<16x32xf32> to vector<16x32xbf16>
    %30 = vector.extract_strided_slice %7 {offsets = [0, 352], sizes = [16, 32], strides = [1, 1]} : vector<16x384xf32> to vector<16x32xf32>
    %31 = arith.truncf %30 : vector<16x32xf32> to vector<16x32xbf16>
    %c0_6 = arith.constant 0 : index
    %c0_7 = arith.constant 0 : index
    %32 = vector.load %arg5[%c0_6, %c0_7] : memref<1x128xf32, #tpu.memory_space<vmem>>, vector<1x128xf32>
    %c0_8 = arith.constant 0 : index
    %c0_9 = arith.constant 0 : index
    %33 = vector.load %arg6[%c0_8, %c0_9] : memref<1x128xf32, #tpu.memory_space<vmem>>, vector<1x128xf32>
    %c0_10 = arith.constant 0 : index
    %c0_11 = arith.constant 0 : index
    %34 = vector.load %arg7[%c0_10, %c0_11] : memref<1x128xf32, #tpu.memory_space<vmem>>, vector<1x128xf32>
    %c0_12 = arith.constant 0 : index
    %c0_13 = arith.constant 0 : index
    %35 = vector.load %arg12[%c0_12, %c0_13] : memref<1x128xf32, #tpu.memory_space<vmem>>, vector<1x128xf32>
    %c0_14 = arith.constant 0 : index
    %c0_15 = arith.constant 0 : index
    %36 = vector.load %arg13[%c0_14, %c0_15] : memref<1x128xf32, #tpu.memory_space<vmem>>, vector<1x128xf32>
    %c0_16 = arith.constant 0 : index
    %c0_17 = arith.constant 0 : index
    %37 = vector.load %arg9[%c0_16, %c0_17] : memref<1x512xf32, #tpu.memory_space<vmem>>, vector<1x512xf32>
    %c0_18 = arith.constant 0 : index
    %c0_19 = arith.constant 0 : index
    %38 = vector.load %arg11[%c0_18, %c0_19] : memref<1x128xf32, #tpu.memory_space<vmem>>, vector<1x128xf32>
    %cst_20 = arith.constant 3.200000e+01 : f32
    %39 = math.sqrt %cst_20 : f32
    %cst_21 = arith.constant 1.000000e+00 : f32
    %40 = arith.divf %cst_21, %39 : f32
    %cst_22 = arith.constant 0.000000e+00 : f32
    %41 = vector.broadcast %cst_22 : f32 to vector<16x128xf32>
    %cst_23 = arith.constant dense<0.000000e+00> : vector<16x16xf32>
    %42 = tpu.matmul %9, %17, %cst_23 {dimension_numbers = #tpu.dot_dimension_numbers<[1], [1], [0], [0], [0, 0, 1, 0], [], []>} : vector<16x32xbf16>, vector<16x32xbf16>, vector<16x16xf32> -> vector<16x16xf32>
    %43 = vector.broadcast %40 : f32 to vector<16x16xf32>
    %44 = arith.mulf %42, %43 : vector<16x16xf32>
    %cst_24 = arith.constant dense<0xFF800000> : vector<16xf32>
    %45 = vector.multi_reduction <maximumf>, %44, %cst_24 [1] : vector<16x16xf32> to vector<16xf32>
    %46 = vector.shape_cast %45 : vector<16xf32> to vector<16x1xf32>
    %47 = vector.broadcast %46 : vector<16x1xf32> to vector<16x16xf32>
    %48 = arith.subf %44, %47 : vector<16x16xf32>
    %49 = math.exp %48 : vector<16x16xf32>
    %cst_25 = arith.constant dense<0.000000e+00> : vector<16xf32>
    %50 = vector.multi_reduction <add>, %49, %cst_25 [1] : vector<16x16xf32> to vector<16xf32>
    %51 = vector.shape_cast %50 : vector<16xf32> to vector<16x1xf32>
    %52 = tpu.reciprocal %51 {approx = true} : vector<16x1xf32> -> vector<16x1xf32>
    %53 = vector.broadcast %52 : vector<16x1xf32> to vector<16x16xf32>
    %54 = arith.mulf %49, %53 : vector<16x16xf32>
    %55 = arith.truncf %54 : vector<16x16xf32> to vector<16x16xbf16>
    %cst_26 = arith.constant dense<0.000000e+00> : vector<16x32xf32>
    %56 = tpu.matmul %55, %25, %cst_26 {dimension_numbers = #tpu.dot_dimension_numbers<[1], [0], [0], [1], [0, 0, 1, 1], [], []>} : vector<16x16xbf16>, vector<16x32xbf16>, vector<16x32xf32> -> vector<16x32xf32>
    %57 = arith.truncf %56 : vector<16x32xf32> to vector<16x32xbf16>
    %c0_27 = arith.constant 0 : index
    %c0_28 = arith.constant 0 : index
    %c0_29 = arith.constant 0 : index
    %58 = vector.load %arg4[%c0_27, %c0_28, %c0_29] : memref<4x32x128xbf16, #tpu.memory_space<vmem>>, vector<1x32x128xbf16>
    %59 = vector.shape_cast %58 : vector<1x32x128xbf16> to vector<32x128xbf16>
    %cst_30 = arith.constant dense<0.000000e+00> : vector<16x128xf32>
    %60 = tpu.matmul %57, %59, %cst_30 {dimension_numbers = #tpu.dot_dimension_numbers<[1], [0], [0], [1], [0, 0, 1, 1], [], []>} : vector<16x32xbf16>, vector<32x128xbf16>, vector<16x128xf32> -> vector<16x128xf32>
    %61 = arith.addf %41, %60 : vector<16x128xf32>
    %cst_31 = arith.constant dense<0.000000e+00> : vector<16x16xf32>
    %62 = tpu.matmul %11, %19, %cst_31 {dimension_numbers = #tpu.dot_dimension_numbers<[1], [1], [0], [0], [0, 0, 1, 0], [], []>} : vector<16x32xbf16>, vector<16x32xbf16>, vector<16x16xf32> -> vector<16x16xf32>
    %63 = vector.broadcast %40 : f32 to vector<16x16xf32>
    %64 = arith.mulf %62, %63 : vector<16x16xf32>
    %cst_32 = arith.constant dense<0xFF800000> : vector<16xf32>
    %65 = vector.multi_reduction <maximumf>, %64, %cst_32 [1] : vector<16x16xf32> to vector<16xf32>
    %66 = vector.shape_cast %65 : vector<16xf32> to vector<16x1xf32>
    %67 = vector.broadcast %66 : vector<16x1xf32> to vector<16x16xf32>
    %68 = arith.subf %64, %67 : vector<16x16xf32>
    %69 = math.exp %68 : vector<16x16xf32>
    %cst_33 = arith.constant dense<0.000000e+00> : vector<16xf32>
    %70 = vector.multi_reduction <add>, %69, %cst_33 [1] : vector<16x16xf32> to vector<16xf32>
    %71 = vector.shape_cast %70 : vector<16xf32> to vector<16x1xf32>
    %72 = tpu.reciprocal %71 {approx = true} : vector<16x1xf32> -> vector<16x1xf32>
    %73 = vector.broadcast %72 : vector<16x1xf32> to vector<16x16xf32>
    %74 = arith.mulf %69, %73 : vector<16x16xf32>
    %75 = arith.truncf %74 : vector<16x16xf32> to vector<16x16xbf16>
    %cst_34 = arith.constant dense<0.000000e+00> : vector<16x32xf32>
    %76 = tpu.matmul %75, %27, %cst_34 {dimension_numbers = #tpu.dot_dimension_numbers<[1], [0], [0], [1], [0, 0, 1, 1], [], []>} : vector<16x16xbf16>, vector<16x32xbf16>, vector<16x32xf32> -> vector<16x32xf32>
    %77 = arith.truncf %76 : vector<16x32xf32> to vector<16x32xbf16>
    %c1 = arith.constant 1 : index
    %c0_35 = arith.constant 0 : index
    %c0_36 = arith.constant 0 : index
    %78 = vector.load %arg4[%c1, %c0_35, %c0_36] : memref<4x32x128xbf16, #tpu.memory_space<vmem>>, vector<1x32x128xbf16>
    %79 = vector.shape_cast %78 : vector<1x32x128xbf16> to vector<32x128xbf16>
    %cst_37 = arith.constant dense<0.000000e+00> : vector<16x128xf32>
    %80 = tpu.matmul %77, %79, %cst_37 {dimension_numbers = #tpu.dot_dimension_numbers<[1], [0], [0], [1], [0, 0, 1, 1], [], []>} : vector<16x32xbf16>, vector<32x128xbf16>, vector<16x128xf32> -> vector<16x128xf32>
    %81 = arith.addf %61, %80 : vector<16x128xf32>
    %cst_38 = arith.constant dense<0.000000e+00> : vector<16x16xf32>
    %82 = tpu.matmul %13, %21, %cst_38 {dimension_numbers = #tpu.dot_dimension_numbers<[1], [1], [0], [0], [0, 0, 1, 0], [], []>} : vector<16x32xbf16>, vector<16x32xbf16>, vector<16x16xf32> -> vector<16x16xf32>
    %83 = vector.broadcast %40 : f32 to vector<16x16xf32>
    %84 = arith.mulf %82, %83 : vector<16x16xf32>
    %cst_39 = arith.constant dense<0xFF800000> : vector<16xf32>
    %85 = vector.multi_reduction <maximumf>, %84, %cst_39 [1] : vector<16x16xf32> to vector<16xf32>
    %86 = vector.shape_cast %85 : vector<16xf32> to vector<16x1xf32>
    %87 = vector.broadcast %86 : vector<16x1xf32> to vector<16x16xf32>
    %88 = arith.subf %84, %87 : vector<16x16xf32>
    %89 = math.exp %88 : vector<16x16xf32>
    %cst_40 = arith.constant dense<0.000000e+00> : vector<16xf32>
    %90 = vector.multi_reduction <add>, %89, %cst_40 [1] : vector<16x16xf32> to vector<16xf32>
    %91 = vector.shape_cast %90 : vector<16xf32> to vector<16x1xf32>
    %92 = tpu.reciprocal %91 {approx = true} : vector<16x1xf32> -> vector<16x1xf32>
    %93 = vector.broadcast %92 : vector<16x1xf32> to vector<16x16xf32>
    %94 = arith.mulf %89, %93 : vector<16x16xf32>
    %95 = arith.truncf %94 : vector<16x16xf32> to vector<16x16xbf16>
    %cst_41 = arith.constant dense<0.000000e+00> : vector<16x32xf32>
    %96 = tpu.matmul %95, %29, %cst_41 {dimension_numbers = #tpu.dot_dimension_numbers<[1], [0], [0], [1], [0, 0, 1, 1], [], []>} : vector<16x16xbf16>, vector<16x32xbf16>, vector<16x32xf32> -> vector<16x32xf32>
    %97 = arith.truncf %96 : vector<16x32xf32> to vector<16x32xbf16>
    %c2 = arith.constant 2 : index
    %c0_42 = arith.constant 0 : index
    %c0_43 = arith.constant 0 : index
    %98 = vector.load %arg4[%c2, %c0_42, %c0_43] : memref<4x32x128xbf16, #tpu.memory_space<vmem>>, vector<1x32x128xbf16>
    %99 = vector.shape_cast %98 : vector<1x32x128xbf16> to vector<32x128xbf16>
    %cst_44 = arith.constant dense<0.000000e+00> : vector<16x128xf32>
    %100 = tpu.matmul %97, %99, %cst_44 {dimension_numbers = #tpu.dot_dimension_numbers<[1], [0], [0], [1], [0, 0, 1, 1], [], []>} : vector<16x32xbf16>, vector<32x128xbf16>, vector<16x128xf32> -> vector<16x128xf32>
    %101 = arith.addf %81, %100 : vector<16x128xf32>
    %cst_45 = arith.constant dense<0.000000e+00> : vector<16x16xf32>
    %102 = tpu.matmul %15, %23, %cst_45 {dimension_numbers = #tpu.dot_dimension_numbers<[1], [1], [0], [0], [0, 0, 1, 0], [], []>} : vector<16x32xbf16>, vector<16x32xbf16>, vector<16x16xf32> -> vector<16x16xf32>
    %103 = vector.broadcast %40 : f32 to vector<16x16xf32>
    %104 = arith.mulf %102, %103 : vector<16x16xf32>
    %cst_46 = arith.constant dense<0xFF800000> : vector<16xf32>
    %105 = vector.multi_reduction <maximumf>, %104, %cst_46 [1] : vector<16x16xf32> to vector<16xf32>
    %106 = vector.shape_cast %105 : vector<16xf32> to vector<16x1xf32>
    %107 = vector.broadcast %106 : vector<16x1xf32> to vector<16x16xf32>
    %108 = arith.subf %104, %107 : vector<16x16xf32>
    %109 = math.exp %108 : vector<16x16xf32>
    %cst_47 = arith.constant dense<0.000000e+00> : vector<16xf32>
    %110 = vector.multi_reduction <add>, %109, %cst_47 [1] : vector<16x16xf32> to vector<16xf32>
    %111 = vector.shape_cast %110 : vector<16xf32> to vector<16x1xf32>
    %112 = tpu.reciprocal %111 {approx = true} : vector<16x1xf32> -> vector<16x1xf32>
    %113 = vector.broadcast %112 : vector<16x1xf32> to vector<16x16xf32>
    %114 = arith.mulf %109, %113 : vector<16x16xf32>
    %115 = arith.truncf %114 : vector<16x16xf32> to vector<16x16xbf16>
    %cst_48 = arith.constant dense<0.000000e+00> : vector<16x32xf32>
    %116 = tpu.matmul %115, %31, %cst_48 {dimension_numbers = #tpu.dot_dimension_numbers<[1], [0], [0], [1], [0, 0, 1, 1], [], []>} : vector<16x16xbf16>, vector<16x32xbf16>, vector<16x32xf32> -> vector<16x32xf32>
    %117 = arith.truncf %116 : vector<16x32xf32> to vector<16x32xbf16>
    %c3 = arith.constant 3 : index
    %c0_49 = arith.constant 0 : index
    %c0_50 = arith.constant 0 : index
    %118 = vector.load %arg4[%c3, %c0_49, %c0_50] : memref<4x32x128xbf16, #tpu.memory_space<vmem>>, vector<1x32x128xbf16>
    %119 = vector.shape_cast %118 : vector<1x32x128xbf16> to vector<32x128xbf16>
    %cst_51 = arith.constant dense<0.000000e+00> : vector<16x128xf32>
    %120 = tpu.matmul %117, %119, %cst_51 {dimension_numbers = #tpu.dot_dimension_numbers<[1], [0], [0], [1], [0, 0, 1, 1], [], []>} : vector<16x32xbf16>, vector<32x128xbf16>, vector<16x128xf32> -> vector<16x128xf32>
    %121 = arith.addf %101, %120 : vector<16x128xf32>
    %122 = arith.addf %1, %121 : vector<16x128xf32>
    %123 = vector.broadcast %32 : vector<1x128xf32> to vector<16x128xf32>
    %124 = arith.addf %122, %123 : vector<16x128xf32>
    %cst_52 = arith.constant dense<0.000000e+00> : vector<16xf32>
    %125 = vector.multi_reduction <add>, %124, %cst_52 [1] : vector<16x128xf32> to vector<16xf32>
    %126 = vector.shape_cast %125 : vector<16xf32> to vector<16x1xf32>
    %cst_53 = arith.constant 1.280000e+02 : f32
    %127 = vector.broadcast %cst_53 : f32 to vector<16x1xf32>
    %128 = arith.divf %126, %127 : vector<16x1xf32>
    %129 = vector.broadcast %128 : vector<16x1xf32> to vector<16x128xf32>
    %130 = arith.subf %124, %129 : vector<16x128xf32>
    %131 = arith.mulf %130, %130 : vector<16x128xf32>
    %cst_54 = arith.constant dense<0.000000e+00> : vector<16xf32>
    %132 = vector.multi_reduction <add>, %131, %cst_54 [1] : vector<16x128xf32> to vector<16xf32>
    %133 = vector.shape_cast %132 : vector<16xf32> to vector<16x1xf32>
    %cst_55 = arith.constant 1.280000e+02 : f32
    %134 = vector.broadcast %cst_55 : f32 to vector<16x1xf32>
    %135 = arith.divf %133, %134 : vector<16x1xf32>
    %136 = vector.broadcast %128 : vector<16x1xf32> to vector<16x128xf32>
    %137 = arith.subf %124, %136 : vector<16x128xf32>
    %cst_56 = arith.constant 9.99999974E-6 : f32
    %138 = vector.broadcast %cst_56 : f32 to vector<16x1xf32>
    %139 = arith.addf %135, %138 : vector<16x1xf32>
    %140 = math.rsqrt %139 : vector<16x1xf32>
    %141 = vector.broadcast %140 : vector<16x1xf32> to vector<16x128xf32>
    %142 = arith.mulf %137, %141 : vector<16x128xf32>
    %143 = vector.broadcast %33 : vector<1x128xf32> to vector<16x128xf32>
    %144 = arith.mulf %142, %143 : vector<16x128xf32>
    %145 = vector.broadcast %34 : vector<1x128xf32> to vector<16x128xf32>
    %146 = arith.addf %144, %145 : vector<16x128xf32>
    %147 = arith.truncf %146 : vector<16x128xf32> to vector<16x128xbf16>
    %c0_57 = arith.constant 0 : index
    %c0_58 = arith.constant 0 : index
    %148 = vector.load %arg8[%c0_57, %c0_58] : memref<128x512xbf16, #tpu.memory_space<vmem>>, vector<128x512xbf16>
    %cst_59 = arith.constant dense<0.000000e+00> : vector<16x512xf32>
    %149 = tpu.matmul %147, %148, %cst_59 {dimension_numbers = #tpu.dot_dimension_numbers<[1], [0], [0], [1], [0, 0, 1, 1], [], []>} : vector<16x128xbf16>, vector<128x512xbf16>, vector<16x512xf32> -> vector<16x512xf32>
    %150 = vector.broadcast %37 : vector<1x512xf32> to vector<16x512xf32>
    %151 = arith.addf %149, %150 : vector<16x512xf32>
    %cst_60 = arith.constant 0.000000e+00 : f32
    %152 = vector.broadcast %cst_60 : f32 to vector<16x512xf32>
    %153 = arith.maximumf %151, %152 : vector<16x512xf32>
    %154 = arith.truncf %153 : vector<16x512xf32> to vector<16x512xbf16>
    %c0_61 = arith.constant 0 : index
    %c0_62 = arith.constant 0 : index
    %155 = vector.load %arg10[%c0_61, %c0_62] : memref<512x128xbf16, #tpu.memory_space<vmem>>, vector<512x128xbf16>
    %cst_63 = arith.constant dense<0.000000e+00> : vector<16x128xf32>
    %156 = tpu.matmul %154, %155, %cst_63 {dimension_numbers = #tpu.dot_dimension_numbers<[1], [0], [0], [1], [0, 0, 1, 1], [], []>} : vector<16x512xbf16>, vector<512x128xbf16>, vector<16x128xf32> -> vector<16x128xf32>
    %157 = vector.broadcast %38 : vector<1x128xf32> to vector<16x128xf32>
    %158 = arith.addf %156, %157 : vector<16x128xf32>
    %159 = arith.addf %146, %158 : vector<16x128xf32>
    %cst_64 = arith.constant dense<0.000000e+00> : vector<16xf32>
    %160 = vector.multi_reduction <add>, %159, %cst_64 [1] : vector<16x128xf32> to vector<16xf32>
    %161 = vector.shape_cast %160 : vector<16xf32> to vector<16x1xf32>
    %cst_65 = arith.constant 1.280000e+02 : f32
    %162 = vector.broadcast %cst_65 : f32 to vector<16x1xf32>
    %163 = arith.divf %161, %162 : vector<16x1xf32>
    %164 = vector.broadcast %163 : vector<16x1xf32> to vector<16x128xf32>
    %165 = arith.subf %159, %164 : vector<16x128xf32>
    %166 = arith.mulf %165, %165 : vector<16x128xf32>
    %cst_66 = arith.constant dense<0.000000e+00> : vector<16xf32>
    %167 = vector.multi_reduction <add>, %166, %cst_66 [1] : vector<16x128xf32> to vector<16xf32>
    %168 = vector.shape_cast %167 : vector<16xf32> to vector<16x1xf32>
    %cst_67 = arith.constant 1.280000e+02 : f32
    %169 = vector.broadcast %cst_67 : f32 to vector<16x1xf32>
    %170 = arith.divf %168, %169 : vector<16x1xf32>
    %171 = vector.broadcast %163 : vector<16x1xf32> to vector<16x128xf32>
    %172 = arith.subf %159, %171 : vector<16x128xf32>
    %cst_68 = arith.constant 9.99999974E-6 : f32
    %173 = vector.broadcast %cst_68 : f32 to vector<16x1xf32>
    %174 = arith.addf %170, %173 : vector<16x1xf32>
    %175 = math.rsqrt %174 : vector<16x1xf32>
    %176 = vector.broadcast %175 : vector<16x1xf32> to vector<16x128xf32>
    %177 = arith.mulf %172, %176 : vector<16x128xf32>
    %178 = vector.broadcast %35 : vector<1x128xf32> to vector<16x128xf32>
    %179 = arith.mulf %177, %178 : vector<16x128xf32>
    %180 = vector.broadcast %36 : vector<1x128xf32> to vector<16x128xf32>
    %181 = arith.addf %179, %180 : vector<16x128xf32>
    %c0_69 = arith.constant 0 : index
    %c0_70 = arith.constant 0 : index
    %c0_71 = arith.constant 0 : index
    %182 = vector.load %arg14[%c0_69, %c0_70, %c0_71] : memref<1x16x128xf32, #tpu.memory_space<vmem>>, vector<1x16x128xf32>
    %183 = vector.shape_cast %182 : vector<1x16x128xf32> to vector<16x128xf32>
    %184 = vector.shape_cast %181 : vector<16x128xf32> to vector<1x16x128xf32>
    tpu.vector_store %arg14[%c0_69, %c0_70, %c0_71], %184 {strides = array<i32>} : memref<1x16x128xf32, #tpu.memory_space<vmem>>, vector<1x16x128xf32>,
    return
  }
  func.func @transform_0(%arg0: i32) -> (i32, i32, i32) {
    %c0_i32 = arith.constant 0 : i32
    %c0_i32_0 = arith.constant 0 : i32
    %c0_i32_1 = arith.constant 0 : i32
    return %arg0, %c0_i32, %c0_i32_0 : i32, i32, i32
  }
  func.func @transform_1(%arg0: i32) -> (i32, i32) {
    %c0_i32 = arith.constant 0 : i32
    %c0_i32_0 = arith.constant 0 : i32
    %c0_i32_1 = arith.constant 0 : i32
    return %c0_i32, %c0_i32_0 : i32, i32
  }
  func.func @transform_2(%arg0: i32) -> (i32, i32) {
    %c0_i32 = arith.constant 0 : i32
    %c0_i32_0 = arith.constant 0 : i32
    %c0_i32_1 = arith.constant 0 : i32
    return %c0_i32, %c0_i32_0 : i32, i32
  }
  func.func @transform_3(%arg0: i32) -> (i32, i32, i32) {
    %c0_i32 = arith.constant 0 : i32
    %c0_i32_0 = arith.constant 0 : i32
    %c0_i32_1 = arith.constant 0 : i32
    %c0_i32_2 = arith.constant 0 : i32
    return %c0_i32, %c0_i32_0, %c0_i32_1 : i32, i32, i32
  }
  func.func @transform_4(%arg0: i32) -> (i32, i32) {
    %c0_i32 = arith.constant 0 : i32
    %c0_i32_0 = arith.constant 0 : i32
    %c0_i32_1 = arith.constant 0 : i32
    return %c0_i32, %c0_i32_0 : i32, i32
  }
  func.func @transform_5(%arg0: i32) -> (i32, i32) {
    %c0_i32 = arith.constant 0 : i32
    %c0_i32_0 = arith.constant 0 : i32
    %c0_i32_1 = arith.constant 0 : i32
    return %c0_i32, %c0_i32_0 : i32, i32
  }
  func.func @transform_6(%arg0: i32) -> (i32, i32) {
    %c0_i32 = arith.constant 0 : i32
    %c0_i32_0 = arith.constant 0 : i32
    %c0_i32_1 = arith.constant 0 : i32
    return %c0_i32, %c0_i32_0 : i32, i32
  }
  func.func @transform_7(%arg0: i32) -> (i32, i32) {
    %c0_i32 = arith.constant 0 : i32
    %c0_i32_0 = arith.constant 0 : i32
    %c0_i32_1 = arith.constant 0 : i32
    return %c0_i32, %c0_i32_0 : i32, i32
  }
  func.func @transform_8(%arg0: i32) -> (i32, i32) {
    %c0_i32 = arith.constant 0 : i32
    %c0_i32_0 = arith.constant 0 : i32
    %c0_i32_1 = arith.constant 0 : i32
    return %c0_i32, %c0_i32_0 : i32, i32
  }
  func.func @transform_9(%arg0: i32) -> (i32, i32) {
    %c0_i32 = arith.constant 0 : i32
    %c0_i32_0 = arith.constant 0 : i32
    %c0_i32_1 = arith.constant 0 : i32
    return %c0_i32, %c0_i32_0 : i32, i32
  }
  func.func @transform_10(%arg0: i32) -> (i32, i32) {
    %c0_i32 = arith.constant 0 : i32
    %c0_i32_0 = arith.constant 0 : i32
    %c0_i32_1 = arith.constant 0 : i32
    return %c0_i32, %c0_i32_0 : i32, i32
  }
  func.func @transform_11(%arg0: i32) -> (i32, i32) {
    %c0_i32 = arith.constant 0 : i32
    %c0_i32_0 = arith.constant 0 : i32
    %c0_i32_1 = arith.constant 0 : i32
    return %c0_i32, %c0_i32_0 : i32, i32
  }
  func.func @transform_12(%arg0: i32) -> (i32, i32) {
    %c0_i32 = arith.constant 0 : i32
    %c0_i32_0 = arith.constant 0 : i32
    %c0_i32_1 = arith.constant 0 : i32
    return %c0_i32, %c0_i32_0 : i32, i32
  }
  func.func @transform_13(%arg0: i32) -> (i32, i32, i32) {
    %c0_i32 = arith.constant 0 : i32
    %c0_i32_0 = arith.constant 0 : i32
    %c0_i32_1 = arith.constant 0 : i32
    return %arg0, %c0_i32, %c0_i32_0 : i32, i32, i32
  }
}

module attributes {stable_mosaic.version = 11 : i64} {
  func.func @classifier_kernel(%arg0: i32, %arg1: memref<1x16x128xf32, #tpu.memory_space<vmem>>, %arg2: memref<1x128xf32, #tpu.memory_space<vmem>>, %arg3: memref<1x128xf32, #tpu.memory_space<vmem>>, %arg4: memref<128x30xbf16, #tpu.memory_space<vmem>>, %arg5: memref<1x30xf32, #tpu.memory_space<vmem>>, %arg6: memref<1x1x30xf32, #tpu.memory_space<vmem>>) attributes {dimension_semantics = [#tpu.dimension_semantics<parallel>], iteration_bounds = array<i64: 2>, scalar_prefetch = 0 : i64, scratch_operands = 0 : i64, tpu.core_type = #tpu.core_type<tc>, window_params = [{transform_indices = @transform_0, window_bounds = array<i64: 1, 16, 128>}, {pipeline_mode = #tpu.pipeline_mode<synchronous>, transform_indices = @transform_1, window_bounds = array<i64: 1, 128>}, {pipeline_mode = #tpu.pipeline_mode<synchronous>, transform_indices = @transform_2, window_bounds = array<i64: 1, 128>}, {pipeline_mode = #tpu.pipeline_mode<synchronous>, transform_indices = @transform_3, window_bounds = array<i64: 128, 30>}, {pipeline_mode = #tpu.pipeline_mode<synchronous>, transform_indices = @transform_4, window_bounds = array<i64: 1, 30>}, {transform_indices = @transform_5, window_bounds = array<i64: 1, 1, 30>}]} {
    %c0 = arith.constant 0 : index
    %c0_0 = arith.constant 0 : index
    %c0_1 = arith.constant 0 : index
    %0 = vector.load %arg1[%c0, %c0_0, %c0_1] : memref<1x16x128xf32, #tpu.memory_space<vmem>>, vector<1x16x128xf32>
    %1 = vector.shape_cast %0 : vector<1x16x128xf32> to vector<16x128xf32>
    %cst = arith.constant dense<0.000000e+00> : vector<128xf32>
    %2 = vector.multi_reduction <add>, %1, %cst [0] : vector<16x128xf32> to vector<128xf32>
    %3 = vector.shape_cast %2 : vector<128xf32> to vector<1x128xf32>
    %cst_2 = arith.constant 1.600000e+01 : f32
    %4 = vector.broadcast %cst_2 : f32 to vector<1x128xf32>
    %5 = arith.divf %3, %4 : vector<1x128xf32>
    %cst_3 = arith.constant dense<0.000000e+00> : vector<1xf32>
    %6 = vector.multi_reduction <add>, %5, %cst_3 [1] : vector<1x128xf32> to vector<1xf32>
    %7 = vector.shape_cast %6 : vector<1xf32> to vector<1x1xf32>
    %cst_4 = arith.constant 1.280000e+02 : f32
    %8 = vector.broadcast %cst_4 : f32 to vector<1x1xf32>
    %9 = arith.divf %7, %8 : vector<1x1xf32>
    %10 = vector.broadcast %9 : vector<1x1xf32> to vector<1x128xf32>
    %11 = arith.subf %5, %10 : vector<1x128xf32>
    %12 = arith.mulf %11, %11 : vector<1x128xf32>
    %cst_5 = arith.constant dense<0.000000e+00> : vector<1xf32>
    %13 = vector.multi_reduction <add>, %12, %cst_5 [1] : vector<1x128xf32> to vector<1xf32>
    %14 = vector.shape_cast %13 : vector<1xf32> to vector<1x1xf32>
    %cst_6 = arith.constant 1.280000e+02 : f32
    %15 = vector.broadcast %cst_6 : f32 to vector<1x1xf32>
    %16 = arith.divf %14, %15 : vector<1x1xf32>
    %17 = vector.broadcast %9 : vector<1x1xf32> to vector<1x128xf32>
    %18 = arith.subf %5, %17 : vector<1x128xf32>
    %cst_7 = arith.constant 9.99999974E-6 : f32
    %19 = vector.broadcast %cst_7 : f32 to vector<1x1xf32>
    %20 = arith.addf %16, %19 : vector<1x1xf32>
    %21 = math.rsqrt %20 : vector<1x1xf32>
    %22 = vector.broadcast %21 : vector<1x1xf32> to vector<1x128xf32>
    %23 = arith.mulf %18, %22 : vector<1x128xf32>
    %c0_8 = arith.constant 0 : index
    %c0_9 = arith.constant 0 : index
    %24 = vector.load %arg2[%c0_8, %c0_9] : memref<1x128xf32, #tpu.memory_space<vmem>>, vector<1x128xf32>
    %25 = arith.mulf %23, %24 : vector<1x128xf32>
    %c0_10 = arith.constant 0 : index
    %c0_11 = arith.constant 0 : index
    %26 = vector.load %arg3[%c0_10, %c0_11] : memref<1x128xf32, #tpu.memory_space<vmem>>, vector<1x128xf32>
    %27 = arith.addf %25, %26 : vector<1x128xf32>
    %28 = arith.truncf %27 : vector<1x128xf32> to vector<1x128xbf16>
    %c0_12 = arith.constant 0 : index
    %c0_13 = arith.constant 0 : index
    %29 = vector.load %arg4[%c0_12, %c0_13] : memref<128x30xbf16, #tpu.memory_space<vmem>>, vector<128x30xbf16>
    %cst_14 = arith.constant dense<0.000000e+00> : vector<1x30xf32>
    %30 = tpu.matmul %28, %29, %cst_14 {dimension_numbers = #tpu.dot_dimension_numbers<[1], [0], [0], [1], [0, 0, 1, 1], [], []>} : vector<1x128xbf16>, vector<128x30xbf16>, vector<1x30xf32> -> vector<1x30xf32>
    %c0_15 = arith.constant 0 : index
    %c0_16 = arith.constant 0 : index
    %31 = vector.load %arg5[%c0_15, %c0_16] : memref<1x30xf32, #tpu.memory_space<vmem>>, vector<1x30xf32>
    %32 = arith.addf %30, %31 : vector<1x30xf32>
    %c0_17 = arith.constant 0 : index
    %c0_18 = arith.constant 0 : index
    %c0_19 = arith.constant 0 : index
    %33 = vector.load %arg6[%c0_17, %c0_18, %c0_19] : memref<1x1x30xf32, #tpu.memory_space<vmem>>, vector<1x1x30xf32>
    %34 = vector.shape_cast %33 : vector<1x1x30xf32> to vector<1x30xf32>
    %35 = vector.shape_cast %32 : vector<1x30xf32> to vector<1x1x30xf32>
    tpu.vector_store %arg6[%c0_17, %c0_18, %c0_19], %35 {strides = array<i32>} : memref<1x1x30xf32, #tpu.memory_space<vmem>>, vector<1x1x30xf32>,
    return
  }
  func.func @transform_0(%arg0: i32) -> (i32, i32, i32) {
    %c0_i32 = arith.constant 0 : i32
    %c0_i32_0 = arith.constant 0 : i32
    %c0_i32_1 = arith.constant 0 : i32
    return %arg0, %c0_i32, %c0_i32_0 : i32, i32, i32
  }
  func.func @transform_1(%arg0: i32) -> (i32, i32) {
    %c0_i32 = arith.constant 0 : i32
    %c0_i32_0 = arith.constant 0 : i32
    %c0_i32_1 = arith.constant 0 : i32
    return %c0_i32, %c0_i32_0 : i32, i32
  }
  func.func @transform_2(%arg0: i32) -> (i32, i32) {
    %c0_i32 = arith.constant 0 : i32
    %c0_i32_0 = arith.constant 0 : i32
    %c0_i32_1 = arith.constant 0 : i32
    return %c0_i32, %c0_i32_0 : i32, i32
  }
  func.func @transform_3(%arg0: i32) -> (i32, i32) {
    %c0_i32 = arith.constant 0 : i32
    %c0_i32_0 = arith.constant 0 : i32
    %c0_i32_1 = arith.constant 0 : i32
    return %c0_i32, %c0_i32_0 : i32, i32
  }
  func.func @transform_4(%arg0: i32) -> (i32, i32) {
    %c0_i32 = arith.constant 0 : i32
    %c0_i32_0 = arith.constant 0 : i32
    %c0_i32_1 = arith.constant 0 : i32
    return %c0_i32, %c0_i32_0 : i32, i32
  }
  func.func @transform_5(%arg0: i32) -> (i32, i32, i32) {
    %c0_i32 = arith.constant 0 : i32
    %c0_i32_0 = arith.constant 0 : i32
    %c0_i32_1 = arith.constant 0 : i32
    return %arg0, %c0_i32, %c0_i32_0 : i32, i32, i32
  }
}

</mosaic_0001>

<llo_original>
// kernel: forward.7
$region0: #{forward.7}
  #allocation0 [shape = 'u32[]', space=smem, size = 0x4, offset = 0x4, fixed_abs, tag = 'smem constant byte address 0x4 - core index']
  #allocation1 [shape = 'u32[144,128]{1,0:T(1,128)}', space=vmem, size = 0x12000, scoped, tag = 'internal scratch']
  %s0 = inlined_call_operand.hbm [shape: f32[2,36,4], index: 0, kind: input, shape index: {}]
  %s1 = inlined_call_operand.hbm [shape: bf16[4,4,64], index: 1, kind: input, shape index: {}]
  %s2 = inlined_call_operand.hbm [shape: f32[1,64], index: 2, kind: input, shape index: {}]
  %s3 = inlined_call_operand.hbm [shape: f32[1,64], index: 3, kind: input, shape index: {}]
  %s4 = inlined_call_operand.hbm [shape: f32[1,64], index: 4, kind: input, shape index: {}]
  %s5 = inlined_call_operand.hbm [shape: f32[2,32,64], index: 5, kind: output, shape index: {}]
  %s6 = sld [smem:[#allocation0]]
  $region73: #{forward.7} parent=0
    _
  %s8 = ssub.s32 1, %s6
  %s9 = scalar_select 0, %s8, %s6
  $region1: #{forward.7} parent=0
    #allocation2 [shape = 'u8[40960]{0}', space=vmem, size = 0xa000, scoped, tag = 'input window, operand 0']
    #allocation3 [shape = 's32[2]{0}', space=sflag, size = 0x8, scoped, tag = 'scoped memory for forward.7']
    #allocation4 [shape = 's32[2]{0}', space=sflag, size = 0x8, scoped, tag = 'scoped memory for forward.7']
    #allocation5 [shape = 'u8[4096]{0}', space=vmem, size = 0x1000, scoped, tag = 'input window, operand 1, single buffered']
    #allocation6 [shape = 's32[1]{0}', space=sflag, size = 0x4, scoped, tag = 'scoped memory for forward.7']
    #allocation7 [shape = 'u8[512]{0}', space=vmem, size = 0x400, scoped, tag = 'input window, operand 2, single buffered']
    #allocation8 [shape = 'u8[512]{0}', space=vmem, size = 0x400, scoped, tag = 'input window, operand 3, single buffered']
    #allocation9 [shape = 's32[1]{0}', space=sflag, size = 0x4, scoped, tag = 'scoped memory for forward.7']
    #allocation10 [shape = 'u8[512]{0}', space=vmem, size = 0x400, scoped, tag = 'input window, operand 4, single buffered']
    #allocation11 [shape = 'u8[32768]{0}', space=vmem, size = 0x8000, scoped, tag = 'output window, operand 0']
    %10 = vsyncpa [#allocation3], 0
    %s11 = scalar_lea.sflag [#allocation3], 1
    %12 = vsyncpa %s11, 0
    %13 = vsyncpa [#allocation6], 0
    %14 = vsyncpa [#allocation9], 0
    %15 = vsyncpa [#allocation4], 0
    %s16 = scalar_lea.sflag [#allocation4], 1
    %17 = vsyncpa %s16, 0
    loop: start=0, step=1, limit=4
    $region2: #{forward.7} parent=1 // loop_pre_header
      _
    $region3: #{forward.7} parent=1 // loop_header
      %s19 = sphi 0, %s23
      %p20 = scmp.ge.s32.totalorder %s19, 4
      %s26 = sphi 0, %s38
      %s27 = sphi 0, %s34
      %s28 = sphi 0, %s26
      %s29 = sphi 0, %s27
      %s30 = sphi 0, %s28
      %s31 = sphi 0, %s29
      %s41 = sphi 0, %s43
      %s44 = sphi 0, %s41
      %s45 = sphi 0, %s44
      %s61 = sphi 0, %s45
      %s65 = sphi 0, %s65
      %s67 = sphi 0, %s65
      %s68 = sphi 0, %s67
      %s82 = sphi 0, %s68
      %s86 = sphi 0, %s86
      %s88 = sphi 0, %s86
      %s89 = sphi 0, %s88
      %s103 = sphi 0, %s89
      %s107 = sphi 0, %s107
      %s109 = sphi 0, %s107
      %s110 = sphi 0, %s109
      %s124 = sphi 0, %s110
      %s128 = sphi 0, %s128
      %s130 = sphi 0, %s128
      %s131 = sphi 0, %s130
      %s145 = sphi 0, %s131
      %s153 = sphi 0, %s155
      %s156 = sphi 0, %s153
      %s157 = sphi 0, %s156
      %s173 = sphi 0, %s157
    $region4: #{forward.7} parent=1 // loop_header_branch
      %22 = sbr.rel (%p20) target = $region8
    $region5: #{forward.7} parent=1 // loop_body
      %s24 = ssub.s32 %s19, 1
      %s25 = ssub.s32 %s19, 2
      %s32 = sadd.s32 1, %s27
      %p33 = scmp.ge.s32.totalorder %s32, 1
      %s34 = scalar_select %p33, 0, %s32
      %s35 = sadd.s32 1, %s26
      %s36 = scalar_select %p33, %s35, %s26
      %p37 = scmp.ge.s32.totalorder %s36, 2
      %s38 = scalar_select %p37, 0, %s36
      %s39 = ssub.s32 %s26, %s38
      %p40 = scmp.eq.s32.totalorder %s39, 0
      %s42 = sadd.s32 %s41, 1
      %s43 = scalar_select %p40, %s41, %s42
      %p46 = pneg %p40
      %p47 = scmp.eq.s32.totalorder %s19, 1
      %p48 = por %p46, %p47
      %p49 = scmp.ne.s32.totalorder %s41, %s44
      %p50 = scmp.eq.s32.totalorder %s19, 0
      %p51 = por %p49, %p50
      %p52 = scmp.ne.s32.totalorder %s41, %s44
      %p53 = scmp.eq.s32.totalorder %s24, 1
      %p54 = por %p52, %p53
      %p55 = scmp.ne.s32.totalorder %s44, %s45
      %p56 = scmp.eq.s32.totalorder %s24, 0
      %p57 = por %p55, %p56
      %p58 = scmp.ne.s32.totalorder %s44, %s45
      %p59 = scmp.eq.s32.totalorder %s25, 1
      %p60 = por %p58, %p59
      %p62 = scmp.ne.s32.totalorder %s45, %s61
      %p63 = scmp.eq.s32.totalorder %s25, 0
      %p64 = por %p62, %p63
      %s66 = sadd.s32 %s65, 1
      %p69 = scmp.eq.s32.totalorder %s19, 1
      %p70 = scmp.ne.s32.totalorder %s65, %s67
      %p71 = scmp.eq.s32.totalorder %s19, 0
      %p72 = por %p70, %p71
      %p73 = scmp.ne.s32.totalorder %s65, %s67
      %p74 = scmp.eq.s32.totalorder %s24, 1
      %p75 = por %p73, %p74
      %p76 = scmp.ne.s32.totalorder %s67, %s68
      %p77 = scmp.eq.s32.totalorder %s24, 0
      %p78 = por %p76, %p77
      %p79 = scmp.ne.s32.totalorder %s67, %s68
      %p80 = scmp.eq.s32.totalorder %s25, 1
      %p81 = por %p79, %p80
      %p83 = scmp.ne.s32.totalorder %s68, %s82
      %p84 = scmp.eq.s32.totalorder %s25, 0
      %p85 = por %p83, %p84
      %s87 = sadd.s32 %s86, 1
      %p90 = scmp.eq.s32.totalorder %s19, 1
      %p91 = scmp.ne.s32.totalorder %s86, %s88
      %p92 = scmp.eq.s32.totalorder %s19, 0
      %p93 = por %p91, %p92
      %p94 = scmp.ne.s32.totalorder %s86, %s88
      %p95 = scmp.eq.s32.totalorder %s24, 1
      %p96 = por %p94, %p95
      %p97 = scmp.ne.s32.totalorder %s88, %s89
      %p98 = scmp.eq.s32.totalorder %s24, 0
      %p99 = por %p97, %p98
      %p100 = scmp.ne.s32.totalorder %s88, %s89
      %p101 = scmp.eq.s32.totalorder %s25, 1
      %p102 = por %p100, %p101
      %p104 = scmp.ne.s32.totalorder %s89, %s103
      %p105 = scmp.eq.s32.totalorder %s25, 0
      %p106 = por %p104, %p105
      %s108 = sadd.s32 %s107, 1
      %p111 = scmp.eq.s32.totalorder %s19, 1
      %p112 = scmp.ne.s32.totalorder %s107, %s109
      %p113 = scmp.eq.s32.totalorder %s19, 0
      %p114 = por %p112, %p113
      %p115 = scmp.ne.s32.totalorder %s107, %s109
      %p116 = scmp.eq.s32.totalorder %s24, 1
      %p117 = por %p115, %p116
      %p118 = scmp.ne.s32.totalorder %s109, %s110
      %p119 = scmp.eq.s32.totalorder %s24, 0
      %p120 = por %p118, %p119
      %p121 = scmp.ne.s32.totalorder %s109, %s110
      %p122 = scmp.eq.s32.totalorder %s25, 1
      %p123 = por %p121, %p122
      %p125 = scmp.ne.s32.totalorder %s110, %s124
      %p126 = scmp.eq.s32.totalorder %s25, 0
      %p127 = por %p125, %p126
      %s129 = sadd.s32 %s128, 1
      %p132 = scmp.eq.s32.totalorder %s19, 1
      %p133 = scmp.ne.s32.totalorder %s128, %s130
      %p134 = scmp.eq.s32.totalorder %s19, 0
      %p135 = por %p133, %p134
      %p136 = scmp.ne.s32.totalorder %s128, %s130
      %p137 = scmp.eq.s32.totalorder %s24, 1
      %p138 = por %p136, %p137
      %p139 = scmp.ne.s32.totalorder %s130, %s131
      %p140 = scmp.eq.s32.totalorder %s24, 0
      %p141 = por %p139, %p140
      %p142 = scmp.ne.s32.totalorder %s130, %s131
      %p143 = scmp.eq.s32.totalorder %s25, 1
      %p144 = por %p142, %p143
      %p146 = scmp.ne.s32.totalorder %s131, %s145
      %p147 = scmp.eq.s32.totalorder %s25, 0
      %p148 = por %p146, %p147
      %s149 = ssub.s32 %s26, %s38
      %s150 = ssub.s32 %s27, %s34
      %s151 = sor.u32 %s149, %s150
      %p152 = scmp.eq.s32.totalorder %s151, 0
      %s154 = sadd.s32 %s153, 1
      %s155 = scalar_select %p152, %s153, %s154
      %p158 = pneg %p152
      %p159 = scmp.eq.s32.totalorder %s19, 1
      %p160 = por %p158, %p159
      %p161 = scmp.ne.s32.totalorder %s153, %s156
      %p162 = scmp.eq.s32.totalorder %s19, 0
      %p163 = por %p161, %p162
      %p164 = scmp.ne.s32.totalorder %s153, %s156
      %p165 = scmp.eq.s32.totalorder %s24, 1
      %p166 = por %p164, %p165
      %p167 = scmp.ne.s32.totalorder %s156, %s157
      %p168 = scmp.eq.s32.totalorder %s24, 0
      %p169 = por %p167, %p168
      %p170 = scmp.ne.s32.totalorder %s156, %s157
      %p171 = scmp.eq.s32.totalorder %s25, 1
      %p172 = por %p170, %p171
      %p174 = scmp.ne.s32.totalorder %s157, %s173
      %p175 = scmp.eq.s32.totalorder %s25, 0
      %p176 = por %p174, %p175
      %p177 = scmp.le.s32.totalorder 1, %s19
      %p178 = scmp.lt.s32.totalorder %s19, 3
      %p179 = pnand %p177, %p178
      %p180 = pneg %p179
      // Predicated region
      $region9: #{forward.7} parent=5 // pred_check
        _
      $region10: #{forward.7} parent=5 // pred_check_branch
        %182 = sbr.rel (%p179) target = $region12
      $region11: #{forward.7} parent=5 // pred_region
        %s183 = ssub.s32 %s19, 1
        // Predicated region
        $region13: #{forward.7} parent=11 // pred_check
          %p184 = pneg %p78
        $region14: #{forward.7} parent=11 // pred_check_branch
          %186 = sbr.rel (%p184) target = $region16
        $region15: #{forward.7} parent=11 // pred_region
          %s188 = ssub.s32 128, 128
          %189 = vsyncadd [#allocation6], %s188
          %s190 = sshll.u32 [#allocation5], 4
          %s191 = int_to_ptr.vmem [resolvable:$true] %s190
          %196 = dma.hbm_to_vmem [thread:$0]  %s1, 128, %s191, [#allocation6], 32, 32, 2
        $region16: #{forward.7} parent=11 // pred_fallthru
          _
        // Predicated region
        $region17: #{forward.7} parent=11 // pred_check
          %p197 = pneg %p99
        $region18: #{forward.7} parent=11 // pred_check_branch
          %199 = sbr.rel (%p197) target = $region20
        $region19: #{forward.7} parent=11 // pred_region
          %s201 = ssub.s32 16, 16
          %202 = vsyncadd [#allocation6], %s201
          %s204 = sshll.u32 [#allocation7], 4
          %s205 = int_to_ptr.vmem [resolvable:$true] %s204
          %207 = dma.hbm_to_vmem [thread:$0]  %s2, 16, %s205, [#allocation6]
        $region20: #{forward.7} parent=11 // pred_fallthru
          _
        // Predicated region
        $region21: #{forward.7} parent=11 // pred_check
          %p208 = pneg %p120
        $region22: #{forward.7} parent=11 // pred_check_branch
          %210 = sbr.rel (%p208) target = $region24
        $region23: #{forward.7} parent=11 // pred_region
          %s212 = ssub.s32 16, 16
          %213 = vsyncadd [#allocation9], %s212
          %s215 = sshll.u32 [#allocation8], 4
          %s216 = int_to_ptr.vmem [resolvable:$true] %s215
          %218 = dma.hbm_to_vmem [thread:$0]  %s3, 16, %s216, [#allocation9]
        $region24: #{forward.7} parent=11 // pred_fallthru
          _
        // Predicated region
        $region25: #{forward.7} parent=11 // pred_check
          %p219 = pneg %p141
        $region26: #{forward.7} parent=11 // pred_check_branch
          %221 = sbr.rel (%p219) target = $region28
        $region27: #{forward.7} parent=11 // pred_region
          %s223 = ssub.s32 16, 16
          %224 = vsyncadd [#allocation9], %s223
          %s226 = sshll.u32 [#allocation10], 4
          %s227 = int_to_ptr.vmem [resolvable:$true] %s226
          %229 = dma.hbm_to_vmem [thread:$0]  %s4, 16, %s227, [#allocation9]
        $region28: #{forward.7} parent=11 // pred_fallthru
          _
      $region12: #{forward.7} parent=5 // pred_fallthru
        _
      %p230 = scmp.lt.s32.totalorder %s19, 2
      // Predicated region
      $region29: #{forward.7} parent=5 // pred_check
        %p231 = pneg %p230
      $region30: #{forward.7} parent=5 // pred_check_branch
        %233 = sbr.rel (%p231) target = $region32
      $region31: #{forward.7} parent=5 // pred_region
        // Predicated region
        $region33: #{forward.7} parent=31 // pred_check
          %p234 = pneg %p51
        $region34: #{forward.7} parent=31 // pred_check_branch
          %236 = sbr.rel (%p234) target = $region36
        $region35: #{forward.7} parent=31 // pred_region
          %s237 = sand.u32 %s41, 1
          %s238 = scalar_lea.sflag [#allocation3], %s237
          %s239 = sand.u32 %s41, 1
          %s240 = smul.addr %s239, 40
          %s241 = scalar_lea.vmem [#allocation2], %s240
          %s243 = ssub.s32 640, 640
          %244 = vsyncadd %s238, %s243
          %s245 = smul.addr %s26, 5
          %s246 = smul.addr %s245, 128
          %s247 = scalar_lea.hbm %s0, %s246
          %s248 = sshll.u32 %s241, 4
          %s249 = int_to_ptr.vmem [resolvable:$true] %s248
          %254 = dma.hbm_to_vmem [thread:$0]  %s247, 640, %s249, %s238, 128, 128, 8
        $region36: #{forward.7} parent=31 // pred_fallthru
          _
      $region32: #{forward.7} parent=5 // pred_fallthru
        _
      %p255 = scmp.le.s32.totalorder 1, %s19
      %p256 = scmp.lt.s32.totalorder %s19, 3
      %p257 = pnand %p255, %p256
      %p258 = pneg %p257
      // Predicated region
      $region37: #{forward.7} parent=5 // pred_check
        _
      $region38: #{forward.7} parent=5 // pred_check_branch
        %260 = sbr.rel (%p257) target = $region40
      $region39: #{forward.7} parent=5 // pred_region
        %s261 = ssub.s32 %s19, 1
        %s262 = sand.u32 %s44, 1
        %s263 = scalar_lea.sflag [#allocation3], %s262
        %s264 = sand.u32 %s44, 1
        %s265 = smul.addr %s264, 40
        %s266 = scalar_lea.vmem [#allocation2], %s265
        // Predicated region
        $region41: #{forward.7} parent=39 // pred_check
          %p267 = pneg %p57
        $region42: #{forward.7} parent=39 // pred_check_branch
          %269 = sbr.rel (%p267) target = $region44
        $region43: #{forward.7} parent=39 // pred_region
          %270 = dma.done %s263, 640
        $region44: #{forward.7} parent=39 // pred_fallthru
          _
        // Predicated region
        $region45: #{forward.7} parent=39 // pred_check
          %p271 = pneg %p78
        $region46: #{forward.7} parent=39 // pred_check_branch
          %273 = sbr.rel (%p271) target = $region48
        $region47: #{forward.7} parent=39 // pred_region
          %274 = dma.done [#allocation6], 128
        $region48: #{forward.7} parent=39 // pred_fallthru
          _
        // Predicated region
        $region49: #{forward.7} parent=39 // pred_check
          %p275 = pneg %p99
        $region50: #{forward.7} parent=39 // pred_check_branch
          %277 = sbr.rel (%p275) target = $region52
        $region51: #{forward.7} parent=39 // pred_region
          %278 = dma.done [#allocation6], 16
        $region52: #{forward.7} parent=39 // pred_fallthru
          _
        // Predicated region
        $region53: #{forward.7} parent=39 // pred_check
          %p279 = pneg %p120
        $region54: #{forward.7} parent=39 // pred_check_branch
          %281 = sbr.rel (%p279) target = $region56
        $region55: #{forward.7} parent=39 // pred_region
          %282 = dma.done [#allocation9], 16
        $region56: #{forward.7} parent=39 // pred_fallthru
          _
        // Predicated region
        $region57: #{forward.7} parent=39 // pred_check
          %p283 = pneg %p141
        $region58: #{forward.7} parent=39 // pred_check_branch
          %285 = sbr.rel (%p283) target = $region60
        $region59: #{forward.7} parent=39 // pred_region
          %286 = dma.done [#allocation9], 16
        $region60: #{forward.7} parent=39 // pred_fallthru
          _
        %s287 = sand.u32 %s44, 1
        %s288 = scalar_lea.sflag [#allocation3], %s287
        %s289 = sand.u32 %s44, 1
        %s290 = smul.addr %s289, 40
        %s291 = scalar_lea.vmem [#allocation2], %s290
        %p292 = pneg %p57
        %p293 = pneg %p54
        %p294 = pneg %p78
        %p295 = pneg %p75
        %p296 = pneg %p99
        %p297 = pneg %p96
        %p298 = pneg %p120
        %p299 = pneg %p117
        %p300 = pneg %p141
        %p301 = pneg %p138
        %p302 = pneg %p169
        %p303 = pneg %p166
        %s304 = sand.u32 %s156, 1
        %s305 = scalar_lea.sflag [#allocation4], %s304
        %s306 = sand.u32 %s156, 1
        %s307 = smul.addr %s306, 32
        %s308 = scalar_lea.vmem [#allocation11], %s307
        %s309 = smul.u32 4, %s29
        %s311 = smul.u32 %s29, 32
        %v312 = vld [vmem:[#allocation7] sm:$0x1]
        %v313 = vld [vmem:[#allocation8] sm:$0x1]
        %v314 = vld [vmem:[#allocation10] sm:$0x1]
        %s315 = scalar_lea.vmem %s266, %s311 [#allocation2]
        %v316 = vld [vmem:[%s315] sm:$0xff]
        %v317 = vld [vmem:[%s315 + $0x8] sm:$0xff]
        %v318 = vld [vmem:[%s315 + $0x10] sm:$0xff]
        %v319 = vld [vmem:[%s315 + $0x18] sm:$0xff]
        %v320 = vpack.c.bf16 %v317, %v316
        %v321 = vpack.c.bf16 %v319, %v318
        %v322 = vld [vmem:[#allocation5] sm:$0x3]
        %s323 = sadd.s32 %s311, 1
        %s324 = scalar_lea.vmem %s266, %s323 [#allocation2]
        %v325 = vld [vmem:[%s324] sm:$0xff]
        %v326 = vld [vmem:[%s324 + $0x8] sm:$0xff]
        %v327 = vld [vmem:[%s324 + $0x10] sm:$0xff]
        %v328 = vld [vmem:[%s324 + $0x18] sm:$0xff]
        %v329 = vpack.c.bf16 %v326, %v325
        %v330 = vpack.c.bf16 %v328, %v327
        %s331 = scalar_lea.vmem [#allocation5], 2
        %v332 = vld [vmem:[%s331] sm:$0x3]
        %vm333 = vcmask 31744
        %v335 = vsel %vm333, %v329, 0
        %v338 = vsel %vm333, %v330, 0
        %vm340 = vcmask 1041408
        %v342 = vsel %vm340, %v332, 0
        %344 = vmatprep.subr.bf16.mxu0 0
        %345 = vmatpush1.bf16.msra.mxu0 %v342
        %346 = vmatprep.subr.bf16.mxu0 0
        %347 = vmatpush1.bf16.msra.mxu0 0
        %348 = vmatprep.subr.bf16.mxu0 0
        %349 = vmatpush1.bf16.msra.mxu0 0
        %350 = vmatprep.subr.bf16.mxu0 0
        %351 = vmatpush1.bf16.msra.mxu0 0
        %352 = vmatprep.subr.bf16.mxu0 0
        %353 = vmatpush1.bf16.msra.mxu0 0
        %354 = vmatprep.subr.bf16.mxu0 0
        %355 = vmatpush1.bf16.msra.mxu0 0
        %356 = vmatprep.subr.bf16.mxu0 0
        %357 = vmatpush1.bf16.msra.mxu0 0
        %358 = vmatprep.subr.bf16.mxu0 0
        %359 = vmatpush1.bf16.msra.mxu0 0
        %360 = vmatprep.subr.bf16.mxu0 0
        %361 = vmatpush1.bf16.msra.mxu0 0
        %362 = vmatprep.subr.bf16.mxu0 0
        %363 = vmatpush1.bf16.msra.mxu0 0
        %364 = vmatprep.subr.bf16.mxu0 0
        %365 = vmatpush1.bf16.msra.mxu0 0
        %366 = vmatprep.subr.bf16.mxu0 0
        %367 = vmatpush1.bf16.msra.mxu0 0
        %368 = vmatprep.subr.bf16.mxu0 0
        %369 = vmatpush1.bf16.msra.mxu0 0
        %370 = vmatprep.subr.bf16.mxu0 0
        %371 = vmatpush1.bf16.msra.mxu0 0
        %372 = vmatprep.subr.bf16.mxu0 0
        %373 = vmatpush1.bf16.msra.mxu0 0
        %374 = vmatprep.subr.bf16.mxu0 0
        %375 = vmatpush1.bf16.msra.mxu0 0
        %376 = vmatprep.mubr.bf16.mxu0 0
        %377 = vmatmul.mubr.bf16.gmra.mrb[0].mxu0 %v335
        %v378 = vpop.f32.mrb[0].mxu0
        %v379 = vadd.f32 0.0, %v378
        %v380 = vpop.f32.mrb[0].mxu0
        %v381 = vpop.f32.mrb[0].mxu0
        %v382 = vadd.f32 0.0, %v381
        %v383 = vpop.f32.mrb[0].mxu0
        %384 = vmatprep.mubr.bf16.mxu0 0
        %385 = vmatmul.mubr.bf16.gmra.mrb[0].mxu0 %v338
        %v386 = vpop.f32.mrb[0].mxu0
        %v387 = vadd.f32 0.0, %v386
        %v388 = vpop.f32.mrb[0].mxu0
        %v389 = vpop.f32.mrb[0].mxu0
        %v390 = vadd.f32 0.0, %v389
        %v391 = vpop.f32.mrb[0].mxu0
        %392 = vdwg.mxu0
        %v394 = vsel %vm333, %v320, 0
        %v397 = vsel %vm333, %v321, 0
        %v400 = vsel %vm340, %v322, 0
        %402 = vmatprep.subr.bf16.mxu0 0
        %403 = vmatpush1.bf16.msra.mxu0 %v400
        %404 = vmatprep.subr.bf16.mxu0 0
        %405 = vmatpush1.bf16.msra.mxu0 0
        %406 = vmatprep.subr.bf16.mxu0 0
        %407 = vmatpush1.bf16.msra.mxu0 0
        %408 = vmatprep.subr.bf16.mxu0 0
        %409 = vmatpush1.bf16.msra.mxu0 0
        %410 = vmatprep.subr.bf16.mxu0 0
        %411 = vmatpush1.bf16.msra.mxu0 0
        %412 = vmatprep.subr.bf16.mxu0 0
        %413 = vmatpush1.bf16.msra.mxu0 0
        %414 = vmatprep.subr.bf16.mxu0 0
        %415 = vmatpush1.bf16.msra.mxu0 0
        %416 = vmatprep.subr.bf16.mxu0 0
        %417 = vmatpush1.bf16.msra.mxu0 0
        %418 = vmatprep.subr.bf16.mxu0 0
        %419 = vmatpush1.bf16.msra.mxu0 0
        %420 = vmatprep.subr.bf16.mxu0 0
        %421 = vmatpush1.bf16.msra.mxu0 0
        %422 = vmatprep.subr.bf16.mxu0 0
        %423 = vmatpush1.bf16.msra.mxu0 0
        %424 = vmatprep.subr.bf16.mxu0 0
        %425 = vmatpush1.bf16.msra.mxu0 0
        %426 = vmatprep.subr.bf16.mxu0 0
        %427 = vmatpush1.bf16.msra.mxu0 0
        %428 = vmatprep.subr.bf16.mxu0 0
        %429 = vmatpush1.bf16.msra.mxu0 0
        %430 = vmatprep.subr.bf16.mxu0 0
        %431 = vmatpush1.bf16.msra.mxu0 0
        %432 = vmatprep.subr.bf16.mxu0 0
        %433 = vmatpush1.bf16.msra.mxu0 0
        %434 = vmatprep.mubr.bf16.mxu0 0
        %435 = vmatmul.mubr.bf16.gmra.mrb[0].mxu0 %v394
        %v436 = vpop.f32.mrb[0].mxu0
        %v437 = vadd.f32 %v379, %v436
        %v438 = vpop.f32.mrb[0].mxu0
        %v439 = vpop.f32.mrb[0].mxu0
        %v440 = vadd.f32 %v382, %v439
        %v441 = vpop.f32.mrb[0].mxu0
        %442 = vmatprep.mubr.bf16.mxu0 0
        %443 = vmatmul.mubr.bf16.gmra.mrb[0].mxu0 %v397
        %v444 = vpop.f32.mrb[0].mxu0
        %v445 = vadd.f32 %v387, %v444
        %v446 = vpop.f32.mrb[0].mxu0
        %v447 = vpop.f32.mrb[0].mxu0
        %v448 = vadd.f32 %v390, %v447
        %v449 = vpop.f32.mrb[0].mxu0
        %450 = vdwg.mxu0
        %s451 = sadd.s32 %s311, 2
        %s452 = scalar_lea.vmem %s266, %s451 [#allocation2]
        %v453 = vld [vmem:[%s452] sm:$0xff]
        %v454 = vld [vmem:[%s452 + $0x8] sm:$0xff]
        %v455 = vld [vmem:[%s452 + $0x10] sm:$0xff]
        %v456 = vld [vmem:[%s452 + $0x18] sm:$0xff]
        %v457 = vpack.c.bf16 %v454, %v453
        %v458 = vpack.c.bf16 %v456, %v455
        %s459 = scalar_lea.vmem [#allocation5], 4
        %v460 = vld [vmem:[%s459] sm:$0x3]
        %v462 = vsel %vm333, %v457, 0
        %v465 = vsel %vm333, %v458, 0
        %v468 = vsel %vm340, %v460, 0
        %470 = vmatprep.subr.bf16.mxu0 0
        %471 = vmatpush1.bf16.msra.mxu0 %v468
        %472 = vmatprep.subr.bf16.mxu0 0
        %473 = vmatpush1.bf16.msra.mxu0 0
        %474 = vmatprep.subr.bf16.mxu0 0
        %475 = vmatpush1.bf16.msra.mxu0 0
        %476 = vmatprep.subr.bf16.mxu0 0
        %477 = vmatpush1.bf16.msra.mxu0 0
        %478 = vmatprep.subr.bf16.mxu0 0
        %479 = vmatpush1.bf16.msra.mxu0 0
        %480 = vmatprep.subr.bf16.mxu0 0
        %481 = vmatpush1.bf16.msra.mxu0 0
        %482 = vmatprep.subr.bf16.mxu0 0
        %483 = vmatpush1.bf16.msra.mxu0 0
        %484 = vmatprep.subr.bf16.mxu0 0
        %485 = vmatpush1.bf16.msra.mxu0 0
        %486 = vmatprep.subr.bf16.mxu0 0
        %487 = vmatpush1.bf16.msra.mxu0 0
        %488 = vmatprep.subr.bf16.mxu0 0
        %489 = vmatpush1.bf16.msra.mxu0 0
        %490 = vmatprep.subr.bf16.mxu0 0
        %491 = vmatpush1.bf16.msra.mxu0 0
        %492 = vmatprep.subr.bf16.mxu0 0
        %493 = vmatpush1.bf16.msra.mxu0 0
        %494 = vmatprep.subr.bf16.mxu0 0
        %495 = vmatpush1.bf16.msra.mxu0 0
        %496 = vmatprep.subr.bf16.mxu0 0
        %497 = vmatpush1.bf16.msra.mxu0 0
        %498 = vmatprep.subr.bf16.mxu0 0
        %499 = vmatpush1.bf16.msra.mxu0 0
        %500 = vmatprep.subr.bf16.mxu0 0
        %501 = vmatpush1.bf16.msra.mxu0 0
        %502 = vmatprep.mubr.bf16.mxu0 0
        %503 = vmatmul.mubr.bf16.gmra.mrb[0].mxu0 %v462
        %v504 = vpop.f32.mrb[0].mxu0
        %v505 = vadd.f32 0.0, %v504
        %v506 = vpop.f32.mrb[0].mxu0
        %v507 = vpop.f32.mrb[0].mxu0
        %v508 = vadd.f32 0.0, %v507
        %v509 = vpop.f32.mrb[0].mxu0
        %510 = vmatprep.mubr.bf16.mxu0 0
        %511 = vmatmul.mubr.bf16.gmra.mrb[0].mxu0 %v465
        %v512 = vpop.f32.mrb[0].mxu0
        %v513 = vadd.f32 0.0, %v512
        %v514 = vpop.f32.mrb[0].mxu0
        %v515 = vpop.f32.mrb[0].mxu0
        %v516 = vadd.f32 0.0, %v515
        %v517 = vpop.f32.mrb[0].mxu0
        %518 = vdwg.mxu0
        %v519 = vadd.f32 %v437, %v505
        %v520 = vadd.f32 %v440, %v508
        %v521 = vadd.f32 %v445, %v513
        %v522 = vadd.f32 %v448, %v516
        %s523 = sadd.s32 %s311, 3
        %s524 = scalar_lea.vmem %s266, %s523 [#allocation2]
        %v525 = vld [vmem:[%s524] sm:$0xff]
        %v526 = vld [vmem:[%s524 + $0x8] sm:$0xff]
        %v527 = vld [vmem:[%s524 + $0x10] sm:$0xff]
        %v528 = vld [vmem:[%s524 + $0x18] sm:$0xff]
        %v529 = vpack.c.bf16 %v526, %v525
        %v530 = vpack.c.bf16 %v528, %v527
        %s531 = scalar_lea.vmem [#allocation5], 6
        %v532 = vld [vmem:[%s531] sm:$0x3]
        %v534 = vsel %vm333, %v529, 0
        %v537 = vsel %vm333, %v530, 0
        %v540 = vsel %vm340, %v532, 0
        %542 = vmatprep.subr.bf16.mxu0 0
        %543 = vmatpush1.bf16.msra.mxu0 %v540
        %544 = vmatprep.subr.bf16.mxu0 0
        %545 = vmatpush1.bf16.msra.mxu0 0
        %546 = vmatprep.subr.bf16.mxu0 0
        %547 = vmatpush1.bf16.msra.mxu0 0
        %548 = vmatprep.subr.bf16.mxu0 0
        %549 = vmatpush1.bf16.msra.mxu0 0
        %550 = vmatprep.subr.bf16.mxu0 0
        %551 = vmatpush1.bf16.msra.mxu0 0
        %552 = vmatprep.subr.bf16.mxu0 0
        %553 = vmatpush1.bf16.msra.mxu0 0
        %554 = vmatprep.subr.bf16.mxu0 0
        %555 = vmatpush1.bf16.msra.mxu0 0
        %556 = vmatprep.subr.bf16.mxu0 0
        %557 = vmatpush1.bf16.msra.mxu0 0
        %558 = vmatprep.subr.bf16.mxu0 0
        %559 = vmatpush1.bf16.msra.mxu0 0
        %560 = vmatprep.subr.bf16.mxu0 0
        %561 = vmatpush1.bf16.msra.mxu0 0
        %562 = vmatprep.subr.bf16.mxu0 0
        %563 = vmatpush1.bf16.msra.mxu0 0
        %564 = vmatprep.subr.bf16.mxu0 0
        %565 = vmatpush1.bf16.msra.mxu0 0
        %566 = vmatprep.subr.bf16.mxu0 0
        %567 = vmatpush1.bf16.msra.mxu0 0
        %568 = vmatprep.subr.bf16.mxu0 0
        %569 = vmatpush1.bf16.msra.mxu0 0
        %570 = vmatprep.subr.bf16.mxu0 0
        %571 = vmatpush1.bf16.msra.mxu0 0
        %572 = vmatprep.subr.bf16.mxu0 0
        %573 = vmatpush1.bf16.msra.mxu0 0
        %574 = vmatprep.mubr.bf16.mxu0 0
        %575 = vmatmul.mubr.bf16.gmra.mrb[0].mxu0 %v534
        %v576 = vpop.f32.mrb[0].mxu0
        %v577 = vadd.f32 0.0, %v576
        %v578 = vpop.f32.mrb[0].mxu0
        %v579 = vpop.f32.mrb[0].mxu0
        %v580 = vadd.f32 0.0, %v579
        %v581 = vpop.f32.mrb[0].mxu0
        %582 = vmatprep.mubr.bf16.mxu0 0
        %583 = vmatmul.mubr.bf16.gmra.mrb[0].mxu0 %v537
        %v584 = vpop.f32.mrb[0].mxu0
        %v585 = vadd.f32 0.0, %v584
        %v586 = vpop.f32.mrb[0].mxu0
        %v587 = vpop.f32.mrb[0].mxu0
        %v588 = vadd.f32 0.0, %v587
        %v589 = vpop.f32.mrb[0].mxu0
        %590 = vdwg.mxu0
        %v591 = vadd.f32 %v519, %v577
        %v592 = vadd.f32 %v520, %v580
        %v593 = vadd.f32 %v521, %v585
        %v594 = vadd.f32 %v522, %v588
        %v596 = vlaneseq
        %v597 = vshrl.u32 %v596, 7
        %v598 = vsub.s32 0, %v597
        %v599 = vrot.slane %v312, %v598
        %v601 = vadd.f32 %v591, %v599
        %v602 = vadd.f32 %v592, %v599
        %v603 = vadd.f32 %v593, %v599
        %v604 = vadd.f32 %v594, %v599
        %v606 = vlaneseq
        %v607 = vshrl.u32 %v606, 7
        %v608 = vsub.s32 0, %v607
        %v609 = vrot.slane %v313, %v608
        %v611 = vmul.f32 %v601, %v609
        %v612 = vmul.f32 %v602, %v609
        %v613 = vmul.f32 %v603, %v609
        %v614 = vmul.f32 %v604, %v609
        %v616 = vlaneseq
        %v617 = vshrl.u32 %v616, 7
        %v618 = vsub.s32 0, %v617
        %v619 = vrot.slane %v314, %v618
        %v621 = vadd.f32 %v611, %v619
        %v622 = vadd.f32 %v612, %v619
        %v623 = vadd.f32 %v613, %v619
        %v624 = vadd.f32 %v614, %v619
        %v625 = vmax.f32 %v621, 0.0
        %v626 = vmax.f32 %v622, 0.0
        %v627 = vmax.f32 %v623, 0.0
        %v628 = vmax.f32 %v624, 0.0
        %vm629 = vcmask 523264
        %630 = vst.msk [vmem:[%s308] sm:$0xff] %vm629, %v625
        %631 = vst.msk [vmem:[%s308 + $0x8] sm:$0xff] %vm629, %v626
        %632 = vst.msk [vmem:[%s308 + $0x10] sm:$0xff] %vm629, %v627
        %633 = vst.msk [vmem:[%s308 + $0x18] sm:$0xff] %vm629, %v628
        %s634 = sand.u32 %s156, 1
        %s635 = scalar_lea.sflag [#allocation4], %s634
        %s636 = sand.u32 %s156, 1
        %s637 = smul.addr %s636, 32
        %s638 = scalar_lea.vmem [#allocation11], %s637
        // Predicated region
        $region61: #{forward.7} parent=39 // pred_check
          %p639 = pneg %p166
        $region62: #{forward.7} parent=39 // pred_check_branch
          %641 = sbr.rel (%p639) target = $region64
        $region63: #{forward.7} parent=39 // pred_region
          %s642 = smul.u32 4, %s29
          %s644 = ssub.s32 512, 512
          %645 = vsyncadd %s635, %s644
          %s646 = smul.addr %s28, 4
          %s647 = sadd.s32 %s642, %s646
          %s648 = smul.addr %s647, 128
          %s649 = scalar_lea.hbm %s5, %s648
          %s650 = sshll.u32 %s638, 4
          %s651 = int_to_ptr.vmem [resolvable:$true] %s650
          %656 = dma.vmem_to_hbm [thread:$0]  %s651, 512, %s649, %s635, 128, 128, 8
        $region64: #{forward.7} parent=39 // pred_fallthru
          _
      $region40: #{forward.7} parent=5 // pred_fallthru
        _
      %p657 = scmp.le.s32.totalorder 2, %s19
      // Predicated region
      $region65: #{forward.7} parent=5 // pred_check
        %p658 = pneg %p657
      $region66: #{forward.7} parent=5 // pred_check_branch
        %660 = sbr.rel (%p658) target = $region68
      $region67: #{forward.7} parent=5 // pred_region
        %s661 = ssub.s32 %s19, 2
        // Predicated region
        $region69: #{forward.7} parent=67 // pred_check
          %p662 = pneg %p172
        $region70: #{forward.7} parent=67 // pred_check_branch
          %664 = sbr.rel (%p662) target = $region72
        $region71: #{forward.7} parent=67 // pred_region
          %s665 = sand.u32 %s157, 1
          %s666 = scalar_lea.sflag [#allocation4], %s665
          %s667 = sand.u32 %s157, 1
          %s668 = smul.addr %s667, 32
          %s669 = scalar_lea.vmem [#allocation11], %s668
          %670 = dma.done %s666, 512
        $region72: #{forward.7} parent=67 // pred_fallthru
          _
      $region68: #{forward.7} parent=5 // pred_fallthru
        _
    $region6: #{forward.7} parent=1 // loop_footer
      %s23 = sadd.s32 1, %s19
    $region7: #{forward.7} parent=1 // loop_footer_branch
      %18 = sbr.rel target = $region3
    $region8: #{forward.7} parent=1 // loop_exit
      _
    %671 = vsyncpa [#allocation3], 1
    %s672 = scalar_lea.sflag [#allocation3], 1
    %673 = vsyncpa %s672, 1
    %674 = vsyncpa [#allocation6], 1
    %675 = vsyncpa [#allocation9], 1
    %676 = vsyncpa [#allocation4], 1
    %s677 = scalar_lea.sflag [#allocation4], 1
    %678 = vsyncpa %s677, 1

// kernel: forward.8
$region0: #{forward.8}
  #allocation0 [shape = 'u32[]', space=smem, size = 0x4, offset = 0x4, fixed_abs, tag = 'smem constant byte address 0x4 - core index']
  #allocation1 [shape = 'u32[144,128]{1,0:T(1,128)}', space=vmem, size = 0x12000, scoped, tag = 'internal scratch']
  %s0 = inlined_call_operand.hbm [shape: f32[2,20,128], index: 0, kind: input, shape index: {}]
  %s1 = inlined_call_operand.hbm [shape: bf16[4,128,128], index: 1, kind: input, shape index: {}]
  %s2 = inlined_call_operand.hbm [shape: f32[1,128], index: 2, kind: input, shape index: {}]
  %s3 = inlined_call_operand.hbm [shape: f32[1,128], index: 3, kind: input, shape index: {}]
  %s4 = inlined_call_operand.hbm [shape: f32[1,128], index: 4, kind: input, shape index: {}]
  %s5 = inlined_call_operand.hbm [shape: f32[16,128], index: 5, kind: input, shape index: {}]
  %s6 = inlined_call_operand.hbm [shape: f32[2,16,128], index: 6, kind: output, shape index: {}]
  %s7 = sld [smem:[#allocation0]]
  $region81: #{forward.8} parent=0
    _
  %s9 = ssub.s32 1, %s7
  %s10 = scalar_select 0, %s9, %s7
  $region1: #{forward.8} parent=0
    #allocation2 [shape = 'u8[24576]{0}', space=vmem, size = 0x6000, scoped, tag = 'input window, operand 0']
    #allocation3 [shape = 's32[2]{0}', space=sflag, size = 0x8, scoped, tag = 'scoped memory for forward.8']
    #allocation4 [shape = 's32[2]{0}', space=sflag, size = 0x8, scoped, tag = 'scoped memory for forward.8']
    #allocation5 [shape = 'u8[131072]{0}', space=vmem, size = 0x20000, scoped, tag = 'input window, operand 1, single buffered']
    #allocation6 [shape = 's32[1]{0}', space=sflag, size = 0x4, scoped, tag = 'scoped memory for forward.8']
    #allocation7 [shape = 'u8[512]{0}', space=vmem, size = 0x400, scoped, tag = 'input window, operand 2, single buffered']
    #allocation8 [shape = 'u8[512]{0}', space=vmem, size = 0x400, scoped, tag = 'input window, operand 3, single buffered']
    #allocation9 [shape = 's32[1]{0}', space=sflag, size = 0x4, scoped, tag = 'scoped memory for forward.8']
    #allocation10 [shape = 'u8[512]{0}', space=vmem, size = 0x400, scoped, tag = 'input window, operand 4, single buffered']
    #allocation11 [shape = 'u8[8192]{0}', space=vmem, size = 0x2000, scoped, tag = 'input window, operand 5, single buffered']
    #allocation12 [shape = 's32[1]{0}', space=sflag, size = 0x4, scoped, tag = 'scoped memory for forward.8']
    #allocation13 [shape = 'u8[16384]{0}', space=vmem, size = 0x4000, scoped, tag = 'output window, operand 0']
    %11 = vsyncpa [#allocation3], 0
    %s12 = scalar_lea.sflag [#allocation3], 1
    %13 = vsyncpa %s12, 0
    %14 = vsyncpa [#allocation6], 0
    %15 = vsyncpa [#allocation9], 0
    %16 = vsyncpa [#allocation12], 0
    %17 = vsyncpa [#allocation4], 0
    %s18 = scalar_lea.sflag [#allocation4], 1
    %19 = vsyncpa %s18, 0
    loop: start=0, step=1, limit=4
    $region2: #{forward.8} parent=1 // loop_pre_header
      _
    $region3: #{forward.8} parent=1 // loop_header
      %s21 = sphi 0, %s25
      %p22 = scmp.ge.s32.totalorder %s21, 4
      %s28 = sphi 0, %s40
      %s29 = sphi 0, %s36
      %s30 = sphi 0, %s28
      %s31 = sphi 0, %s29
      %s32 = sphi 0, %s30
      %s33 = sphi 0, %s31
      %s43 = sphi 0, %s45
      %s46 = sphi 0, %s43
      %s47 = sphi 0, %s46
      %s63 = sphi 0, %s47
      %s67 = sphi 0, %s67
      %s69 = sphi 0, %s67
      %s70 = sphi 0, %s69
      %s84 = sphi 0, %s70
      %s88 = sphi 0, %s88
      %s90 = sphi 0, %s88
      %s91 = sphi 0, %s90
      %s105 = sphi 0, %s91
      %s109 = sphi 0, %s109
      %s111 = sphi 0, %s109
      %s112 = sphi 0, %s111
      %s126 = sphi 0, %s112
      %s130 = sphi 0, %s130
      %s132 = sphi 0, %s130
      %s133 = sphi 0, %s132
      %s147 = sphi 0, %s133
      %s153 = sphi 0, %s155
      %s156 = sphi 0, %s153
      %s157 = sphi 0, %s156
      %s173 = sphi 0, %s157
      %s181 = sphi 0, %s183
      %s184 = sphi 0, %s181
      %s185 = sphi 0, %s184
      %s201 = sphi 0, %s185
    $region4: #{forward.8} parent=1 // loop_header_branch
      %24 = sbr.rel (%p22) target = $region8
    $region5: #{forward.8} parent=1 // loop_body
      %s26 = ssub.s32 %s21, 1
      %s27 = ssub.s32 %s21, 2
      %s34 = sadd.s32 1, %s29
      %p35 = scmp.ge.s32.totalorder %s34, 1
      %s36 = scalar_select %p35, 0, %s34
      %s37 = sadd.s32 1, %s28
      %s38 = scalar_select %p35, %s37, %s28
      %p39 = scmp.ge.s32.totalorder %s38, 2
      %s40 = scalar_select %p39, 0, %s38
      %s41 = ssub.s32 %s28, %s40
      %p42 = scmp.eq.s32.totalorder %s41, 0
      %s44 = sadd.s32 %s43, 1
      %s45 = scalar_select %p42, %s43, %s44
      %p48 = pneg %p42
      %p49 = scmp.eq.s32.totalorder %s21, 1
      %p50 = por %p48, %p49
      %p51 = scmp.ne.s32.totalorder %s43, %s46
      %p52 = scmp.eq.s32.totalorder %s21, 0
      %p53 = por %p51, %p52
      %p54 = scmp.ne.s32.totalorder %s43, %s46
      %p55 = scmp.eq.s32.totalorder %s26, 1
      %p56 = por %p54, %p55
      %p57 = scmp.ne.s32.totalorder %s46, %s47
      %p58 = scmp.eq.s32.totalorder %s26, 0
      %p59 = por %p57, %p58
      %p60 = scmp.ne.s32.totalorder %s46, %s47
      %p61 = scmp.eq.s32.totalorder %s27, 1
      %p62 = por %p60, %p61
      %p64 = scmp.ne.s32.totalorder %s47, %s63
      %p65 = scmp.eq.s32.totalorder %s27, 0
      %p66 = por %p64, %p65
      %s68 = sadd.s32 %s67, 1
      %p71 = scmp.eq.s32.totalorder %s21, 1
      %p72 = scmp.ne.s32.totalorder %s67, %s69
      %p73 = scmp.eq.s32.totalorder %s21, 0
      %p74 = por %p72, %p73
      %p75 = scmp.ne.s32.totalorder %s67, %s69
      %p76 = scmp.eq.s32.totalorder %s26, 1
      %p77 = por %p75, %p76
      %p78 = scmp.ne.s32.totalorder %s69, %s70
      %p79 = scmp.eq.s32.totalorder %s26, 0
      %p80 = por %p78, %p79
      %p81 = scmp.ne.s32.totalorder %s69, %s70
      %p82 = scmp.eq.s32.totalorder %s27, 1
      %p83 = por %p81, %p82
      %p85 = scmp.ne.s32.totalorder %s70, %s84
      %p86 = scmp.eq.s32.totalorder %s27, 0
      %p87 = por %p85, %p86
      %s89 = sadd.s32 %s88, 1
      %p92 = scmp.eq.s32.totalorder %s21, 1
      %p93 = scmp.ne.s32.totalorder %s88, %s90
      %p94 = scmp.eq.s32.totalorder %s21, 0
      %p95 = por %p93, %p94
      %p96 = scmp.ne.s32.totalorder %s88, %s90
      %p97 = scmp.eq.s32.totalorder %s26, 1
      %p98 = por %p96, %p97
      %p99 = scmp.ne.s32.totalorder %s90, %s91
      %p100 = scmp.eq.s32.totalorder %s26, 0
      %p101 = por %p99, %p100
      %p102 = scmp.ne.s32.totalorder %s90, %s91
      %p103 = scmp.eq.s32.totalorder %s27, 1
      %p104 = por %p102, %p103
      %p106 = scmp.ne.s32.totalorder %s91, %s105
      %p107 = scmp.eq.s32.totalorder %s27, 0
      %p108 = por %p106, %p107
      %s110 = sadd.s32 %s109, 1
      %p113 = scmp.eq.s32.totalorder %s21, 1
      %p114 = scmp.ne.s32.totalorder %s109, %s111
      %p115 = scmp.eq.s32.totalorder %s21, 0
      %p116 = por %p114, %p115
      %p117 = scmp.ne.s32.totalorder %s109, %s111
      %p118 = scmp.eq.s32.totalorder %s26, 1
      %p119 = por %p117, %p118
      %p120 = scmp.ne.s32.totalorder %s111, %s112
      %p121 = scmp.eq.s32.totalorder %s26, 0
      %p122 = por %p120, %p121
      %p123 = scmp.ne.s32.totalorder %s111, %s112
      %p124 = scmp.eq.s32.totalorder %s27, 1
      %p125 = por %p123, %p124
      %p127 = scmp.ne.s32.totalorder %s112, %s126
      %p128 = scmp.eq.s32.totalorder %s27, 0
      %p129 = por %p127, %p128
      %s131 = sadd.s32 %s130, 1
      %p134 = scmp.eq.s32.totalorder %s21, 1
      %p135 = scmp.ne.s32.totalorder %s130, %s132
      %p136 = scmp.eq.s32.totalorder %s21, 0
      %p137 = por %p135, %p136
      %p138 = scmp.ne.s32.totalorder %s130, %s132
      %p139 = scmp.eq.s32.totalorder %s26, 1
      %p140 = por %p138, %p139
      %p141 = scmp.ne.s32.totalorder %s132, %s133
      %p142 = scmp.eq.s32.totalorder %s26, 0
      %p143 = por %p141, %p142
      %p144 = scmp.ne.s32.totalorder %s132, %s133
      %p145 = scmp.eq.s32.totalorder %s27, 1
      %p146 = por %p144, %p145
      %p148 = scmp.ne.s32.totalorder %s133, %s147
      %p149 = scmp.eq.s32.totalorder %s27, 0
      %p150 = por %p148, %p149
      %s151 = ssub.s32 %s29, %s36
      %p152 = scmp.eq.s32.totalorder %s151, 0
      %s154 = sadd.s32 %s153, 1
      %s155 = scalar_select %p152, %s153, %s154
      %p158 = pneg %p152
      %p159 = scmp.eq.s32.totalorder %s21, 1
      %p160 = por %p158, %p159
      %p161 = scmp.ne.s32.totalorder %s153, %s156
      %p162 = scmp.eq.s32.totalorder %s21, 0
      %p163 = por %p161, %p162
      %p164 = scmp.ne.s32.totalorder %s153, %s156
      %p165 = scmp.eq.s32.totalorder %s26, 1
      %p166 = por %p164, %p165
      %p167 = scmp.ne.s32.totalorder %s156, %s157
      %p168 = scmp.eq.s32.totalorder %s26, 0
      %p169 = por %p167, %p168
      %p170 = scmp.ne.s32.totalorder %s156, %s157
      %p171 = scmp.eq.s32.totalorder %s27, 1
      %p172 = por %p170, %p171
      %p174 = scmp.ne.s32.totalorder %s157, %s173
      %p175 = scmp.eq.s32.totalorder %s27, 0
      %p176 = por %p174, %p175
      %s177 = ssub.s32 %s28, %s40
      %s178 = ssub.s32 %s29, %s36
      %s179 = sor.u32 %s177, %s178
      %p180 = scmp.eq.s32.totalorder %s179, 0
      %s182 = sadd.s32 %s181, 1
      %s183 = scalar_select %p180, %s181, %s182
      %p186 = pneg %p180
      %p187 = scmp.eq.s32.totalorder %s21, 1
      %p188 = por %p186, %p187
      %p189 = scmp.ne.s32.totalorder %s181, %s184
      %p190 = scmp.eq.s32.totalorder %s21, 0
      %p191 = por %p189, %p190
      %p192 = scmp.ne.s32.totalorder %s181, %s184
      %p193 = scmp.eq.s32.totalorder %s26, 1
      %p194 = por %p192, %p193
      %p195 = scmp.ne.s32.totalorder %s184, %s185
      %p196 = scmp.eq.s32.totalorder %s26, 0
      %p197 = por %p195, %p196
      %p198 = scmp.ne.s32.totalorder %s184, %s185
      %p199 = scmp.eq.s32.totalorder %s27, 1
      %p200 = por %p198, %p199
      %p202 = scmp.ne.s32.totalorder %s185, %s201
      %p203 = scmp.eq.s32.totalorder %s27, 0
      %p204 = por %p202, %p203
      %p205 = scmp.le.s32.totalorder 1, %s21
      %p206 = scmp.lt.s32.totalorder %s21, 3
      %p207 = pnand %p205, %p206
      %p208 = pneg %p207
      // Predicated region
      $region9: #{forward.8} parent=5 // pred_check
        _
      $region10: #{forward.8} parent=5 // pred_check_branch
        %210 = sbr.rel (%p207) target = $region12
      $region11: #{forward.8} parent=5 // pred_region
        %s211 = ssub.s32 %s21, 1
        // Predicated region
        $region13: #{forward.8} parent=11 // pred_check
          %p212 = pneg %p80
        $region14: #{forward.8} parent=11 // pred_check_branch
          %214 = sbr.rel (%p212) target = $region16
        $region15: #{forward.8} parent=11 // pred_region
          %s216 = ssub.s32 4096, 4096
          %217 = vsyncadd [#allocation6], %s216
          %s218 = sshll.u32 [#allocation5], 4
          %s219 = int_to_ptr.vmem [resolvable:$true] %s218
          %224 = dma.hbm_to_vmem [thread:$0]  %s1, 4096, %s219, [#allocation6], 64, 64, 4
        $region16: #{forward.8} parent=11 // pred_fallthru
          _
        // Predicated region
        $region17: #{forward.8} parent=11 // pred_check
          %p225 = pneg %p101
        $region18: #{forward.8} parent=11 // pred_check_branch
          %227 = sbr.rel (%p225) target = $region20
        $region19: #{forward.8} parent=11 // pred_region
          %s229 = ssub.s32 16, 16
          %230 = vsyncadd [#allocation6], %s229
          %s232 = sshll.u32 [#allocation7], 4
          %s233 = int_to_ptr.vmem [resolvable:$true] %s232
          %235 = dma.hbm_to_vmem [thread:$0]  %s2, 16, %s233, [#allocation6]
        $region20: #{forward.8} parent=11 // pred_fallthru
          _
        // Predicated region
        $region21: #{forward.8} parent=11 // pred_check
          %p236 = pneg %p122
        $region22: #{forward.8} parent=11 // pred_check_branch
          %238 = sbr.rel (%p236) target = $region24
        $region23: #{forward.8} parent=11 // pred_region
          %s240 = ssub.s32 16, 16
          %241 = vsyncadd [#allocation9], %s240
          %s243 = sshll.u32 [#allocation8], 4
          %s244 = int_to_ptr.vmem [resolvable:$true] %s243
          %246 = dma.hbm_to_vmem [thread:$0]  %s3, 16, %s244, [#allocation9]
        $region24: #{forward.8} parent=11 // pred_fallthru
          _
        // Predicated region
        $region25: #{forward.8} parent=11 // pred_check
          %p247 = pneg %p143
        $region26: #{forward.8} parent=11 // pred_check_branch
          %249 = sbr.rel (%p247) target = $region28
        $region27: #{forward.8} parent=11 // pred_region
          %s251 = ssub.s32 16, 16
          %252 = vsyncadd [#allocation9], %s251
          %s254 = sshll.u32 [#allocation10], 4
          %s255 = int_to_ptr.vmem [resolvable:$true] %s254
          %257 = dma.hbm_to_vmem [thread:$0]  %s4, 16, %s255, [#allocation9]
        $region28: #{forward.8} parent=11 // pred_fallthru
          _
        // Predicated region
        $region29: #{forward.8} parent=11 // pred_check
          %p258 = pneg %p169
        $region30: #{forward.8} parent=11 // pred_check_branch
          %260 = sbr.rel (%p258) target = $region32
        $region31: #{forward.8} parent=11 // pred_region
          %s261 = smul.u32 2, %s31
          %s263 = ssub.s32 256, 256
          %264 = vsyncadd [#allocation12], %s263
          %s265 = smul.addr %s261, 128
          %s266 = scalar_lea.hbm %s5, %s265
          %s267 = sshll.u32 [#allocation11], 4
          %s268 = int_to_ptr.vmem [resolvable:$true] %s267
          %273 = dma.hbm_to_vmem [thread:$0]  %s266, 256, %s268, [#allocation12], 128, 128, 8
        $region32: #{forward.8} parent=11 // pred_fallthru
          _
      $region12: #{forward.8} parent=5 // pred_fallthru
        _
      %p274 = scmp.lt.s32.totalorder %s21, 2
      // Predicated region
      $region33: #{forward.8} parent=5 // pred_check
        %p275 = pneg %p274
      $region34: #{forward.8} parent=5 // pred_check_branch
        %277 = sbr.rel (%p275) target = $region36
      $region35: #{forward.8} parent=5 // pred_region
        // Predicated region
        $region37: #{forward.8} parent=35 // pred_check
          %p278 = pneg %p53
        $region38: #{forward.8} parent=35 // pred_check_branch
          %280 = sbr.rel (%p278) target = $region40
        $region39: #{forward.8} parent=35 // pred_region
          %s281 = sand.u32 %s43, 1
          %s282 = scalar_lea.sflag [#allocation3], %s281
          %s283 = sand.u32 %s43, 1
          %s284 = smul.addr %s283, 24
          %s285 = scalar_lea.vmem [#allocation2], %s284
          %s287 = ssub.s32 384, 384
          %288 = vsyncadd %s282, %s287
          %s289 = smul.addr %s28, 3
          %s290 = smul.addr %s289, 128
          %s291 = scalar_lea.hbm %s0, %s290
          %s292 = sshll.u32 %s285, 4
          %s293 = int_to_ptr.vmem [resolvable:$true] %s292
          %298 = dma.hbm_to_vmem [thread:$0]  %s291, 384, %s293, %s282, 128, 128, 8
        $region40: #{forward.8} parent=35 // pred_fallthru
          _
      $region36: #{forward.8} parent=5 // pred_fallthru
        _
      %p299 = scmp.le.s32.totalorder 1, %s21
      %p300 = scmp.lt.s32.totalorder %s21, 3
      %p301 = pnand %p299, %p300
      %p302 = pneg %p301
      // Predicated region
      $region41: #{forward.8} parent=5 // pred_check
        _
      $region42: #{forward.8} parent=5 // pred_check_branch
        %304 = sbr.rel (%p301) target = $region44
      $region43: #{forward.8} parent=5 // pred_region
        %s305 = ssub.s32 %s21, 1
        %s306 = sand.u32 %s46, 1
        %s307 = scalar_lea.sflag [#allocation3], %s306
        %s308 = sand.u32 %s46, 1
        %s309 = smul.addr %s308, 24
        %s310 = scalar_lea.vmem [#allocation2], %s309
        // Predicated region
        $region45: #{forward.8} parent=43 // pred_check
          %p311 = pneg %p59
        $region46: #{forward.8} parent=43 // pred_check_branch
          %313 = sbr.rel (%p311) target = $region48
        $region47: #{forward.8} parent=43 // pred_region
          %314 = dma.done %s307, 384
        $region48: #{forward.8} parent=43 // pred_fallthru
          _
        // Predicated region
        $region49: #{forward.8} parent=43 // pred_check
          %p315 = pneg %p80
        $region50: #{forward.8} parent=43 // pred_check_branch
          %317 = sbr.rel (%p315) target = $region52
        $region51: #{forward.8} parent=43 // pred_region
          %318 = dma.done [#allocation6], 4096
        $region52: #{forward.8} parent=43 // pred_fallthru
          _
        // Predicated region
        $region53: #{forward.8} parent=43 // pred_check
          %p319 = pneg %p101
        $region54: #{forward.8} parent=43 // pred_check_branch
          %321 = sbr.rel (%p319) target = $region56
        $region55: #{forward.8} parent=43 // pred_region
          %322 = dma.done [#allocation6], 16
        $region56: #{forward.8} parent=43 // pred_fallthru
          _
        // Predicated region
        $region57: #{forward.8} parent=43 // pred_check
          %p323 = pneg %p122
        $region58: #{forward.8} parent=43 // pred_check_branch
          %325 = sbr.rel (%p323) target = $region60
        $region59: #{forward.8} parent=43 // pred_region
          %326 = dma.done [#allocation9], 16
        $region60: #{forward.8} parent=43 // pred_fallthru
          _
        // Predicated region
        $region61: #{forward.8} parent=43 // pred_check
          %p327 = pneg %p143
        $region62: #{forward.8} parent=43 // pred_check_branch
          %329 = sbr.rel (%p327) target = $region64
        $region63: #{forward.8} parent=43 // pred_region
          %330 = dma.done [#allocation9], 16
        $region64: #{forward.8} parent=43 // pred_fallthru
          _
        // Predicated region
        $region65: #{forward.8} parent=43 // pred_check
          %p331 = pneg %p169
        $region66: #{forward.8} parent=43 // pred_check_branch
          %333 = sbr.rel (%p331) target = $region68
        $region67: #{forward.8} parent=43 // pred_region
          %334 = dma.done [#allocation12], 256
        $region68: #{forward.8} parent=43 // pred_fallthru
          _
        %s335 = sand.u32 %s46, 1
        %s336 = scalar_lea.sflag [#allocation3], %s335
        %s337 = sand.u32 %s46, 1
        %s338 = smul.addr %s337, 24
        %s339 = scalar_lea.vmem [#allocation2], %s338
        %p340 = pneg %p59
        %p341 = pneg %p56
        %p342 = pneg %p80
        %p343 = pneg %p77
        %p344 = pneg %p101
        %p345 = pneg %p98
        %p346 = pneg %p122
        %p347 = pneg %p119
        %p348 = pneg %p143
        %p349 = pneg %p140
        %p350 = pneg %p169
        %p351 = pneg %p166
        %p352 = pneg %p197
        %p353 = pneg %p194
        %s354 = sand.u32 %s184, 1
        %s355 = scalar_lea.sflag [#allocation4], %s354
        %s356 = sand.u32 %s184, 1
        %s357 = smul.addr %s356, 16
        %s358 = scalar_lea.vmem [#allocation13], %s357
        %s359 = smul.u32 2, %s31
        %s360 = smul.u32 2, %s31
        %s362 = smul.u32 %s31, 16
        %v363 = vld [vmem:[#allocation7] sm:$0x1]
        %v364 = vld [vmem:[#allocation8] sm:$0x1]
        %v365 = vld [vmem:[#allocation10] sm:$0x1]
        %s366 = scalar_lea.vmem %s310, %s362 [#allocation2]
        %v367 = vld [vmem:[%s366] sm:$0xff]
        %v368 = vld [vmem:[%s366 + $0x8] sm:$0xff]
        %v369 = vpack.c.bf16 %v368, %v367
        %v370 = vld [vmem:[#allocation5] sm:$0xf]
        %v371 = vld [vmem:[#allocation5 + $0x4] sm:$0xf]
        %v372 = vld [vmem:[#allocation5 + $0x8] sm:$0xf]
        %v373 = vld [vmem:[#allocation5 + $0xc] sm:$0xf]
        %v374 = vld [vmem:[#allocation5 + $0x10] sm:$0xf]
        %v375 = vld [vmem:[#allocation5 + $0x14] sm:$0xf]
        %v376 = vld [vmem:[#allocation5 + $0x18] sm:$0xf]
        %v377 = vld [vmem:[#allocation5 + $0x1c] sm:$0xf]
        %v378 = vld [vmem:[#allocation5 + $0x20] sm:$0xf]
        %v379 = vld [vmem:[#allocation5 + $0x24] sm:$0xf]
        %v380 = vld [vmem:[#allocation5 + $0x28] sm:$0xf]
        %v381 = vld [vmem:[#allocation5 + $0x2c] sm:$0xf]
        %v382 = vld [vmem:[#allocation5 + $0x30] sm:$0xf]
        %v383 = vld [vmem:[#allocation5 + $0x34] sm:$0xf]
        %v384 = vld [vmem:[#allocation5 + $0x38] sm:$0xf]
        %v385 = vld [vmem:[#allocation5 + $0x3c] sm:$0xf]
        %s386 = sadd.s32 %s362, 1
        %s387 = scalar_lea.vmem %s310, %s386 [#allocation2]
        %v388 = vld [vmem:[%s387] sm:$0xff]
        %v389 = vld [vmem:[%s387 + $0x8] sm:$0xff]
        %v390 = vpack.c.bf16 %v389, %v388
        %s391 = scalar_lea.vmem [#allocation5], 64
        %v392 = vld [vmem:[%s391] sm:$0xf]
        %v393 = vld [vmem:[%s391 + $0x4] sm:$0xf]
        %v394 = vld [vmem:[%s391 + $0x8] sm:$0xf]
        %v395 = vld [vmem:[%s391 + $0xc] sm:$0xf]
        %v396 = vld [vmem:[%s391 + $0x10] sm:$0xf]
        %v397 = vld [vmem:[%s391 + $0x14] sm:$0xf]
        %v398 = vld [vmem:[%s391 + $0x18] sm:$0xf]
        %v399 = vld [vmem:[%s391 + $0x1c] sm:$0xf]
        %v400 = vld [vmem:[%s391 + $0x20] sm:$0xf]
        %v401 = vld [vmem:[%s391 + $0x24] sm:$0xf]
        %v402 = vld [vmem:[%s391 + $0x28] sm:$0xf]
        %v403 = vld [vmem:[%s391 + $0x2c] sm:$0xf]
        %v404 = vld [vmem:[%s391 + $0x30] sm:$0xf]
        %v405 = vld [vmem:[%s391 + $0x34] sm:$0xf]
        %v406 = vld [vmem:[%s391 + $0x38] sm:$0xf]
        %v407 = vld [vmem:[%s391 + $0x3c] sm:$0xf]
        %v424 = vunpack.c.l.b16 %v392
        %v425 = vunpack.c.l.b16 %v393
        %v426 = vunpack.c.l.b16 %v394
        %v427 = vunpack.c.l.b16 %v395
        %v428 = vunpack.c.l.b16 %v396
        %v429 = vunpack.c.l.b16 %v397
        %v430 = vunpack.c.l.b16 %v398
        %v431 = vunpack.c.l.b16 %v399
        %v432 = vunpack.c.l.b16 %v400
        %v433 = vunpack.c.l.b16 %v401
        %v434 = vunpack.c.l.b16 %v402
        %v435 = vunpack.c.l.b16 %v403
        %v436 = vunpack.c.l.b16 %v404
        %v437 = vunpack.c.l.b16 %v405
        %v438 = vunpack.c.l.b16 %v406
        %v439 = vunpack.c.l.b16 %v407
        %v440 = vpack.c.b16 %v425, %v424
        %v441 = vpack.c.b16 %v427, %v426
        %v442 = vpack.c.b16 %v429, %v428
        %v443 = vpack.c.b16 %v431, %v430
        %v444 = vpack.c.b16 %v433, %v432
        %v445 = vpack.c.b16 %v435, %v434
        %v446 = vpack.c.b16 %v437, %v436
        %v447 = vpack.c.b16 %v439, %v438
        %456 = vmatprep.subr.bf16.mxu0 0
        %457 = vmatpush1.bf16.msra.mxu0 %v440
        %458 = vmatprep.subr.bf16.mxu0 0
        %459 = vmatpush1.bf16.msra.mxu0 %v441
        %460 = vmatprep.subr.bf16.mxu0 0
        %461 = vmatpush1.bf16.msra.mxu0 %v442
        %462 = vmatprep.subr.bf16.mxu0 0
        %463 = vmatpush1.bf16.msra.mxu0 %v443
        %464 = vmatprep.subr.bf16.mxu0 0
        %465 = vmatpush1.bf16.msra.mxu0 %v444
        %466 = vmatprep.subr.bf16.mxu0 0
        %467 = vmatpush1.bf16.msra.mxu0 %v445
        %468 = vmatprep.subr.bf16.mxu0 0
        %469 = vmatpush1.bf16.msra.mxu0 %v446
        %470 = vmatprep.subr.bf16.mxu0 0
        %471 = vmatpush1.bf16.msra.mxu0 %v447
        %472 = vmatprep.subr.bf16.mxu0 0
        %473 = vmatpush1.bf16.msra.mxu0 0
        %474 = vmatprep.subr.bf16.mxu0 0
        %475 = vmatpush1.bf16.msra.mxu0 0
        %476 = vmatprep.subr.bf16.mxu0 0
        %477 = vmatpush1.bf16.msra.mxu0 0
        %478 = vmatprep.subr.bf16.mxu0 0
        %479 = vmatpush1.bf16.msra.mxu0 0
        %480 = vmatprep.subr.bf16.mxu0 0
        %481 = vmatpush1.bf16.msra.mxu0 0
        %482 = vmatprep.subr.bf16.mxu0 0
        %483 = vmatpush1.bf16.msra.mxu0 0
        %484 = vmatprep.subr.bf16.mxu0 0
        %485 = vmatpush1.bf16.msra.mxu0 0
        %486 = vmatprep.subr.bf16.mxu0 0
        %487 = vmatpush1.bf16.msra.mxu0 0
        %488 = vmatprep.mubr.bf16.mxu0 0
        %489 = vmatmul.mubr.bf16.gmra.mrb[0].mxu0 %v390
        %v490 = vpop.f32.mrb[0].mxu0
        %v491 = vadd.f32 0.0, %v490
        %v492 = vpop.f32.mrb[0].mxu0
        %v493 = vpop.f32.mrb[0].mxu0
        %v494 = vadd.f32 0.0, %v493
        %v495 = vpop.f32.mrb[0].mxu0
        %496 = vdwg.mxu0
        %v513 = vunpack.c.l.b16 %v370
        %v514 = vunpack.c.l.b16 %v371
        %v515 = vunpack.c.l.b16 %v372
        %v516 = vunpack.c.l.b16 %v373
        %v517 = vunpack.c.l.b16 %v374
        %v518 = vunpack.c.l.b16 %v375
        %v519 = vunpack.c.l.b16 %v376
        %v520 = vunpack.c.l.b16 %v377
        %v521 = vunpack.c.l.b16 %v378
        %v522 = vunpack.c.l.b16 %v379
        %v523 = vunpack.c.l.b16 %v380
        %v524 = vunpack.c.l.b16 %v381
        %v525 = vunpack.c.l.b16 %v382
        %v526 = vunpack.c.l.b16 %v383
        %v527 = vunpack.c.l.b16 %v384
        %v528 = vunpack.c.l.b16 %v385
        %v529 = vpack.c.b16 %v514, %v513
        %v530 = vpack.c.b16 %v516, %v515
        %v531 = vpack.c.b16 %v518, %v517
        %v532 = vpack.c.b16 %v520, %v519
        %v533 = vpack.c.b16 %v522, %v521
        %v534 = vpack.c.b16 %v524, %v523
        %v535 = vpack.c.b16 %v526, %v525
        %v536 = vpack.c.b16 %v528, %v527
        %545 = vmatprep.subr.bf16.mxu0 0
        %546 = vmatpush1.bf16.msra.mxu0 %v529
        %547 = vmatprep.subr.bf16.mxu0 0
        %548 = vmatpush1.bf16.msra.mxu0 %v530
        %549 = vmatprep.subr.bf16.mxu0 0
        %550 = vmatpush1.bf16.msra.mxu0 %v531
        %551 = vmatprep.subr.bf16.mxu0 0
        %552 = vmatpush1.bf16.msra.mxu0 %v532
        %553 = vmatprep.subr.bf16.mxu0 0
        %554 = vmatpush1.bf16.msra.mxu0 %v533
        %555 = vmatprep.subr.bf16.mxu0 0
        %556 = vmatpush1.bf16.msra.mxu0 %v534
        %557 = vmatprep.subr.bf16.mxu0 0
        %558 = vmatpush1.bf16.msra.mxu0 %v535
        %559 = vmatprep.subr.bf16.mxu0 0
        %560 = vmatpush1.bf16.msra.mxu0 %v536
        %561 = vmatprep.subr.bf16.mxu0 0
        %562 = vmatpush1.bf16.msra.mxu0 0
        %563 = vmatprep.subr.bf16.mxu0 0
        %564 = vmatpush1.bf16.msra.mxu0 0
        %565 = vmatprep.subr.bf16.mxu0 0
        %566 = vmatpush1.bf16.msra.mxu0 0
        %567 = vmatprep.subr.bf16.mxu0 0
        %568 = vmatpush1.bf16.msra.mxu0 0
        %569 = vmatprep.subr.bf16.mxu0 0
        %570 = vmatpush1.bf16.msra.mxu0 0
        %571 = vmatprep.subr.bf16.mxu0 0
        %572 = vmatpush1.bf16.msra.mxu0 0
        %573 = vmatprep.subr.bf16.mxu0 0
        %574 = vmatpush1.bf16.msra.mxu0 0
        %575 = vmatprep.subr.bf16.mxu0 0
        %576 = vmatpush1.bf16.msra.mxu0 0
        %577 = vmatprep.mubr.bf16.mxu0 0
        %578 = vmatmul.mubr.bf16.gmra.mrb[0].mxu0 %v369
        %v579 = vpop.f32.mrb[0].mxu0
        %v580 = vadd.f32 %v491, %v579
        %v581 = vpop.f32.mrb[0].mxu0
        %v582 = vpop.f32.mrb[0].mxu0
        %v583 = vadd.f32 %v494, %v582
        %v584 = vpop.f32.mrb[0].mxu0
        %585 = vdwg.mxu0
        %s586 = sadd.s32 %s362, 2
        %s587 = scalar_lea.vmem %s310, %s586 [#allocation2]
        %v588 = vld [vmem:[%s587] sm:$0xff]
        %v589 = vld [vmem:[%s587 + $0x8] sm:$0xff]
        %v590 = vpack.c.bf16 %v589, %v588
        %s591 = scalar_lea.vmem [#allocation5], 128
        %v592 = vld [vmem:[%s591] sm:$0xf]
        %v593 = vld [vmem:[%s591 + $0x4] sm:$0xf]
        %v594 = vld [vmem:[%s591 + $0x8] sm:$0xf]
        %v595 = vld [vmem:[%s591 + $0xc] sm:$0xf]
        %v596 = vld [vmem:[%s591 + $0x10] sm:$0xf]
        %v597 = vld [vmem:[%s591 + $0x14] sm:$0xf]
        %v598 = vld [vmem:[%s591 + $0x18] sm:$0xf]
        %v599 = vld [vmem:[%s591 + $0x1c] sm:$0xf]
        %v600 = vld [vmem:[%s591 + $0x20] sm:$0xf]
        %v601 = vld [vmem:[%s591 + $0x24] sm:$0xf]
        %v602 = vld [vmem:[%s591 + $0x28] sm:$0xf]
        %v603 = vld [vmem:[%s591 + $0x2c] sm:$0xf]
        %v604 = vld [vmem:[%s591 + $0x30] sm:$0xf]
        %v605 = vld [vmem:[%s591 + $0x34] sm:$0xf]
        %v606 = vld [vmem:[%s591 + $0x38] sm:$0xf]
        %v607 = vld [vmem:[%s591 + $0x3c] sm:$0xf]
        %v624 = vunpack.c.l.b16 %v592
        %v625 = vunpack.c.l.b16 %v593
        %v626 = vunpack.c.l.b16 %v594
        %v627 = vunpack.c.l.b16 %v595
        %v628 = vunpack.c.l.b16 %v596
        %v629 = vunpack.c.l.b16 %v597
        %v630 = vunpack.c.l.b16 %v598
        %v631 = vunpack.c.l.b16 %v599
        %v632 = vunpack.c.l.b16 %v600
        %v633 = vunpack.c.l.b16 %v601
        %v634 = vunpack.c.l.b16 %v602
        %v635 = vunpack.c.l.b16 %v603
        %v636 = vunpack.c.l.b16 %v604
        %v637 = vunpack.c.l.b16 %v605
        %v638 = vunpack.c.l.b16 %v606
        %v639 = vunpack.c.l.b16 %v607
        %v640 = vpack.c.b16 %v625, %v624
        %v641 = vpack.c.b16 %v627, %v626
        %v642 = vpack.c.b16 %v629, %v628
        %v643 = vpack.c.b16 %v631, %v630
        %v644 = vpack.c.b16 %v633, %v632
        %v645 = vpack.c.b16 %v635, %v634
        %v646 = vpack.c.b16 %v637, %v636
        %v647 = vpack.c.b16 %v639, %v638
        %656 = vmatprep.subr.bf16.mxu0 0
        %657 = vmatpush1.bf16.msra.mxu0 %v640
        %658 = vmatprep.subr.bf16.mxu0 0
        %659 = vmatpush1.bf16.msra.mxu0 %v641
        %660 = vmatprep.subr.bf16.mxu0 0
        %661 = vmatpush1.bf16.msra.mxu0 %v642
        %662 = vmatprep.subr.bf16.mxu0 0
        %663 = vmatpush1.bf16.msra.mxu0 %v643
        %664 = vmatprep.subr.bf16.mxu0 0
        %665 = vmatpush1.bf16.msra.mxu0 %v644
        %666 = vmatprep.subr.bf16.mxu0 0
        %667 = vmatpush1.bf16.msra.mxu0 %v645
        %668 = vmatprep.subr.bf16.mxu0 0
        %669 = vmatpush1.bf16.msra.mxu0 %v646
        %670 = vmatprep.subr.bf16.mxu0 0
        %671 = vmatpush1.bf16.msra.mxu0 %v647
        %672 = vmatprep.subr.bf16.mxu0 0
        %673 = vmatpush1.bf16.msra.mxu0 0
        %674 = vmatprep.subr.bf16.mxu0 0
        %675 = vmatpush1.bf16.msra.mxu0 0
        %676 = vmatprep.subr.bf16.mxu0 0
        %677 = vmatpush1.bf16.msra.mxu0 0
        %678 = vmatprep.subr.bf16.mxu0 0
        %679 = vmatpush1.bf16.msra.mxu0 0
        %680 = vmatprep.subr.bf16.mxu0 0
        %681 = vmatpush1.bf16.msra.mxu0 0
        %682 = vmatprep.subr.bf16.mxu0 0
        %683 = vmatpush1.bf16.msra.mxu0 0
        %684 = vmatprep.subr.bf16.mxu0 0
        %685 = vmatpush1.bf16.msra.mxu0 0
        %686 = vmatprep.subr.bf16.mxu0 0
        %687 = vmatpush1.bf16.msra.mxu0 0
        %688 = vmatprep.mubr.bf16.mxu0 0
        %689 = vmatmul.mubr.bf16.gmra.mrb[0].mxu0 %v590
        %v690 = vpop.f32.mrb[0].mxu0
        %v691 = vadd.f32 0.0, %v690
        %v692 = vpop.f32.mrb[0].mxu0
        %v693 = vpop.f32.mrb[0].mxu0
        %v694 = vadd.f32 0.0, %v693
        %v695 = vpop.f32.mrb[0].mxu0
        %696 = vdwg.mxu0
        %v697 = vadd.f32 %v580, %v691
        %v698 = vadd.f32 %v583, %v694
        %s699 = sadd.s32 %s362, 3
        %s700 = scalar_lea.vmem %s310, %s699 [#allocation2]
        %v701 = vld [vmem:[%s700] sm:$0xff]
        %v702 = vld [vmem:[%s700 + $0x8] sm:$0xff]
        %v703 = vpack.c.bf16 %v702, %v701
        %s704 = scalar_lea.vmem [#allocation5], 192
        %v705 = vld [vmem:[%s704] sm:$0xf]
        %v706 = vld [vmem:[%s704 + $0x4] sm:$0xf]
        %v707 = vld [vmem:[%s704 + $0x8] sm:$0xf]
        %v708 = vld [vmem:[%s704 + $0xc] sm:$0xf]
        %v709 = vld [vmem:[%s704 + $0x10] sm:$0xf]
        %v710 = vld [vmem:[%s704 + $0x14] sm:$0xf]
        %v711 = vld [vmem:[%s704 + $0x18] sm:$0xf]
        %v712 = vld [vmem:[%s704 + $0x1c] sm:$0xf]
        %v713 = vld [vmem:[%s704 + $0x20] sm:$0xf]
        %v714 = vld [vmem:[%s704 + $0x24] sm:$0xf]
        %v715 = vld [vmem:[%s704 + $0x28] sm:$0xf]
        %v716 = vld [vmem:[%s704 + $0x2c] sm:$0xf]
        %v717 = vld [vmem:[%s704 + $0x30] sm:$0xf]
        %v718 = vld [vmem:[%s704 + $0x34] sm:$0xf]
        %v719 = vld [vmem:[%s704 + $0x38] sm:$0xf]
        %v720 = vld [vmem:[%s704 + $0x3c] sm:$0xf]
        %v737 = vunpack.c.l.b16 %v705
        %v738 = vunpack.c.l.b16 %v706
        %v739 = vunpack.c.l.b16 %v707
        %v740 = vunpack.c.l.b16 %v708
        %v741 = vunpack.c.l.b16 %v709
        %v742 = vunpack.c.l.b16 %v710
        %v743 = vunpack.c.l.b16 %v711
        %v744 = vunpack.c.l.b16 %v712
        %v745 = vunpack.c.l.b16 %v713
        %v746 = vunpack.c.l.b16 %v714
        %v747 = vunpack.c.l.b16 %v715
        %v748 = vunpack.c.l.b16 %v716
        %v749 = vunpack.c.l.b16 %v717
        %v750 = vunpack.c.l.b16 %v718
        %v751 = vunpack.c.l.b16 %v719
        %v752 = vunpack.c.l.b16 %v720
        %v753 = vpack.c.b16 %v738, %v737
        %v754 = vpack.c.b16 %v740, %v739
        %v755 = vpack.c.b16 %v742, %v741
        %v756 = vpack.c.b16 %v744, %v743
        %v757 = vpack.c.b16 %v746, %v745
        %v758 = vpack.c.b16 %v748, %v747
        %v759 = vpack.c.b16 %v750, %v749
        %v760 = vpack.c.b16 %v752, %v751
        %769 = vmatprep.subr.bf16.mxu0 0
        %770 = vmatpush1.bf16.msra.mxu0 %v753
        %771 = vmatprep.subr.bf16.mxu0 0
        %772 = vmatpush1.bf16.msra.mxu0 %v754
        %773 = vmatprep.subr.bf16.mxu0 0
        %774 = vmatpush1.bf16.msra.mxu0 %v755
        %775 = vmatprep.subr.bf16.mxu0 0
        %776 = vmatpush1.bf16.msra.mxu0 %v756
        %777 = vmatprep.subr.bf16.mxu0 0
        %778 = vmatpush1.bf16.msra.mxu0 %v757
        %779 = vmatprep.subr.bf16.mxu0 0
        %780 = vmatpush1.bf16.msra.mxu0 %v758
        %781 = vmatprep.subr.bf16.mxu0 0
        %782 = vmatpush1.bf16.msra.mxu0 %v759
        %783 = vmatprep.subr.bf16.mxu0 0
        %784 = vmatpush1.bf16.msra.mxu0 %v760
        %785 = vmatprep.subr.bf16.mxu0 0
        %786 = vmatpush1.bf16.msra.mxu0 0
        %787 = vmatprep.subr.bf16.mxu0 0
        %788 = vmatpush1.bf16.msra.mxu0 0
        %789 = vmatprep.subr.bf16.mxu0 0
        %790 = vmatpush1.bf16.msra.mxu0 0
        %791 = vmatprep.subr.bf16.mxu0 0
        %792 = vmatpush1.bf16.msra.mxu0 0
        %793 = vmatprep.subr.bf16.mxu0 0
        %794 = vmatpush1.bf16.msra.mxu0 0
        %795 = vmatprep.subr.bf16.mxu0 0
        %796 = vmatpush1.bf16.msra.mxu0 0
        %797 = vmatprep.subr.bf16.mxu0 0
        %798 = vmatpush1.bf16.msra.mxu0 0
        %799 = vmatprep.subr.bf16.mxu0 0
        %800 = vmatpush1.bf16.msra.mxu0 0
        %801 = vmatprep.mubr.bf16.mxu0 0
        %802 = vmatmul.mubr.bf16.gmra.mrb[0].mxu0 %v703
        %v803 = vpop.f32.mrb[0].mxu0
        %v804 = vadd.f32 0.0, %v803
        %v805 = vpop.f32.mrb[0].mxu0
        %v806 = vpop.f32.mrb[0].mxu0
        %v807 = vadd.f32 0.0, %v806
        %v808 = vpop.f32.mrb[0].mxu0
        %809 = vdwg.mxu0
        %v810 = vadd.f32 %v697, %v804
        %v811 = vadd.f32 %v698, %v807
        %v813 = vlaneseq
        %v814 = vshrl.u32 %v813, 7
        %v815 = vsub.s32 0, %v814
        %v816 = vrot.slane %v363, %v815
        %v818 = vadd.f32 %v810, %v816
        %v819 = vadd.f32 %v811, %v816
        %v821 = vlaneseq
        %v822 = vshrl.u32 %v821, 7
        %v823 = vsub.s32 0, %v822
        %v824 = vrot.slane %v364, %v823
        %v826 = vmul.f32 %v818, %v824
        %v827 = vmul.f32 %v819, %v824
        %v829 = vlaneseq
        %v830 = vshrl.u32 %v829, 7
        %v831 = vsub.s32 0, %v830
        %v832 = vrot.slane %v365, %v831
        %v834 = vadd.f32 %v826, %v832
        %v835 = vadd.f32 %v827, %v832
        %v836 = vmax.f32 %v834, 0.0
        %v837 = vmax.f32 %v835, 0.0
        %v838 = vld [vmem:[#allocation11] sm:$0xff]
        %v839 = vld [vmem:[#allocation11 + $0x8] sm:$0xff]
        %v840 = vadd.f32 %v836, %v838
        %v841 = vadd.f32 %v837, %v839
        %842 = vst [vmem:[%s358] sm:$0xff] %v840
        %843 = vst [vmem:[%s358 + $0x8] sm:$0xff] %v841
        %s844 = sand.u32 %s184, 1
        %s845 = scalar_lea.sflag [#allocation4], %s844
        %s846 = sand.u32 %s184, 1
        %s847 = smul.addr %s846, 16
        %s848 = scalar_lea.vmem [#allocation13], %s847
        // Predicated region
        $region69: #{forward.8} parent=43 // pred_check
          %p849 = pneg %p194
        $region70: #{forward.8} parent=43 // pred_check_branch
          %851 = sbr.rel (%p849) target = $region72
        $region71: #{forward.8} parent=43 // pred_region
          %s852 = smul.u32 2, %s31
          %s854 = ssub.s32 256, 256
          %855 = vsyncadd %s845, %s854
          %s856 = smul.addr %s30, 2
          %s857 = sadd.s32 %s852, %s856
          %s858 = smul.addr %s857, 128
          %s859 = scalar_lea.hbm %s6, %s858
          %s860 = sshll.u32 %s848, 4
          %s861 = int_to_ptr.vmem [resolvable:$true] %s860
          %866 = dma.vmem_to_hbm [thread:$0]  %s861, 256, %s859, %s845, 128, 128, 8
        $region72: #{forward.8} parent=43 // pred_fallthru
          _
      $region44: #{forward.8} parent=5 // pred_fallthru
        _
      %p867 = scmp.le.s32.totalorder 2, %s21
      // Predicated region
      $region73: #{forward.8} parent=5 // pred_check
        %p868 = pneg %p867
      $region74: #{forward.8} parent=5 // pred_check_branch
        %870 = sbr.rel (%p868) target = $region76
      $region75: #{forward.8} parent=5 // pred_region
        %s871 = ssub.s32 %s21, 2
        // Predicated region
        $region77: #{forward.8} parent=75 // pred_check
          %p872 = pneg %p200
        $region78: #{forward.8} parent=75 // pred_check_branch
          %874 = sbr.rel (%p872) target = $region80
        $region79: #{forward.8} parent=75 // pred_region
          %s875 = sand.u32 %s185, 1
          %s876 = scalar_lea.sflag [#allocation4], %s875
          %s877 = sand.u32 %s185, 1
          %s878 = smul.addr %s877, 16
          %s879 = scalar_lea.vmem [#allocation13], %s878
          %880 = dma.done %s876, 256
        $region80: #{forward.8} parent=75 // pred_fallthru
          _
      $region76: #{forward.8} parent=5 // pred_fallthru
        _
    $region6: #{forward.8} parent=1 // loop_footer
      %s25 = sadd.s32 1, %s21
    $region7: #{forward.8} parent=1 // loop_footer_branch
      %20 = sbr.rel target = $region3
    $region8: #{forward.8} parent=1 // loop_exit
      _
    %881 = vsyncpa [#allocation3], 1
    %s882 = scalar_lea.sflag [#allocation3], 1
    %883 = vsyncpa %s882, 1
    %884 = vsyncpa [#allocation6], 1
    %885 = vsyncpa [#allocation9], 1
    %886 = vsyncpa [#allocation12], 1
    %887 = vsyncpa [#allocation4], 1
    %s888 = scalar_lea.sflag [#allocation4], 1
    %889 = vsyncpa %s888, 1

// kernel: forward.13
$region0: #{forward.13}
  #allocation0 [shape = 'u32[]', space=smem, size = 0x4, offset = 0x4, fixed_abs, tag = 'smem constant byte address 0x4 - core index']
  #allocation1 [shape = 'u32[144,128]{1,0:T(1,128)}', space=vmem, size = 0x12000, scoped, tag = 'internal scratch']
  %s0 = inlined_call_operand.vmem [shape: f32[2,16,128], index: 0, kind: input, shape index: {}]
  %s1 = inlined_call_operand.vmem [shape: f32[1,128], index: 1, kind: input, shape index: {}]
  %s2 = inlined_call_operand.vmem [shape: f32[1,128], index: 2, kind: input, shape index: {}]
  %s3 = inlined_call_operand.vmem [shape: bf16[128,30], index: 3, kind: input, shape index: {}]
  %s4 = inlined_call_operand.vmem [shape: f32[1,30], index: 4, kind: input, shape index: {}]
  %s5 = inlined_call_operand.hbm [shape: f32[2,1,30], index: 5, kind: output, shape index: {}]
  %s6 = sld [smem:[#allocation0]]
  $region53: #{forward.13} parent=0
    _
  %s8 = ssub.s32 1, %s6
  %s9 = scalar_select 0, %s8, %s6
  $region1: #{forward.13} parent=0
    #allocation2 [shape = 'u8[1024]{0}', space=vmem, size = 0x400, scoped, tag = 'output window, operand 0']
    #allocation3 [shape = 's32[2]{0}', space=sflag, size = 0x8, scoped, tag = 'scoped memory for forward.13']
    %10 = vsyncpa [#allocation3], 0
    %s11 = scalar_lea.sflag [#allocation3], 1
    %12 = vsyncpa %s11, 0
    loop: start=0, step=1, limit=4
    $region2: #{forward.13} parent=1 // loop_pre_header
      _
    $region3: #{forward.13} parent=1 // loop_header
      %s14 = sphi 0, %s18
      %p15 = scmp.ge.s32.totalorder %s14, 4
      %s24 = sphi 0, %s26
      %s27 = sphi 0, %s24
      %s28 = sphi 0, %s27
      %s44 = sphi 0, %s28
      %s48 = sphi 0, %s48
      %s50 = sphi 0, %s48
      %s51 = sphi 0, %s50
      %s65 = sphi 0, %s51
      %s69 = sphi 0, %s69
      %s71 = sphi 0, %s69
      %s72 = sphi 0, %s71
      %s86 = sphi 0, %s72
      %s90 = sphi 0, %s90
      %s92 = sphi 0, %s90
      %s93 = sphi 0, %s92
      %s107 = sphi 0, %s93
      %s111 = sphi 0, %s111
      %s113 = sphi 0, %s111
      %s114 = sphi 0, %s113
      %s128 = sphi 0, %s114
      %s134 = sphi 0, %s136
      %s137 = sphi 0, %s134
      %s138 = sphi 0, %s137
      %s154 = sphi 0, %s138
    $region4: #{forward.13} parent=1 // loop_header_branch
      %17 = sbr.rel (%p15) target = $region8
    $region5: #{forward.13} parent=1 // loop_body
      %s19 = ssub.s32 %s14, 1
      %s20 = ssub.s32 %s14, 2
      %s21 = sadd.s32 %s14, 1
      %s22 = ssub.s32 %s14, %s21
      %p23 = scmp.eq.s32.totalorder %s22, 0
      %s25 = sadd.s32 %s24, 1
      %s26 = scalar_select %p23, %s24, %s25
      %p29 = pneg %p23
      %p30 = scmp.eq.s32.totalorder %s14, 1
      %p31 = por %p29, %p30
      %p32 = scmp.ne.s32.totalorder %s24, %s27
      %p33 = scmp.eq.s32.totalorder %s14, 0
      %p34 = por %p32, %p33
      %p35 = scmp.ne.s32.totalorder %s24, %s27
      %p36 = scmp.eq.s32.totalorder %s19, 1
      %p37 = por %p35, %p36
      %p38 = scmp.ne.s32.totalorder %s27, %s28
      %p39 = scmp.eq.s32.totalorder %s19, 0
      %p40 = por %p38, %p39
      %p41 = scmp.ne.s32.totalorder %s27, %s28
      %p42 = scmp.eq.s32.totalorder %s20, 1
      %p43 = por %p41, %p42
      %p45 = scmp.ne.s32.totalorder %s28, %s44
      %p46 = scmp.eq.s32.totalorder %s20, 0
      %p47 = por %p45, %p46
      %s49 = sadd.s32 %s48, 1
      %p52 = scmp.eq.s32.totalorder %s14, 1
      %p53 = scmp.ne.s32.totalorder %s48, %s50
      %p54 = scmp.eq.s32.totalorder %s14, 0
      %p55 = por %p53, %p54
      %p56 = scmp.ne.s32.totalorder %s48, %s50
      %p57 = scmp.eq.s32.totalorder %s19, 1
      %p58 = por %p56, %p57
      %p59 = scmp.ne.s32.totalorder %s50, %s51
      %p60 = scmp.eq.s32.totalorder %s19, 0
      %p61 = por %p59, %p60
      %p62 = scmp.ne.s32.totalorder %s50, %s51
      %p63 = scmp.eq.s32.totalorder %s20, 1
      %p64 = por %p62, %p63
      %p66 = scmp.ne.s32.totalorder %s51, %s65
      %p67 = scmp.eq.s32.totalorder %s20, 0
      %p68 = por %p66, %p67
      %s70 = sadd.s32 %s69, 1
      %p73 = scmp.eq.s32.totalorder %s14, 1
      %p74 = scmp.ne.s32.totalorder %s69, %s71
      %p75 = scmp.eq.s32.totalorder %s14, 0
      %p76 = por %p74, %p75
      %p77 = scmp.ne.s32.totalorder %s69, %s71
      %p78 = scmp.eq.s32.totalorder %s19, 1
      %p79 = por %p77, %p78
      %p80 = scmp.ne.s32.totalorder %s71, %s72
      %p81 = scmp.eq.s32.totalorder %s19, 0
      %p82 = por %p80, %p81
      %p83 = scmp.ne.s32.totalorder %s71, %s72
      %p84 = scmp.eq.s32.totalorder %s20, 1
      %p85 = por %p83, %p84
      %p87 = scmp.ne.s32.totalorder %s72, %s86
      %p88 = scmp.eq.s32.totalorder %s20, 0
      %p89 = por %p87, %p88
      %s91 = sadd.s32 %s90, 1
      %p94 = scmp.eq.s32.totalorder %s14, 1
      %p95 = scmp.ne.s32.totalorder %s90, %s92
      %p96 = scmp.eq.s32.totalorder %s14, 0
      %p97 = por %p95, %p96
      %p98 = scmp.ne.s32.totalorder %s90, %s92
      %p99 = scmp.eq.s32.totalorder %s19, 1
      %p100 = por %p98, %p99
      %p101 = scmp.ne.s32.totalorder %s92, %s93
      %p102 = scmp.eq.s32.totalorder %s19, 0
      %p103 = por %p101, %p102
      %p104 = scmp.ne.s32.totalorder %s92, %s93
      %p105 = scmp.eq.s32.totalorder %s20, 1
      %p106 = por %p104, %p105
      %p108 = scmp.ne.s32.totalorder %s93, %s107
      %p109 = scmp.eq.s32.totalorder %s20, 0
      %p110 = por %p108, %p109
      %s112 = sadd.s32 %s111, 1
      %p115 = scmp.eq.s32.totalorder %s14, 1
      %p116 = scmp.ne.s32.totalorder %s111, %s113
      %p117 = scmp.eq.s32.totalorder %s14, 0
      %p118 = por %p116, %p117
      %p119 = scmp.ne.s32.totalorder %s111, %s113
      %p120 = scmp.eq.s32.totalorder %s19, 1
      %p121 = por %p119, %p120
      %p122 = scmp.ne.s32.totalorder %s113, %s114
      %p123 = scmp.eq.s32.totalorder %s19, 0
      %p124 = por %p122, %p123
      %p125 = scmp.ne.s32.totalorder %s113, %s114
      %p126 = scmp.eq.s32.totalorder %s20, 1
      %p127 = por %p125, %p126
      %p129 = scmp.ne.s32.totalorder %s114, %s128
      %p130 = scmp.eq.s32.totalorder %s20, 0
      %p131 = por %p129, %p130
      %s132 = ssub.s32 %s14, %s21
      %p133 = scmp.eq.s32.totalorder %s132, 0
      %s135 = sadd.s32 %s134, 1
      %s136 = scalar_select %p133, %s134, %s135
      %p139 = pneg %p133
      %p140 = scmp.eq.s32.totalorder %s14, 1
      %p141 = por %p139, %p140
      %p142 = scmp.ne.s32.totalorder %s134, %s137
      %p143 = scmp.eq.s32.totalorder %s14, 0
      %p144 = por %p142, %p143
      %p145 = scmp.ne.s32.totalorder %s134, %s137
      %p146 = scmp.eq.s32.totalorder %s19, 1
      %p147 = por %p145, %p146
      %p148 = scmp.ne.s32.totalorder %s137, %s138
      %p149 = scmp.eq.s32.totalorder %s19, 0
      %p150 = por %p148, %p149
      %p151 = scmp.ne.s32.totalorder %s137, %s138
      %p152 = scmp.eq.s32.totalorder %s20, 1
      %p153 = por %p151, %p152
      %p155 = scmp.ne.s32.totalorder %s138, %s154
      %p156 = scmp.eq.s32.totalorder %s20, 0
      %p157 = por %p155, %p156
      %p158 = scmp.le.s32.totalorder 1, %s14
      %p159 = scmp.lt.s32.totalorder %s14, 3
      %p160 = pnand %p158, %p159
      %p161 = pneg %p160
      // Predicated region
      $region9: #{forward.13} parent=5 // pred_check
        _
      $region10: #{forward.13} parent=5 // pred_check_branch
        %163 = sbr.rel (%p160) target = $region12
      $region11: #{forward.13} parent=5 // pred_region
        %s164 = ssub.s32 %s14, 1
        // Predicated region
        $region13: #{forward.13} parent=11 // pred_check
          %p165 = pneg %p61
        $region14: #{forward.13} parent=11 // pred_check_branch
          %167 = sbr.rel (%p165) target = $region16
        $region15: #{forward.13} parent=11 // pred_region
          _
        $region16: #{forward.13} parent=11 // pred_fallthru
          _
        // Predicated region
        $region17: #{forward.13} parent=11 // pred_check
          %p168 = pneg %p82
        $region18: #{forward.13} parent=11 // pred_check_branch
          %170 = sbr.rel (%p168) target = $region20
        $region19: #{forward.13} parent=11 // pred_region
          _
        $region20: #{forward.13} parent=11 // pred_fallthru
          _
        // Predicated region
        $region21: #{forward.13} parent=11 // pred_check
          %p171 = pneg %p103
        $region22: #{forward.13} parent=11 // pred_check_branch
          %173 = sbr.rel (%p171) target = $region24
        $region23: #{forward.13} parent=11 // pred_region
          _
        $region24: #{forward.13} parent=11 // pred_fallthru
          _
        // Predicated region
        $region25: #{forward.13} parent=11 // pred_check
          %p174 = pneg %p124
        $region26: #{forward.13} parent=11 // pred_check_branch
          %176 = sbr.rel (%p174) target = $region28
        $region27: #{forward.13} parent=11 // pred_region
          _
        $region28: #{forward.13} parent=11 // pred_fallthru
          _
      $region12: #{forward.13} parent=5 // pred_fallthru
        _
      %p177 = scmp.lt.s32.totalorder %s14, 2
      // Predicated region
      $region29: #{forward.13} parent=5 // pred_check
        %p178 = pneg %p177
      $region30: #{forward.13} parent=5 // pred_check_branch
        %180 = sbr.rel (%p178) target = $region32
      $region31: #{forward.13} parent=5 // pred_region
        // Predicated region
        $region33: #{forward.13} parent=31 // pred_check
          %p181 = pneg %p34
        $region34: #{forward.13} parent=31 // pred_check_branch
          %183 = sbr.rel (%p181) target = $region36
        $region35: #{forward.13} parent=31 // pred_region
          %p184 = scmp.lt.s32.totalorder %s14, 1
          %s185 = scalar_select %p184, %s14, 1
          %s186 = smul.addr %s185, 2
          %s187 = smul.addr %s186, 8
          %s188 = scalar_lea.vmem %s0, %s187
        $region36: #{forward.13} parent=31 // pred_fallthru
          _
      $region32: #{forward.13} parent=5 // pred_fallthru
        _
      %p189 = scmp.le.s32.totalorder 1, %s14
      %p190 = scmp.lt.s32.totalorder %s14, 3
      %p191 = pnand %p189, %p190
      %p192 = pneg %p191
      // Predicated region
      $region37: #{forward.13} parent=5 // pred_check
        _
      $region38: #{forward.13} parent=5 // pred_check_branch
        %194 = sbr.rel (%p191) target = $region40
      $region39: #{forward.13} parent=5 // pred_region
        %s195 = ssub.s32 %s14, 1
        %p196 = scmp.lt.s32.totalorder %s19, 1
        %s197 = scalar_select %p196, %s19, 1
        %s198 = smul.addr %s197, 2
        %s199 = smul.addr %s198, 8
        %s200 = scalar_lea.vmem %s0, %s199
        %p201 = pneg %p40
        %p202 = pneg %p37
        %p203 = pneg %p61
        %p204 = pneg %p58
        %p205 = pneg %p82
        %p206 = pneg %p79
        %p207 = pneg %p103
        %p208 = pneg %p100
        %p209 = pneg %p124
        %p210 = pneg %p121
        %p211 = pneg %p150
        %p212 = pneg %p147
        %s213 = sand.u32 %s137, 1
        %s214 = scalar_lea.sflag [#allocation3], %s213
        %s215 = sand.u32 %s137, 1
        %s216 = scalar_lea.vmem [#allocation2], %s215
        %p217 = scmp.lt.s32.totalorder %s19, 1
        %s218 = scalar_select %p217, %s19, 1
        %s219 = smul.addr %s218, 2
        %s220 = smul.addr %s219, 8
        %s221 = scalar_lea.vmem %s0, %s220
        %v223 = vld [vmem:[%s221] sm:$0xff]
        %v224 = vld [vmem:[%s221 + $0x8] sm:$0xff]
        %v225 = vadd.f32 %v223, %v224
        %v226 = vrot.slane %v225, 4
        %v227 = vadd.f32 %v225, %v226
        %v228 = vrot.slane %v227, 2
        %v229 = vadd.f32 %v227, %v228
        %v230 = vrot.slane %v229, 1
        %v231 = vadd.f32 %v229, %v230
        %v232 = vrcp.pop 16.0
        %v233 = vmul.f32 %v231, %v232
        %234 = vadd.xlane.f32.xlu0 %v233
        %v235 = vpop.xlane.xlu0 %234
        %v236 = vrcp.pop 128.0
        %v237 = vmul.f32 %v235, %v236
        %v238 = vsub.f32 %v233, %v237
        %v239 = vmul.f32 %v238, %v238
        %240 = vadd.xlane.f32.xlu0 %v239
        %v241 = vpop.xlane.xlu0 %240
        %v242 = vmul.f32 %v241, %v236
        %v243 = vadd.f32 %v242, 1e-05
        %v244 = vrsqrt.pop %v243
        %v245 = vmul.f32 %v238, %v244
        %v246 = vld [vmem:[%s1] sm:$0x1]
        %v247 = vmul.f32 %v245, %v246
        %v248 = vld [vmem:[%s2] sm:$0x1]
        %v249 = vadd.f32 %v247, %v248
        %v250 = vpack.c.bf16 %v249, %v249
        %v251 = vld [vmem:[%s3] sm:$0xf]
        %v252 = vld [vmem:[%s3 + $0x4] sm:$0xf]
        %v253 = vld [vmem:[%s3 + $0x8] sm:$0xf]
        %v254 = vld [vmem:[%s3 + $0xc] sm:$0xf]
        %v255 = vld [vmem:[%s3 + $0x10] sm:$0xf]
        %v256 = vld [vmem:[%s3 + $0x14] sm:$0xf]
        %v257 = vld [vmem:[%s3 + $0x18] sm:$0xf]
        %v258 = vld [vmem:[%s3 + $0x1c] sm:$0xf]
        %v259 = vld [vmem:[%s3 + $0x20] sm:$0xf]
        %v260 = vld [vmem:[%s3 + $0x24] sm:$0xf]
        %v261 = vld [vmem:[%s3 + $0x28] sm:$0xf]
        %v262 = vld [vmem:[%s3 + $0x2c] sm:$0xf]
        %v263 = vld [vmem:[%s3 + $0x30] sm:$0xf]
        %v264 = vld [vmem:[%s3 + $0x34] sm:$0xf]
        %v265 = vld [vmem:[%s3 + $0x38] sm:$0xf]
        %v266 = vld [vmem:[%s3 + $0x3c] sm:$0xf]
        %v267 = vld [vmem:[%s4] sm:$0x1]
        %v284 = vunpack.c.l.b16 %v251
        %v285 = vunpack.c.l.b16 %v252
        %v286 = vunpack.c.l.b16 %v253
        %v287 = vunpack.c.l.b16 %v254
        %v288 = vunpack.c.l.b16 %v255
        %v289 = vunpack.c.l.b16 %v256
        %v290 = vunpack.c.l.b16 %v257
        %v291 = vunpack.c.l.b16 %v258
        %v292 = vunpack.c.l.b16 %v259
        %v293 = vunpack.c.l.b16 %v260
        %v294 = vunpack.c.l.b16 %v261
        %v295 = vunpack.c.l.b16 %v262
        %v296 = vunpack.c.l.b16 %v263
        %v297 = vunpack.c.l.b16 %v264
        %v298 = vunpack.c.l.b16 %v265
        %v299 = vunpack.c.l.b16 %v266
        %v300 = vpack.c.b16 %v285, %v284
        %v301 = vpack.c.b16 %v287, %v286
        %v302 = vpack.c.b16 %v289, %v288
        %v303 = vpack.c.b16 %v291, %v290
        %v304 = vpack.c.b16 %v293, %v292
        %v305 = vpack.c.b16 %v295, %v294
        %v306 = vpack.c.b16 %v297, %v296
        %v307 = vpack.c.b16 %v299, %v298
        %316 = vmatprep.subr.bf16.mxu0 0
        %317 = vmatpush1.bf16.msra.mxu0 %v300
        %318 = vmatprep.subr.bf16.mxu0 0
        %319 = vmatpush1.bf16.msra.mxu0 %v301
        %320 = vmatprep.subr.bf16.mxu0 0
        %321 = vmatpush1.bf16.msra.mxu0 %v302
        %322 = vmatprep.subr.bf16.mxu0 0
        %323 = vmatpush1.bf16.msra.mxu0 %v303
        %324 = vmatprep.subr.bf16.mxu0 0
        %325 = vmatpush1.bf16.msra.mxu0 %v304
        %326 = vmatprep.subr.bf16.mxu0 0
        %327 = vmatpush1.bf16.msra.mxu0 %v305
        %328 = vmatprep.subr.bf16.mxu0 0
        %329 = vmatpush1.bf16.msra.mxu0 %v306
        %330 = vmatprep.subr.bf16.mxu0 0
        %331 = vmatpush1.bf16.msra.mxu0 %v307
        %332 = vmatprep.subr.bf16.mxu0 0
        %333 = vmatpush1.bf16.msra.mxu0 0
        %334 = vmatprep.subr.bf16.mxu0 0
        %335 = vmatpush1.bf16.msra.mxu0 0
        %336 = vmatprep.subr.bf16.mxu0 0
        %337 = vmatpush1.bf16.msra.mxu0 0
        %338 = vmatprep.subr.bf16.mxu0 0
        %339 = vmatpush1.bf16.msra.mxu0 0
        %340 = vmatprep.subr.bf16.mxu0 0
        %341 = vmatpush1.bf16.msra.mxu0 0
        %342 = vmatprep.subr.bf16.mxu0 0
        %343 = vmatpush1.bf16.msra.mxu0 0
        %344 = vmatprep.subr.bf16.mxu0 0
        %345 = vmatpush1.bf16.msra.mxu0 0
        %346 = vmatprep.subr.bf16.mxu0 0
        %347 = vmatpush1.bf16.msra.mxu0 0
        %348 = vmatprep.mubr.bf16.mxu0 0
        %349 = vmatmul.mubr.bf16.gmra.mrb[0].mxu0 %v250
        %v350 = vpop.f32.mrb[0].mxu0
        %v351 = vadd.f32 %v267, %v350
        %v352 = vpop.f32.mrb[0].mxu0
        %v353 = vpop.f32.mrb[0].mxu0
        %v354 = vpop.f32.mrb[0].mxu0
        %355 = vdwg.mxu0
        %vm356 = vcmask 237568
        %357 = vst.msk [vmem:[%s216] sm:$0x1] %vm356, %v351
        %s358 = sand.u32 %s137, 1
        %s359 = scalar_lea.sflag [#allocation3], %s358
        %s360 = sand.u32 %s137, 1
        %s361 = scalar_lea.vmem [#allocation2], %s360
        // Predicated region
        $region41: #{forward.13} parent=39 // pred_check
          %p362 = pneg %p147
        $region42: #{forward.13} parent=39 // pred_check_branch
          %364 = sbr.rel (%p362) target = $region44
        $region43: #{forward.13} parent=39 // pred_region
          %s366 = ssub.s32 16, 16
          %367 = vsyncadd %s359, %s366
          %s368 = smul.addr %s19, 16
          %s369 = scalar_lea.hbm %s5, %s368
          %s371 = sshll.u32 %s361, 4
          %s372 = int_to_ptr.vmem [resolvable:$true] %s371
          %374 = dma.vmem_to_hbm [thread:$0]  %s372, 16, %s369, %s359
        $region44: #{forward.13} parent=39 // pred_fallthru
          _
      $region40: #{forward.13} parent=5 // pred_fallthru
        _
      %p375 = scmp.le.s32.totalorder 2, %s14
      // Predicated region
      $region45: #{forward.13} parent=5 // pred_check
        %p376 = pneg %p375
      $region46: #{forward.13} parent=5 // pred_check_branch
        %378 = sbr.rel (%p376) target = $region48
      $region47: #{forward.13} parent=5 // pred_region
        %s379 = ssub.s32 %s14, 2
        // Predicated region
        $region49: #{forward.13} parent=47 // pred_check
          %p380 = pneg %p153
        $region50: #{forward.13} parent=47 // pred_check_branch
          %382 = sbr.rel (%p380) target = $region52
        $region51: #{forward.13} parent=47 // pred_region
          %s383 = sand.u32 %s138, 1
          %s384 = scalar_lea.sflag [#allocation3], %s383
          %s385 = sand.u32 %s138, 1
          %s386 = scalar_lea.vmem [#allocation2], %s385
          %387 = dma.done %s384, 16
        $region52: #{forward.13} parent=47 // pred_fallthru
          _
      $region48: #{forward.13} parent=5 // pred_fallthru
        _
    $region6: #{forward.13} parent=1 // loop_footer
      %s18 = sadd.s32 1, %s14
    $region7: #{forward.13} parent=1 // loop_footer_branch
      %13 = sbr.rel target = $region3
    $region8: #{forward.13} parent=1 // loop_exit
      _
    %388 = vsyncpa [#allocation3], 1
    %s389 = scalar_lea.sflag [#allocation3], 1
    %390 = vsyncpa %s389, 1

// kernel: forward.9
$region0: #{forward.9}
  #allocation0 [shape = 'u32[]', space=smem, size = 0x4, offset = 0x4, fixed_abs, tag = 'smem constant byte address 0x4 - core index']
  #allocation1 [shape = 'u32[144,128]{1,0:T(1,128)}', space=vmem, size = 0x12000, scoped, tag = 'internal scratch']
  %s0 = inlined_call_operand.hbm [shape: f32[2,16,128], index: 0, kind: input, shape index: {}]
  %s1 = inlined_call_operand.hbm [shape: bf16[128,384], index: 1, kind: input, shape index: {}]
  %s2 = inlined_call_operand.hbm [shape: f32[1,384], index: 2, kind: input, shape index: {}]
  %s3 = inlined_call_operand.hbm [shape: bf16[4,32,128], index: 3, kind: input, shape index: {}]
  %s4 = inlined_call_operand.hbm [shape: f32[1,128], index: 4, kind: input, shape index: {}]
  %s5 = inlined_call_operand.hbm [shape: f32[1,128], index: 5, kind: input, shape index: {}]
  %s6 = inlined_call_operand.hbm [shape: f32[1,128], index: 6, kind: input, shape index: {}]
  %s7 = inlined_call_operand.hbm [shape: bf16[128,512], index: 7, kind: input, shape index: {}]
  %s8 = inlined_call_operand.hbm [shape: f32[1,512], index: 8, kind: input, shape index: {}]
  %s9 = inlined_call_operand.hbm [shape: bf16[512,128], index: 9, kind: input, shape index: {}]
  %s10 = inlined_call_operand.hbm [shape: f32[1,128], index: 10, kind: input, shape index: {}]
  %s11 = inlined_call_operand.hbm [shape: f32[1,128], index: 11, kind: input, shape index: {}]
  %s12 = inlined_call_operand.hbm [shape: f32[1,128], index: 12, kind: input, shape index: {}]
  %s13 = inlined_call_operand.hbm [shape: f32[2,16,128], index: 13, kind: output, shape index: {}]
  %s14 = sld [smem:[#allocation0]]
  $region137: #{forward.9} parent=0
    _
  %s16 = ssub.s32 1, %s14
  %s17 = scalar_select 0, %s16, %s14
  $region1: #{forward.9} parent=0
    #allocation2 [shape = 'u8[16384]{0}', space=vmem, size = 0x4000, scoped, tag = 'input window, operand 0']
    #allocation3 [shape = 's32[2]{0}', space=sflag, size = 0x8, scoped, tag = 'scoped memory for forward.9']
    #allocation4 [shape = 's32[2]{0}', space=sflag, size = 0x8, scoped, tag = 'scoped memory for forward.9']
    #allocation5 [shape = 'u8[98304]{0}', space=vmem, size = 0x18000, scoped, tag = 'input window, operand 1, single buffered']
    #allocation6 [shape = 's32[1]{0}', space=sflag, size = 0x4, scoped, tag = 'scoped memory for forward.9']
    #allocation7 [shape = 'u8[1536]{0}', space=vmem, size = 0x800, scoped, tag = 'input window, operand 2, single buffered']
    #allocation8 [shape = 'u8[32768]{0}', space=vmem, size = 0x8000, scoped, tag = 'input window, operand 3, single buffered']
    #allocation9 [shape = 's32[1]{0}', space=sflag, size = 0x4, scoped, tag = 'scoped memory for forward.9']
    #allocation10 [shape = 'u8[512]{0}', space=vmem, size = 0x400, scoped, tag = 'input window, operand 4, single buffered']
    #allocation11 [shape = 'u8[512]{0}', space=vmem, size = 0x400, scoped, tag = 'input window, operand 5, single buffered']
    #allocation12 [shape = 's32[1]{0}', space=sflag, size = 0x4, scoped, tag = 'scoped memory for forward.9']
    #allocation13 [shape = 'u8[512]{0}', space=vmem, size = 0x400, scoped, tag = 'input window, operand 6, single buffered']
    #allocation14 [shape = 'u8[131072]{0}', space=vmem, size = 0x20000, scoped, tag = 'input window, operand 7, single buffered']
    #allocation15 [shape = 's32[1]{0}', space=sflag, size = 0x4, scoped, tag = 'scoped memory for forward.9']
    #allocation16 [shape = 'u8[2048]{0}', space=vmem, size = 0x800, scoped, tag = 'input window, operand 8, single buffered']
    #allocation17 [shape = 'u8[131072]{0}', space=vmem, size = 0x20000, scoped, tag = 'input window, operand 9, single buffered']
    #allocation18 [shape = 's32[1]{0}', space=sflag, size = 0x4, scoped, tag = 'scoped memory for forward.9']
    #allocation19 [shape = 'u8[512]{0}', space=vmem, size = 0x400, scoped, tag = 'input window, operand 10, single buffered']
    #allocation20 [shape = 'u8[512]{0}', space=vmem, size = 0x400, scoped, tag = 'input window, operand 11, single buffered']
    #allocation21 [shape = 's32[1]{0}', space=sflag, size = 0x4, scoped, tag = 'scoped memory for forward.9']
    #allocation22 [shape = 'u8[512]{0}', space=vmem, size = 0x400, scoped, tag = 'input window, operand 12, single buffered']
    #allocation23 [shape = 'u8[16384]{0}', space=vmem, size = 0x4000, scoped, tag = 'output window, operand 0']
    %18 = vsyncpa [#allocation3], 0
    %s19 = scalar_lea.sflag [#allocation3], 1
    %20 = vsyncpa %s19, 0
    %21 = vsyncpa [#allocation6], 0
    %22 = vsyncpa [#allocation9], 0
    %23 = vsyncpa [#allocation12], 0
    %24 = vsyncpa [#allocation15], 0
    %25 = vsyncpa [#allocation18], 0
    %26 = vsyncpa [#allocation21], 0
    %27 = vsyncpa [#allocation4], 0
    %s28 = scalar_lea.sflag [#allocation4], 1
    %29 = vsyncpa %s28, 0
    loop: start=0, step=1, limit=4
    $region2: #{forward.9} parent=1 // loop_pre_header
      _
    $region3: #{forward.9} parent=1 // loop_header
      %s31 = sphi 0, %s35
      %p32 = scmp.ge.s32.totalorder %s31, 4
      %s41 = sphi 0, %s43
      %s44 = sphi 0, %s41
      %s45 = sphi 0, %s44
      %s61 = sphi 0, %s45
      %s65 = sphi 0, %s65
      %s67 = sphi 0, %s65
      %s68 = sphi 0, %s67
      %s82 = sphi 0, %s68
      %s86 = sphi 0, %s86
      %s88 = sphi 0, %s86
      %s89 = sphi 0, %s88
      %s103 = sphi 0, %s89
      %s107 = sphi 0, %s107
      %s109 = sphi 0, %s107
      %s110 = sphi 0, %s109
      %s124 = sphi 0, %s110
      %s128 = sphi 0, %s128
      %s130 = sphi 0, %s128
      %s131 = sphi 0, %s130
      %s145 = sphi 0, %s131
      %s149 = sphi 0, %s149
      %s151 = sphi 0, %s149
      %s152 = sphi 0, %s151
      %s166 = sphi 0, %s152
      %s170 = sphi 0, %s170
      %s172 = sphi 0, %s170
      %s173 = sphi 0, %s172
      %s187 = sphi 0, %s173
      %s191 = sphi 0, %s191
      %s193 = sphi 0, %s191
      %s194 = sphi 0, %s193
      %s208 = sphi 0, %s194
      %s212 = sphi 0, %s212
      %s214 = sphi 0, %s212
      %s215 = sphi 0, %s214
      %s229 = sphi 0, %s215
      %s233 = sphi 0, %s233
      %s235 = sphi 0, %s233
      %s236 = sphi 0, %s235
      %s250 = sphi 0, %s236
      %s254 = sphi 0, %s254
      %s256 = sphi 0, %s254
      %s257 = sphi 0, %s256
      %s271 = sphi 0, %s257
      %s275 = sphi 0, %s275
      %s277 = sphi 0, %s275
      %s278 = sphi 0, %s277
      %s292 = sphi 0, %s278
      %s296 = sphi 0, %s296
      %s298 = sphi 0, %s296
      %s299 = sphi 0, %s298
      %s313 = sphi 0, %s299
      %s319 = sphi 0, %s321
      %s322 = sphi 0, %s319
      %s323 = sphi 0, %s322
      %s339 = sphi 0, %s323
    $region4: #{forward.9} parent=1 // loop_header_branch
      %34 = sbr.rel (%p32) target = $region8
    $region5: #{forward.9} parent=1 // loop_body
      %s36 = ssub.s32 %s31, 1
      %s37 = ssub.s32 %s31, 2
      %s38 = sadd.s32 %s31, 1
      %s39 = ssub.s32 %s31, %s38
      %p40 = scmp.eq.s32.totalorder %s39, 0
      %s42 = sadd.s32 %s41, 1
      %s43 = scalar_select %p40, %s41, %s42
      %p46 = pneg %p40
      %p47 = scmp.eq.s32.totalorder %s31, 1
      %p48 = por %p46, %p47
      %p49 = scmp.ne.s32.totalorder %s41, %s44
      %p50 = scmp.eq.s32.totalorder %s31, 0
      %p51 = por %p49, %p50
      %p52 = scmp.ne.s32.totalorder %s41, %s44
      %p53 = scmp.eq.s32.totalorder %s36, 1
      %p54 = por %p52, %p53
      %p55 = scmp.ne.s32.totalorder %s44, %s45
      %p56 = scmp.eq.s32.totalorder %s36, 0
      %p57 = por %p55, %p56
      %p58 = scmp.ne.s32.totalorder %s44, %s45
      %p59 = scmp.eq.s32.totalorder %s37, 1
      %p60 = por %p58, %p59
      %p62 = scmp.ne.s32.totalorder %s45, %s61
      %p63 = scmp.eq.s32.totalorder %s37, 0
      %p64 = por %p62, %p63
      %s66 = sadd.s32 %s65, 1
      %p69 = scmp.eq.s32.totalorder %s31, 1
      %p70 = scmp.ne.s32.totalorder %s65, %s67
      %p71 = scmp.eq.s32.totalorder %s31, 0
      %p72 = por %p70, %p71
      %p73 = scmp.ne.s32.totalorder %s65, %s67
      %p74 = scmp.eq.s32.totalorder %s36, 1
      %p75 = por %p73, %p74
      %p76 = scmp.ne.s32.totalorder %s67, %s68
      %p77 = scmp.eq.s32.totalorder %s36, 0
      %p78 = por %p76, %p77
      %p79 = scmp.ne.s32.totalorder %s67, %s68
      %p80 = scmp.eq.s32.totalorder %s37, 1
      %p81 = por %p79, %p80
      %p83 = scmp.ne.s32.totalorder %s68, %s82
      %p84 = scmp.eq.s32.totalorder %s37, 0
      %p85 = por %p83, %p84
      %s87 = sadd.s32 %s86, 1
      %p90 = scmp.eq.s32.totalorder %s31, 1
      %p91 = scmp.ne.s32.totalorder %s86, %s88
      %p92 = scmp.eq.s32.totalorder %s31, 0
      %p93 = por %p91, %p92
      %p94 = scmp.ne.s32.totalorder %s86, %s88
      %p95 = scmp.eq.s32.totalorder %s36, 1
      %p96 = por %p94, %p95
      %p97 = scmp.ne.s32.totalorder %s88, %s89
      %p98 = scmp.eq.s32.totalorder %s36, 0
      %p99 = por %p97, %p98
      %p100 = scmp.ne.s32.totalorder %s88, %s89
      %p101 = scmp.eq.s32.totalorder %s37, 1
      %p102 = por %p100, %p101
      %p104 = scmp.ne.s32.totalorder %s89, %s103
      %p105 = scmp.eq.s32.totalorder %s37, 0
      %p106 = por %p104, %p105
      %s108 = sadd.s32 %s107, 1
      %p111 = scmp.eq.s32.totalorder %s31, 1
      %p112 = scmp.ne.s32.totalorder %s107, %s109
      %p113 = scmp.eq.s32.totalorder %s31, 0
      %p114 = por %p112, %p113
      %p115 = scmp.ne.s32.totalorder %s107, %s109
      %p116 = scmp.eq.s32.totalorder %s36, 1
      %p117 = por %p115, %p116
      %p118 = scmp.ne.s32.totalorder %s109, %s110
      %p119 = scmp.eq.s32.totalorder %s36, 0
      %p120 = por %p118, %p119
      %p121 = scmp.ne.s32.totalorder %s109, %s110
      %p122 = scmp.eq.s32.totalorder %s37, 1
      %p123 = por %p121, %p122
      %p125 = scmp.ne.s32.totalorder %s110, %s124
      %p126 = scmp.eq.s32.totalorder %s37, 0
      %p127 = por %p125, %p126
      %s129 = sadd.s32 %s128, 1
      %p132 = scmp.eq.s32.totalorder %s31, 1
      %p133 = scmp.ne.s32.totalorder %s128, %s130
      %p134 = scmp.eq.s32.totalorder %s31, 0
      %p135 = por %p133, %p134
      %p136 = scmp.ne.s32.totalorder %s128, %s130
      %p137 = scmp.eq.s32.totalorder %s36, 1
      %p138 = por %p136, %p137
      %p139 = scmp.ne.s32.totalorder %s130, %s131
      %p140 = scmp.eq.s32.totalorder %s36, 0
      %p141 = por %p139, %p140
      %p142 = scmp.ne.s32.totalorder %s130, %s131
      %p143 = scmp.eq.s32.totalorder %s37, 1
      %p144 = por %p142, %p143
      %p146 = scmp.ne.s32.totalorder %s131, %s145
      %p147 = scmp.eq.s32.totalorder %s37, 0
      %p148 = por %p146, %p147
      %s150 = sadd.s32 %s149, 1
      %p153 = scmp.eq.s32.totalorder %s31, 1
      %p154 = scmp.ne.s32.totalorder %s149, %s151
      %p155 = scmp.eq.s32.totalorder %s31, 0
      %p156 = por %p154, %p155
      %p157 = scmp.ne.s32.totalorder %s149, %s151
      %p158 = scmp.eq.s32.totalorder %s36, 1
      %p159 = por %p157, %p158
      %p160 = scmp.ne.s32.totalorder %s151, %s152
      %p161 = scmp.eq.s32.totalorder %s36, 0
      %p162 = por %p160, %p161
      %p163 = scmp.ne.s32.totalorder %s151, %s152
      %p164 = scmp.eq.s32.totalorder %s37, 1
      %p165 = por %p163, %p164
      %p167 = scmp.ne.s32.totalorder %s152, %s166
      %p168 = scmp.eq.s32.totalorder %s37, 0
      %p169 = por %p167, %p168
      %s171 = sadd.s32 %s170, 1
      %p174 = scmp.eq.s32.totalorder %s31, 1
      %p175 = scmp.ne.s32.totalorder %s170, %s172
      %p176 = scmp.eq.s32.totalorder %s31, 0
      %p177 = por %p175, %p176
      %p178 = scmp.ne.s32.totalorder %s170, %s172
      %p179 = scmp.eq.s32.totalorder %s36, 1
      %p180 = por %p178, %p179
      %p181 = scmp.ne.s32.totalorder %s172, %s173
      %p182 = scmp.eq.s32.totalorder %s36, 0
      %p183 = por %p181, %p182
      %p184 = scmp.ne.s32.totalorder %s172, %s173
      %p185 = scmp.eq.s32.totalorder %s37, 1
      %p186 = por %p184, %p185
      %p188 = scmp.ne.s32.totalorder %s173, %s187
      %p189 = scmp.eq.s32.totalorder %s37, 0
      %p190 = por %p188, %p189
      %s192 = sadd.s32 %s191, 1
      %p195 = scmp.eq.s32.totalorder %s31, 1
      %p196 = scmp.ne.s32.totalorder %s191, %s193
      %p197 = scmp.eq.s32.totalorder %s31, 0
      %p198 = por %p196, %p197
      %p199 = scmp.ne.s32.totalorder %s191, %s193
      %p200 = scmp.eq.s32.totalorder %s36, 1
      %p201 = por %p199, %p200
      %p202 = scmp.ne.s32.totalorder %s193, %s194
      %p203 = scmp.eq.s32.totalorder %s36, 0
      %p204 = por %p202, %p203
      %p205 = scmp.ne.s32.totalorder %s193, %s194
      %p206 = scmp.eq.s32.totalorder %s37, 1
      %p207 = por %p205, %p206
      %p209 = scmp.ne.s32.totalorder %s194, %s208
      %p210 = scmp.eq.s32.totalorder %s37, 0
      %p211 = por %p209, %p210
      %s213 = sadd.s32 %s212, 1
      %p216 = scmp.eq.s32.totalorder %s31, 1
      %p217 = scmp.ne.s32.totalorder %s212, %s214
      %p218 = scmp.eq.s32.totalorder %s31, 0
      %p219 = por %p217, %p218
      %p220 = scmp.ne.s32.totalorder %s212, %s214
      %p221 = scmp.eq.s32.totalorder %s36, 1
      %p222 = por %p220, %p221
      %p223 = scmp.ne.s32.totalorder %s214, %s215
      %p224 = scmp.eq.s32.totalorder %s36, 0
      %p225 = por %p223, %p224
      %p226 = scmp.ne.s32.totalorder %s214, %s215
      %p227 = scmp.eq.s32.totalorder %s37, 1
      %p228 = por %p226, %p227
      %p230 = scmp.ne.s32.totalorder %s215, %s229
      %p231 = scmp.eq.s32.totalorder %s37, 0
      %p232 = por %p230, %p231
      %s234 = sadd.s32 %s233, 1
      %p237 = scmp.eq.s32.totalorder %s31, 1
      %p238 = scmp.ne.s32.totalorder %s233, %s235
      %p239 = scmp.eq.s32.totalorder %s31, 0
      %p240 = por %p238, %p239
      %p241 = scmp.ne.s32.totalorder %s233, %s235
      %p242 = scmp.eq.s32.totalorder %s36, 1
      %p243 = por %p241, %p242
      %p244 = scmp.ne.s32.totalorder %s235, %s236
      %p245 = scmp.eq.s32.totalorder %s36, 0
      %p246 = por %p244, %p245
      %p247 = scmp.ne.s32.totalorder %s235, %s236
      %p248 = scmp.eq.s32.totalorder %s37, 1
      %p249 = por %p247, %p248
      %p251 = scmp.ne.s32.totalorder %s236, %s250
      %p252 = scmp.eq.s32.totalorder %s37, 0
      %p253 = por %p251, %p252
      %s255 = sadd.s32 %s254, 1
      %p258 = scmp.eq.s32.totalorder %s31, 1
      %p259 = scmp.ne.s32.totalorder %s254, %s256
      %p260 = scmp.eq.s32.totalorder %s31, 0
      %p261 = por %p259, %p260
      %p262 = scmp.ne.s32.totalorder %s254, %s256
      %p263 = scmp.eq.s32.totalorder %s36, 1
      %p264 = por %p262, %p263
      %p265 = scmp.ne.s32.totalorder %s256, %s257
      %p266 = scmp.eq.s32.totalorder %s36, 0
      %p267 = por %p265, %p266
      %p268 = scmp.ne.s32.totalorder %s256, %s257
      %p269 = scmp.eq.s32.totalorder %s37, 1
      %p270 = por %p268, %p269
      %p272 = scmp.ne.s32.totalorder %s257, %s271
      %p273 = scmp.eq.s32.totalorder %s37, 0
      %p274 = por %p272, %p273
      %s276 = sadd.s32 %s275, 1
      %p279 = scmp.eq.s32.totalorder %s31, 1
      %p280 = scmp.ne.s32.totalorder %s275, %s277
      %p281 = scmp.eq.s32.totalorder %s31, 0
      %p282 = por %p280, %p281
      %p283 = scmp.ne.s32.totalorder %s275, %s277
      %p284 = scmp.eq.s32.totalorder %s36, 1
      %p285 = por %p283, %p284
      %p286 = scmp.ne.s32.totalorder %s277, %s278
      %p287 = scmp.eq.s32.totalorder %s36, 0
      %p288 = por %p286, %p287
      %p289 = scmp.ne.s32.totalorder %s277, %s278
      %p290 = scmp.eq.s32.totalorder %s37, 1
      %p291 = por %p289, %p290
      %p293 = scmp.ne.s32.totalorder %s278, %s292
      %p294 = scmp.eq.s32.totalorder %s37, 0
      %p295 = por %p293, %p294
      %s297 = sadd.s32 %s296, 1
      %p300 = scmp.eq.s32.totalorder %s31, 1
      %p301 = scmp.ne.s32.totalorder %s296, %s298
      %p302 = scmp.eq.s32.totalorder %s31, 0
      %p303 = por %p301, %p302
      %p304 = scmp.ne.s32.totalorder %s296, %s298
      %p305 = scmp.eq.s32.totalorder %s36, 1
      %p306 = por %p304, %p305
      %p307 = scmp.ne.s32.totalorder %s298, %s299
      %p308 = scmp.eq.s32.totalorder %s36, 0
      %p309 = por %p307, %p308
      %p310 = scmp.ne.s32.totalorder %s298, %s299
      %p311 = scmp.eq.s32.totalorder %s37, 1
      %p312 = por %p310, %p311
      %p314 = scmp.ne.s32.totalorder %s299, %s313
      %p315 = scmp.eq.s32.totalorder %s37, 0
      %p316 = por %p314, %p315
      %s317 = ssub.s32 %s31, %s38
      %p318 = scmp.eq.s32.totalorder %s317, 0
      %s320 = sadd.s32 %s319, 1
      %s321 = scalar_select %p318, %s319, %s320
      %p324 = pneg %p318
      %p325 = scmp.eq.s32.totalorder %s31, 1
      %p326 = por %p324, %p325
      %p327 = scmp.ne.s32.totalorder %s319, %s322
      %p328 = scmp.eq.s32.totalorder %s31, 0
      %p329 = por %p327, %p328
      %p330 = scmp.ne.s32.totalorder %s319, %s322
      %p331 = scmp.eq.s32.totalorder %s36, 1
      %p332 = por %p330, %p331
      %p333 = scmp.ne.s32.totalorder %s322, %s323
      %p334 = scmp.eq.s32.totalorder %s36, 0
      %p335 = por %p333, %p334
      %p336 = scmp.ne.s32.totalorder %s322, %s323
      %p337 = scmp.eq.s32.totalorder %s37, 1
      %p338 = por %p336, %p337
      %p340 = scmp.ne.s32.totalorder %s323, %s339
      %p341 = scmp.eq.s32.totalorder %s37, 0
      %p342 = por %p340, %p341
      %p343 = scmp.le.s32.totalorder 1, %s31
      %p344 = scmp.lt.s32.totalorder %s31, 3
      %p345 = pnand %p343, %p344
      %p346 = pneg %p345
      // Predicated region
      $region9: #{forward.9} parent=5 // pred_check
        _
      $region10: #{forward.9} parent=5 // pred_check_branch
        %348 = sbr.rel (%p345) target = $region12
      $region11: #{forward.9} parent=5 // pred_region
        %s349 = ssub.s32 %s31, 1
        // Predicated region
        $region13: #{forward.9} parent=11 // pred_check
          %p350 = pneg %p78
        $region14: #{forward.9} parent=11 // pred_check_branch
          %352 = sbr.rel (%p350) target = $region16
        $region15: #{forward.9} parent=11 // pred_region
          %s354 = ssub.s32 3072, 3072
          %355 = vsyncadd [#allocation6], %s354
          %s356 = sshll.u32 [#allocation5], 4
          %s357 = int_to_ptr.vmem [resolvable:$true] %s356
          %362 = dma.hbm_to_vmem [thread:$0]  %s1, 3072, %s357, [#allocation6], 192, 192, 12
        $region16: #{forward.9} parent=11 // pred_fallthru
          _
        // Predicated region
        $region17: #{forward.9} parent=11 // pred_check
          %p363 = pneg %p99
        $region18: #{forward.9} parent=11 // pred_check_branch
          %365 = sbr.rel (%p363) target = $region20
        $region19: #{forward.9} parent=11 // pred_region
          %s367 = ssub.s32 48, 48
          %368 = vsyncadd [#allocation6], %s367
          %s370 = sshll.u32 [#allocation7], 4
          %s371 = int_to_ptr.vmem [resolvable:$true] %s370
          %373 = dma.hbm_to_vmem [thread:$0]  %s2, 48, %s371, [#allocation6]
        $region20: #{forward.9} parent=11 // pred_fallthru
          _
        // Predicated region
        $region21: #{forward.9} parent=11 // pred_check
          %p374 = pneg %p120
        $region22: #{forward.9} parent=11 // pred_check_branch
          %376 = sbr.rel (%p374) target = $region24
        $region23: #{forward.9} parent=11 // pred_region
          %s378 = ssub.s32 1024, 1024
          %379 = vsyncadd [#allocation9], %s378
          %s380 = sshll.u32 [#allocation8], 4
          %s381 = int_to_ptr.vmem [resolvable:$true] %s380
          %386 = dma.hbm_to_vmem [thread:$0]  %s3, 1024, %s381, [#allocation9], 64, 64, 4
        $region24: #{forward.9} parent=11 // pred_fallthru
          _
        // Predicated region
        $region25: #{forward.9} parent=11 // pred_check
          %p387 = pneg %p141
        $region26: #{forward.9} parent=11 // pred_check_branch
          %389 = sbr.rel (%p387) target = $region28
        $region27: #{forward.9} parent=11 // pred_region
          %s391 = ssub.s32 16, 16
          %392 = vsyncadd [#allocation9], %s391
          %s394 = sshll.u32 [#allocation10], 4
          %s395 = int_to_ptr.vmem [resolvable:$true] %s394
          %397 = dma.hbm_to_vmem [thread:$0]  %s4, 16, %s395, [#allocation9]
        $region28: #{forward.9} parent=11 // pred_fallthru
          _
        // Predicated region
        $region29: #{forward.9} parent=11 // pred_check
          %p398 = pneg %p162
        $region30: #{forward.9} parent=11 // pred_check_branch
          %400 = sbr.rel (%p398) target = $region32
        $region31: #{forward.9} parent=11 // pred_region
          %s402 = ssub.s32 16, 16
          %403 = vsyncadd [#allocation12], %s402
          %s405 = sshll.u32 [#allocation11], 4
          %s406 = int_to_ptr.vmem [resolvable:$true] %s405
          %408 = dma.hbm_to_vmem [thread:$0]  %s5, 16, %s406, [#allocation12]
        $region32: #{forward.9} parent=11 // pred_fallthru
          _
        // Predicated region
        $region33: #{forward.9} parent=11 // pred_check
          %p409 = pneg %p183
        $region34: #{forward.9} parent=11 // pred_check_branch
          %411 = sbr.rel (%p409) target = $region36
        $region35: #{forward.9} parent=11 // pred_region
          %s413 = ssub.s32 16, 16
          %414 = vsyncadd [#allocation12], %s413
          %s416 = sshll.u32 [#allocation13], 4
          %s417 = int_to_ptr.vmem [resolvable:$true] %s416
          %419 = dma.hbm_to_vmem [thread:$0]  %s6, 16, %s417, [#allocation12]
        $region36: #{forward.9} parent=11 // pred_fallthru
          _
        // Predicated region
        $region37: #{forward.9} parent=11 // pred_check
          %p420 = pneg %p204
        $region38: #{forward.9} parent=11 // pred_check_branch
          %422 = sbr.rel (%p420) target = $region40
        $region39: #{forward.9} parent=11 // pred_region
          %s424 = ssub.s32 4096, 4096
          %425 = vsyncadd [#allocation15], %s424
          %s426 = sshll.u32 [#allocation14], 4
          %s427 = int_to_ptr.vmem [resolvable:$true] %s426
          %432 = dma.hbm_to_vmem [thread:$0]  %s7, 4096, %s427, [#allocation15], 256, 256, 16
        $region40: #{forward.9} parent=11 // pred_fallthru
          _
        // Predicated region
        $region41: #{forward.9} parent=11 // pred_check
          %p433 = pneg %p225
        $region42: #{forward.9} parent=11 // pred_check_branch
          %435 = sbr.rel (%p433) target = $region44
        $region43: #{forward.9} parent=11 // pred_region
          %s437 = ssub.s32 64, 64
          %438 = vsyncadd [#allocation15], %s437
          %s440 = sshll.u32 [#allocation16], 4
          %s441 = int_to_ptr.vmem [resolvable:$true] %s440
          %443 = dma.hbm_to_vmem [thread:$0]  %s8, 64, %s441, [#allocation15]
        $region44: #{forward.9} parent=11 // pred_fallthru
          _
        // Predicated region
        $region45: #{forward.9} parent=11 // pred_check
          %p444 = pneg %p246
        $region46: #{forward.9} parent=11 // pred_check_branch
          %446 = sbr.rel (%p444) target = $region48
        $region47: #{forward.9} parent=11 // pred_region
          %s448 = ssub.s32 4096, 4096
          %449 = vsyncadd [#allocation18], %s448
          %s450 = sshll.u32 [#allocation17], 4
          %s451 = int_to_ptr.vmem [resolvable:$true] %s450
          %456 = dma.hbm_to_vmem [thread:$0]  %s9, 4096, %s451, [#allocation18], 64, 64, 4
        $region48: #{forward.9} parent=11 // pred_fallthru
          _
        // Predicated region
        $region49: #{forward.9} parent=11 // pred_check
          %p457 = pneg %p267
        $region50: #{forward.9} parent=11 // pred_check_branch
          %459 = sbr.rel (%p457) target = $region52
        $region51: #{forward.9} parent=11 // pred_region
          %s461 = ssub.s32 16, 16
          %462 = vsyncadd [#allocation18], %s461
          %s464 = sshll.u32 [#allocation19], 4
          %s465 = int_to_ptr.vmem [resolvable:$true] %s464
          %467 = dma.hbm_to_vmem [thread:$0]  %s10, 16, %s465, [#allocation18]
        $region52: #{forward.9} parent=11 // pred_fallthru
          _
        // Predicated region
        $region53: #{forward.9} parent=11 // pred_check
          %p468 = pneg %p288
        $region54: #{forward.9} parent=11 // pred_check_branch
          %470 = sbr.rel (%p468) target = $region56
        $region55: #{forward.9} parent=11 // pred_region
          %s472 = ssub.s32 16, 16
          %473 = vsyncadd [#allocation21], %s472
          %s475 = sshll.u32 [#allocation20], 4
          %s476 = int_to_ptr.vmem [resolvable:$true] %s475
          %478 = dma.hbm_to_vmem [thread:$0]  %s11, 16, %s476, [#allocation21]
        $region56: #{forward.9} parent=11 // pred_fallthru
          _
        // Predicated region
        $region57: #{forward.9} parent=11 // pred_check
          %p479 = pneg %p309
        $region58: #{forward.9} parent=11 // pred_check_branch
          %481 = sbr.rel (%p479) target = $region60
        $region59: #{forward.9} parent=11 // pred_region
          %s483 = ssub.s32 16, 16
          %484 = vsyncadd [#allocation21], %s483
          %s486 = sshll.u32 [#allocation22], 4
          %s487 = int_to_ptr.vmem [resolvable:$true] %s486
          %489 = dma.hbm_to_vmem [thread:$0]  %s12, 16, %s487, [#allocation21]
        $region60: #{forward.9} parent=11 // pred_fallthru
          _
      $region12: #{forward.9} parent=5 // pred_fallthru
        _
      %p490 = scmp.lt.s32.totalorder %s31, 2
      // Predicated region
      $region61: #{forward.9} parent=5 // pred_check
        %p491 = pneg %p490
      $region62: #{forward.9} parent=5 // pred_check_branch
        %493 = sbr.rel (%p491) target = $region64
      $region63: #{forward.9} parent=5 // pred_region
        // Predicated region
        $region65: #{forward.9} parent=63 // pred_check
          %p494 = pneg %p51
        $region66: #{forward.9} parent=63 // pred_check_branch
          %496 = sbr.rel (%p494) target = $region68
        $region67: #{forward.9} parent=63 // pred_region
          %s497 = sand.u32 %s41, 1
          %s498 = scalar_lea.sflag [#allocation3], %s497
          %s499 = sand.u32 %s41, 1
          %s500 = smul.addr %s499, 16
          %s501 = scalar_lea.vmem [#allocation2], %s500
          %s503 = ssub.s32 256, 256
          %504 = vsyncadd %s498, %s503
          %s505 = smul.addr %s31, 2
          %s506 = smul.addr %s505, 128
          %s507 = scalar_lea.hbm %s0, %s506
          %s508 = sshll.u32 %s501, 4
          %s509 = int_to_ptr.vmem [resolvable:$true] %s508
          %514 = dma.hbm_to_vmem [thread:$0]  %s507, 256, %s509, %s498, 128, 128, 8
        $region68: #{forward.9} parent=63 // pred_fallthru
          _
      $region64: #{forward.9} parent=5 // pred_fallthru
        _
      %p515 = scmp.le.s32.totalorder 1, %s31
      %p516 = scmp.lt.s32.totalorder %s31, 3
      %p517 = pnand %p515, %p516
      %p518 = pneg %p517
      // Predicated region
      $region69: #{forward.9} parent=5 // pred_check
        _
      $region70: #{forward.9} parent=5 // pred_check_branch
        %520 = sbr.rel (%p517) target = $region72
      $region71: #{forward.9} parent=5 // pred_region
        %s521 = ssub.s32 %s31, 1
        %s522 = sand.u32 %s44, 1
        %s523 = scalar_lea.sflag [#allocation3], %s522
        %s524 = sand.u32 %s44, 1
        %s525 = smul.addr %s524, 16
        %s526 = scalar_lea.vmem [#allocation2], %s525
        // Predicated region
        $region73: #{forward.9} parent=71 // pred_check
          %p527 = pneg %p57
        $region74: #{forward.9} parent=71 // pred_check_branch
          %529 = sbr.rel (%p527) target = $region76
        $region75: #{forward.9} parent=71 // pred_region
          %530 = dma.done %s523, 256
        $region76: #{forward.9} parent=71 // pred_fallthru
          _
        // Predicated region
        $region77: #{forward.9} parent=71 // pred_check
          %p531 = pneg %p78
        $region78: #{forward.9} parent=71 // pred_check_branch
          %533 = sbr.rel (%p531) target = $region80
        $region79: #{forward.9} parent=71 // pred_region
          %534 = dma.done [#allocation6], 3072
        $region80: #{forward.9} parent=71 // pred_fallthru
          _
        // Predicated region
        $region81: #{forward.9} parent=71 // pred_check
          %p535 = pneg %p99
        $region82: #{forward.9} parent=71 // pred_check_branch
          %537 = sbr.rel (%p535) target = $region84
        $region83: #{forward.9} parent=71 // pred_region
          %538 = dma.done [#allocation6], 48
        $region84: #{forward.9} parent=71 // pred_fallthru
          _
        // Predicated region
        $region85: #{forward.9} parent=71 // pred_check
          %p539 = pneg %p120
        $region86: #{forward.9} parent=71 // pred_check_branch
          %541 = sbr.rel (%p539) target = $region88
        $region87: #{forward.9} parent=71 // pred_region
          %542 = dma.done [#allocation9], 1024
        $region88: #{forward.9} parent=71 // pred_fallthru
          _
        // Predicated region
        $region89: #{forward.9} parent=71 // pred_check
          %p543 = pneg %p141
        $region90: #{forward.9} parent=71 // pred_check_branch
          %545 = sbr.rel (%p543) target = $region92
        $region91: #{forward.9} parent=71 // pred_region
          %546 = dma.done [#allocation9], 16
        $region92: #{forward.9} parent=71 // pred_fallthru
          _
        // Predicated region
        $region93: #{forward.9} parent=71 // pred_check
          %p547 = pneg %p162
        $region94: #{forward.9} parent=71 // pred_check_branch
          %549 = sbr.rel (%p547) target = $region96
        $region95: #{forward.9} parent=71 // pred_region
          %550 = dma.done [#allocation12], 16
        $region96: #{forward.9} parent=71 // pred_fallthru
          _
        // Predicated region
        $region97: #{forward.9} parent=71 // pred_check
          %p551 = pneg %p183
        $region98: #{forward.9} parent=71 // pred_check_branch
          %553 = sbr.rel (%p551) target = $region100
        $region99: #{forward.9} parent=71 // pred_region
          %554 = dma.done [#allocation12], 16
        $region100: #{forward.9} parent=71 // pred_fallthru
          _
        // Predicated region
        $region101: #{forward.9} parent=71 // pred_check
          %p555 = pneg %p204
        $region102: #{forward.9} parent=71 // pred_check_branch
          %557 = sbr.rel (%p555) target = $region104
        $region103: #{forward.9} parent=71 // pred_region
          %558 = dma.done [#allocation15], 4096
        $region104: #{forward.9} parent=71 // pred_fallthru
          _
        // Predicated region
        $region105: #{forward.9} parent=71 // pred_check
          %p559 = pneg %p225
        $region106: #{forward.9} parent=71 // pred_check_branch
          %561 = sbr.rel (%p559) target = $region108
        $region107: #{forward.9} parent=71 // pred_region
          %562 = dma.done [#allocation15], 64
        $region108: #{forward.9} parent=71 // pred_fallthru
          _
        // Predicated region
        $region109: #{forward.9} parent=71 // pred_check
          %p563 = pneg %p246
        $region110: #{forward.9} parent=71 // pred_check_branch
          %565 = sbr.rel (%p563) target = $region112
        $region111: #{forward.9} parent=71 // pred_region
          %566 = dma.done [#allocation18], 4096
        $region112: #{forward.9} parent=71 // pred_fallthru
          _
        // Predicated region
        $region113: #{forward.9} parent=71 // pred_check
          %p567 = pneg %p267
        $region114: #{forward.9} parent=71 // pred_check_branch
          %569 = sbr.rel (%p567) target = $region116
        $region115: #{forward.9} parent=71 // pred_region
          %570 = dma.done [#allocation18], 16
        $region116: #{forward.9} parent=71 // pred_fallthru
          _
        // Predicated region
        $region117: #{forward.9} parent=71 // pred_check
          %p571 = pneg %p288
        $region118: #{forward.9} parent=71 // pred_check_branch
          %573 = sbr.rel (%p571) target = $region120
        $region119: #{forward.9} parent=71 // pred_region
          %574 = dma.done [#allocation21], 16
        $region120: #{forward.9} parent=71 // pred_fallthru
          _
        // Predicated region
        $region121: #{forward.9} parent=71 // pred_check
          %p575 = pneg %p309
        $region122: #{forward.9} parent=71 // pred_check_branch
          %577 = sbr.rel (%p575) target = $region124
        $region123: #{forward.9} parent=71 // pred_region
          %578 = dma.done [#allocation21], 16
        $region124: #{forward.9} parent=71 // pred_fallthru
          _
        %s579 = sand.u32 %s44, 1
        %s580 = scalar_lea.sflag [#allocation3], %s579
        %s581 = sand.u32 %s44, 1
        %s582 = smul.addr %s581, 16
        %s583 = scalar_lea.vmem [#allocation2], %s582
        %p584 = pneg %p57
        %p585 = pneg %p54
        %p586 = pneg %p78
        %p587 = pneg %p75
        %p588 = pneg %p99
        %p589 = pneg %p96
        %p590 = pneg %p120
        %p591 = pneg %p117
        %p592 = pneg %p141
        %p593 = pneg %p138
        %p594 = pneg %p162
        %p595 = pneg %p159
        %p596 = pneg %p183
        %p597 = pneg %p180
        %p598 = pneg %p204
        %p599 = pneg %p201
        %p600 = pneg %p225
        %p601 = pneg %p222
        %p602 = pneg %p246
        %p603 = pneg %p243
        %p604 = pneg %p267
        %p605 = pneg %p264
        %p606 = pneg %p288
        %p607 = pneg %p285
        %p608 = pneg %p309
        %p609 = pneg %p306
        %p610 = pneg %p335
        %p611 = pneg %p332
        %s612 = sand.u32 %s322, 1
        %s613 = scalar_lea.sflag [#allocation4], %s612
        %s614 = sand.u32 %s322, 1
        %s615 = smul.addr %s614, 16
        %s616 = scalar_lea.vmem [#allocation23], %s615
        %v618 = vld [vmem:[%s526] sm:$0xff]
        %v619 = vld [vmem:[%s526 + $0x8] sm:$0xff]
        %v620 = vpack.c.bf16 %v619, %v618
        %v621 = vld [vmem:[#allocation5] sm:$0xff]
        %v622 = vld [vmem:[#allocation5 + $0x8] sm:$0xf]
        %v623 = vld [vmem:[#allocation5 + $0xc] sm:$0xff]
        %v624 = vld [vmem:[#allocation5 + $0x14] sm:$0xf]
        %v625 = vld [vmem:[#allocation5 + $0x18] sm:$0xff]
        %v626 = vld [vmem:[#allocation5 + $0x20] sm:$0xf]
        %v627 = vld [vmem:[#allocation5 + $0x24] sm:$0xff]
        %v628 = vld [vmem:[#allocation5 + $0x2c] sm:$0xf]
        %v629 = vld [vmem:[#allocation5 + $0x30] sm:$0xff]
        %v630 = vld [vmem:[#allocation5 + $0x38] sm:$0xf]
        %v631 = vld [vmem:[#allocation5 + $0x3c] sm:$0xff]
        %v632 = vld [vmem:[#allocation5 + $0x44] sm:$0xf]
        %v633 = vld [vmem:[#allocation5 + $0x48] sm:$0xff]
        %v634 = vld [vmem:[#allocation5 + $0x50] sm:$0xf]
        %v635 = vld [vmem:[#allocation5 + $0x54] sm:$0xff]
        %v636 = vld [vmem:[#allocation5 + $0x5c] sm:$0xf]
        %v637 = vld [vmem:[#allocation5 + $0x60] sm:$0xff]
        %v638 = vld [vmem:[#allocation5 + $0x68] sm:$0xf]
        %v639 = vld [vmem:[#allocation5 + $0x6c] sm:$0xff]
        %v640 = vld [vmem:[#allocation5 + $0x74] sm:$0xf]
        %v641 = vld [vmem:[#allocation5 + $0x78] sm:$0xff]
        %v642 = vld [vmem:[#allocation5 + $0x80] sm:$0xf]
        %v643 = vld [vmem:[#allocation5 + $0x84] sm:$0xff]
        %v644 = vld [vmem:[#allocation5 + $0x8c] sm:$0xf]
        %v645 = vld [vmem:[#allocation5 + $0x90] sm:$0xff]
        %v646 = vld [vmem:[#allocation5 + $0x98] sm:$0xf]
        %v647 = vld [vmem:[#allocation5 + $0x9c] sm:$0xff]
        %v648 = vld [vmem:[#allocation5 + $0xa4] sm:$0xf]
        %v649 = vld [vmem:[#allocation5 + $0xa8] sm:$0xff]
        %v650 = vld [vmem:[#allocation5 + $0xb0] sm:$0xf]
        %v651 = vld [vmem:[#allocation5 + $0xb4] sm:$0xff]
        %v652 = vld [vmem:[#allocation5 + $0xbc] sm:$0xf]
        %v653 = vld [vmem:[#allocation7] sm:$0x7]
        %v655 = vlaneseq
        %v656 = vshrl.u32 %v655, 7
        %v657 = vsub.s32 0, %v656
        %v658 = vrot.slane %v653, %v657
        %v659 = vlaneseq
        %v660 = vshrl.u32 %v659, 7
        %v661 = vsub.s32 1, %v660
        %v662 = vrot.slane %v653, %v661
        %v663 = vlaneseq
        %v664 = vshrl.u32 %v663, 7
        %v665 = vsub.s32 2, %v664
        %v666 = vrot.slane %v653, %v665
        %v702 = vunpack.c.l.b16 %v621
        %v703 = vunpack.c.h.b16 %v621
        %v704 = vunpack.c.l.b16 %v622
        %v705 = vunpack.c.l.b16 %v623
        %v706 = vunpack.c.h.b16 %v623
        %v707 = vunpack.c.l.b16 %v624
        %v708 = vunpack.c.l.b16 %v625
        %v709 = vunpack.c.h.b16 %v625
        %v710 = vunpack.c.l.b16 %v626
        %v711 = vunpack.c.l.b16 %v627
        %v712 = vunpack.c.h.b16 %v627
        %v713 = vunpack.c.l.b16 %v628
        %v714 = vunpack.c.l.b16 %v629
        %v715 = vunpack.c.h.b16 %v629
        %v716 = vunpack.c.l.b16 %v630
        %v717 = vunpack.c.l.b16 %v631
        %v718 = vunpack.c.h.b16 %v631
        %v719 = vunpack.c.l.b16 %v632
        %v720 = vunpack.c.l.b16 %v633
        %v721 = vunpack.c.h.b16 %v633
        %v722 = vunpack.c.l.b16 %v634
        %v723 = vunpack.c.l.b16 %v635
        %v724 = vunpack.c.h.b16 %v635
        %v725 = vunpack.c.l.b16 %v636
        %v726 = vunpack.c.l.b16 %v637
        %v727 = vunpack.c.h.b16 %v637
        %v728 = vunpack.c.l.b16 %v638
        %v729 = vunpack.c.l.b16 %v639
        %v730 = vunpack.c.h.b16 %v639
        %v731 = vunpack.c.l.b16 %v640
        %v732 = vunpack.c.l.b16 %v641
        %v733 = vunpack.c.h.b16 %v641
        %v734 = vunpack.c.l.b16 %v642
        %v735 = vunpack.c.l.b16 %v643
        %v736 = vunpack.c.h.b16 %v643
        %v737 = vunpack.c.l.b16 %v644
        %v738 = vunpack.c.l.b16 %v645
        %v739 = vunpack.c.h.b16 %v645
        %v740 = vunpack.c.l.b16 %v646
        %v741 = vunpack.c.l.b16 %v647
        %v742 = vunpack.c.h.b16 %v647
        %v743 = vunpack.c.l.b16 %v648
        %v744 = vunpack.c.l.b16 %v649
        %v745 = vunpack.c.h.b16 %v649
        %v746 = vunpack.c.l.b16 %v650
        %v747 = vunpack.c.l.b16 %v651
        %v748 = vunpack.c.h.b16 %v651
        %v749 = vunpack.c.l.b16 %v652
        %v750 = vpack.c.b16 %v705, %v702
        %v751 = vpack.c.b16 %v706, %v703
        %v752 = vpack.c.b16 %v707, %v704
        %v753 = vpack.c.b16 %v711, %v708
        %v754 = vpack.c.b16 %v712, %v709
        %v755 = vpack.c.b16 %v713, %v710
        %v756 = vpack.c.b16 %v717, %v714
        %v757 = vpack.c.b16 %v718, %v715
        %v758 = vpack.c.b16 %v719, %v716
        %v759 = vpack.c.b16 %v723, %v720
        %v760 = vpack.c.b16 %v724, %v721
        %v761 = vpack.c.b16 %v725, %v722
        %v762 = vpack.c.b16 %v729, %v726
        %v763 = vpack.c.b16 %v730, %v727
        %v764 = vpack.c.b16 %v731, %v728
        %v765 = vpack.c.b16 %v735, %v732
        %v766 = vpack.c.b16 %v736, %v733
        %v767 = vpack.c.b16 %v737, %v734
        %v768 = vpack.c.b16 %v741, %v738
        %v769 = vpack.c.b16 %v742, %v739
        %v770 = vpack.c.b16 %v743, %v740
        %v771 = vpack.c.b16 %v747, %v744
        %v772 = vpack.c.b16 %v748, %v745
        %v773 = vpack.c.b16 %v749, %v746
        %798 = vmatprep.subr.bf16.mxu0 %v751
        %799 = vmatpush1.bf16.msra.mxu0 %v750
        %800 = vmatprep.subr.bf16.mxu0 %v754
        %801 = vmatpush1.bf16.msra.mxu0 %v753
        %802 = vmatprep.subr.bf16.mxu0 %v757
        %803 = vmatpush1.bf16.msra.mxu0 %v756
        %804 = vmatprep.subr.bf16.mxu0 %v760
        %805 = vmatpush1.bf16.msra.mxu0 %v759
        %806 = vmatprep.subr.bf16.mxu0 %v763
        %807 = vmatpush1.bf16.msra.mxu0 %v762
        %808 = vmatprep.subr.bf16.mxu0 %v766
        %809 = vmatpush1.bf16.msra.mxu0 %v765
        %810 = vmatprep.subr.bf16.mxu0 %v769
        %811 = vmatpush1.bf16.msra.mxu0 %v768
        %812 = vmatprep.subr.bf16.mxu0 %v772
        %813 = vmatpush1.bf16.msra.mxu0 %v771
        %814 = vmatprep.subr.bf16.mxu0 0
        %815 = vmatpush1.bf16.msra.mxu0 0
        %816 = vmatprep.subr.bf16.mxu0 0
        %817 = vmatpush1.bf16.msra.mxu0 0
        %818 = vmatprep.subr.bf16.mxu0 0
        %819 = vmatpush1.bf16.msra.mxu0 0
        %820 = vmatprep.subr.bf16.mxu0 0
        %821 = vmatpush1.bf16.msra.mxu0 0
        %822 = vmatprep.subr.bf16.mxu0 0
        %823 = vmatpush1.bf16.msra.mxu0 0
        %824 = vmatprep.subr.bf16.mxu0 0
        %825 = vmatpush1.bf16.msra.mxu0 0
        %826 = vmatprep.subr.bf16.mxu0 0
        %827 = vmatpush1.bf16.msra.mxu0 0
        %828 = vmatprep.subr.bf16.mxu0 0
        %829 = vmatpush1.bf16.msra.mxu0 0
        %830 = vmatprep.mubr.bf16.mxu0 0
        %831 = vmatmul.mubr.bf16.gmra.mrb[0].mxu0 %v620
        %v832 = vpop.f32.mrb[0].mxu0
        %v833 = vadd.f32 %v658, %v832
        %v834 = vpop.f32.mrb[0].mxu0
        %v835 = vadd.f32 %v662, %v834
        %v836 = vpop.f32.mrb[0].mxu0
        %v837 = vadd.f32 %v658, %v836
        %v838 = vpop.f32.mrb[0].mxu0
        %v839 = vadd.f32 %v662, %v838
        %840 = vdwg.mxu0
        %841 = vmatprep.subr.bf16.mxu0 0
        %842 = vmatpush1.bf16.msra.mxu0 %v752
        %843 = vmatprep.subr.bf16.mxu0 0
        %844 = vmatpush1.bf16.msra.mxu0 %v755
        %845 = vmatprep.subr.bf16.mxu0 0
        %846 = vmatpush1.bf16.msra.mxu0 %v758
        %847 = vmatprep.subr.bf16.mxu0 0
        %848 = vmatpush1.bf16.msra.mxu0 %v761
        %849 = vmatprep.subr.bf16.mxu0 0
        %850 = vmatpush1.bf16.msra.mxu0 %v764
        %851 = vmatprep.subr.bf16.mxu0 0
        %852 = vmatpush1.bf16.msra.mxu0 %v767
        %853 = vmatprep.subr.bf16.mxu0 0
        %854 = vmatpush1.bf16.msra.mxu0 %v770
        %855 = vmatprep.subr.bf16.mxu0 0
        %856 = vmatpush1.bf16.msra.mxu0 %v773
        %857 = vmatprep.subr.bf16.mxu0 0
        %858 = vmatpush1.bf16.msra.mxu0 0
        %859 = vmatprep.subr.bf16.mxu0 0
        %860 = vmatpush1.bf16.msra.mxu0 0
        %861 = vmatprep.subr.bf16.mxu0 0
        %862 = vmatpush1.bf16.msra.mxu0 0
        %863 = vmatprep.subr.bf16.mxu0 0
        %864 = vmatpush1.bf16.msra.mxu0 0
        %865 = vmatprep.subr.bf16.mxu0 0
        %866 = vmatpush1.bf16.msra.mxu0 0
        %867 = vmatprep.subr.bf16.mxu0 0
        %868 = vmatpush1.bf16.msra.mxu0 0
        %869 = vmatprep.subr.bf16.mxu0 0
        %870 = vmatpush1.bf16.msra.mxu0 0
        %871 = vmatprep.subr.bf16.mxu0 0
        %872 = vmatpush1.bf16.msra.mxu0 0
        %873 = vmatprep.mubr.bf16.mxu0 0
        %874 = vmatmul.mubr.bf16.gmra.mrb[0].mxu0 %v620
        %v875 = vpop.f32.mrb[0].mxu0
        %v876 = vadd.f32 %v666, %v875
        %v877 = vpop.f32.mrb[0].mxu0
        %v878 = vpop.f32.mrb[0].mxu0
        %v879 = vadd.f32 %v666, %v878
        %v880 = vpop.f32.mrb[0].mxu0
        %881 = vdwg.mxu0
        %v882 = vpack.c.bf16 %v837, %v833
        %v883 = vpack.c.bf16 %v839, %v835
        %v884 = vpack.c.bf16 %v879, %v876
        %v885 = vld [vmem:[#allocation10] sm:$0x1]
        %v886 = vld [vmem:[#allocation11] sm:$0x1]
        %v887 = vld [vmem:[#allocation13] sm:$0x1]
        %v888 = vld [vmem:[#allocation20] sm:$0x1]
        %v889 = vld [vmem:[#allocation22] sm:$0x1]
        %v890 = vld [vmem:[#allocation16] sm:$0xf]
        %v891 = vld [vmem:[#allocation19] sm:$0x1]
        %vm892 = vcmask 261120
        %v894 = vsel %vm892, %v882, 0
        %v897 = vsel %vm892, %v883, 0
        %899 = vmatprep.subr.bf16.mxu0 0
        %900 = vmatpush1.bf16.xpose.msra.mxu0 %v897
        %901 = vmatprep.subr.bf16.mxu0 0
        %902 = vmatpush1.bf16.xpose.msra.mxu0 0
        %903 = vmatprep.subr.bf16.mxu0 0
        %904 = vmatpush1.bf16.xpose.msra.mxu0 0
        %905 = vmatprep.subr.bf16.mxu0 0
        %906 = vmatpush1.bf16.xpose.msra.mxu0 0
        %907 = vmatprep.subr.bf16.mxu0 0
        %908 = vmatpush1.bf16.xpose.msra.mxu0 0
        %909 = vmatprep.subr.bf16.mxu0 0
        %910 = vmatpush1.bf16.xpose.msra.mxu0 0
        %911 = vmatprep.subr.bf16.mxu0 0
        %912 = vmatpush1.bf16.xpose.msra.mxu0 0
        %913 = vmatprep.subr.bf16.mxu0 0
        %914 = vmatpush1.bf16.xpose.msra.mxu0 0
        %915 = vmatprep.subr.bf16.mxu0 0
        %916 = vmatpush1.bf16.xpose.msra.mxu0 0
        %917 = vmatprep.subr.bf16.mxu0 0
        %918 = vmatpush1.bf16.xpose.msra.mxu0 0
        %919 = vmatprep.subr.bf16.mxu0 0
        %920 = vmatpush1.bf16.xpose.msra.mxu0 0
        %921 = vmatprep.subr.bf16.mxu0 0
        %922 = vmatpush1.bf16.xpose.msra.mxu0 0
        %923 = vmatprep.subr.bf16.mxu0 0
        %924 = vmatpush1.bf16.xpose.msra.mxu0 0
        %925 = vmatprep.subr.bf16.mxu0 0
        %926 = vmatpush1.bf16.xpose.msra.mxu0 0
        %927 = vmatprep.subr.bf16.mxu0 0
        %928 = vmatpush1.bf16.xpose.msra.mxu0 0
        %929 = vmatprep.subr.bf16.mxu0 0
        %930 = vmatpush1.bf16.xpose.msra.mxu0 0
        %931 = vmatprep.mubr.bf16.mxu0 0
        %932 = vmatmul.mubr.bf16.gmra.mrb[0].mxu0 %v894
        %v933 = vpop.f32.mrb[0].mxu0
        %v934 = vadd.f32 0.0, %v933
        %v935 = vpop.f32.mrb[0].mxu0
        %v936 = vpop.f32.mrb[0].mxu0
        %v937 = vadd.f32 0.0, %v936
        %v938 = vpop.f32.mrb[0].mxu0
        %939 = vdwg.mxu0
        %v940 = vmul.f32 %v934, 0.17677669
        %v941 = vmul.f32 %v937, 0.17677669
        %vm942 = vcmask 130048
        %v943 = vsel %vm942, %v940, -inf
        %944 = vmax.xlane.f32.xlu0 %v943
        %v945 = vpop.xlane.xlu0 %944
        %v946 = vsel %vm942, %v941, -inf
        %947 = vmax.xlane.f32.xlu0 %v946
        %v948 = vpop.xlane.xlu0 %947
        %v949 = vsub.f32 %v940, %v945
        %v950 = vsub.f32 %v941, %v948
        %v951 = vmul.f32 %v949, 1.442695
        %v952 = vpow.pop %v951
        %v953 = vmul.f32 %v950, 1.442695
        %v954 = vpow.pop %v953
        %v955 = vsel %vm942, %v952, 0.0
        %956 = vadd.xlane.f32.xlu0 %v955
        %v957 = vpop.xlane.xlu0 %956
        %v958 = vsel %vm942, %v954, 0.0
        %959 = vadd.xlane.f32.xlu0 %v958
        %v960 = vpop.xlane.xlu0 %959
        %v961 = vrcp.pop %v957
        %v962 = vrcp.pop %v960
        %v963 = vmul.f32 %v952, %v961
        %v964 = vmul.f32 %v954, %v962
        %v965 = vpack.c.bf16 %v964, %v963
        %v967 = vsel %vm942, %v965, 0
        %969 = vmatprep.subr.bf16.mxu0 0
        %970 = vmatpush1.bf16.msra.mxu0 %v884
        %971 = vmatprep.subr.bf16.mxu0 0
        %972 = vmatpush1.bf16.msra.mxu0 0
        %973 = vmatprep.subr.bf16.mxu0 0
        %974 = vmatpush1.bf16.msra.mxu0 0
        %975 = vmatprep.subr.bf16.mxu0 0
        %976 = vmatpush1.bf16.msra.mxu0 0
        %977 = vmatprep.subr.bf16.mxu0 0
        %978 = vmatpush1.bf16.msra.mxu0 0
        %979 = vmatprep.subr.bf16.mxu0 0
        %980 = vmatpush1.bf16.msra.mxu0 0
        %981 = vmatprep.subr.bf16.mxu0 0
        %982 = vmatpush1.bf16.msra.mxu0 0
        %983 = vmatprep.subr.bf16.mxu0 0
        %984 = vmatpush1.bf16.msra.mxu0 0
        %985 = vmatprep.subr.bf16.mxu0 0
        %986 = vmatpush1.bf16.msra.mxu0 0
        %987 = vmatprep.subr.bf16.mxu0 0
        %988 = vmatpush1.bf16.msra.mxu0 0
        %989 = vmatprep.subr.bf16.mxu0 0
        %990 = vmatpush1.bf16.msra.mxu0 0
        %991 = vmatprep.subr.bf16.mxu0 0
        %992 = vmatpush1.bf16.msra.mxu0 0
        %993 = vmatprep.subr.bf16.mxu0 0
        %994 = vmatpush1.bf16.msra.mxu0 0
        %995 = vmatprep.subr.bf16.mxu0 0
        %996 = vmatpush1.bf16.msra.mxu0 0
        %997 = vmatprep.subr.bf16.mxu0 0
        %998 = vmatpush1.bf16.msra.mxu0 0
        %999 = vmatprep.subr.bf16.mxu0 0
        %1000 = vmatpush1.bf16.msra.mxu0 0
        %1001 = vmatprep.mubr.bf16.mxu0 0
        %1002 = vmatmul.mubr.bf16.gmra.mrb[0].mxu0 %v967
        %v1003 = vpop.f32.mrb[0].mxu0
        %v1004 = vadd.f32 0.0, %v1003
        %v1005 = vpop.f32.mrb[0].mxu0
        %v1006 = vpop.f32.mrb[0].mxu0
        %v1007 = vadd.f32 0.0, %v1006
        %v1008 = vpop.f32.mrb[0].mxu0
        %1009 = vdwg.mxu0
        %v1010 = vpack.c.bf16 %v1007, %v1004
        %v1011 = vld [vmem:[#allocation8] sm:$0xf]
        %v1012 = vld [vmem:[#allocation8 + $0x4] sm:$0xf]
        %v1013 = vld [vmem:[#allocation8 + $0x8] sm:$0xf]
        %v1014 = vld [vmem:[#allocation8 + $0xc] sm:$0xf]
        %1016 = vrot.lane.b32.xlu0 %v882, 96
        %v1017 = vpop.permute.xlu0 %1016
        %1019 = vrot.lane.b32.xlu0 %v883, 96
        %v1020 = vpop.permute.xlu0 %1019
        %v1022 = vsel %vm892, %v1017, 0
        %v1025 = vsel %vm892, %v1020, 0
        %1027 = vmatprep.subr.bf16.mxu0 0
        %1028 = vmatpush1.bf16.xpose.msra.mxu0 %v1025
        %1029 = vmatprep.subr.bf16.mxu0 0
        %1030 = vmatpush1.bf16.xpose.msra.mxu0 0
        %1031 = vmatprep.subr.bf16.mxu0 0
        %1032 = vmatpush1.bf16.xpose.msra.mxu0 0
        %1033 = vmatprep.subr.bf16.mxu0 0
        %1034 = vmatpush1.bf16.xpose.msra.mxu0 0
        %1035 = vmatprep.subr.bf16.mxu0 0
        %1036 = vmatpush1.bf16.xpose.msra.mxu0 0
        %1037 = vmatprep.subr.bf16.mxu0 0
        %1038 = vmatpush1.bf16.xpose.msra.mxu0 0
        %1039 = vmatprep.subr.bf16.mxu0 0
        %1040 = vmatpush1.bf16.xpose.msra.mxu0 0
        %1041 = vmatprep.subr.bf16.mxu0 0
        %1042 = vmatpush1.bf16.xpose.msra.mxu0 0
        %1043 = vmatprep.subr.bf16.mxu0 0
        %1044 = vmatpush1.bf16.xpose.msra.mxu0 0
        %1045 = vmatprep.subr.bf16.mxu0 0
        %1046 = vmatpush1.bf16.xpose.msra.mxu0 0
        %1047 = vmatprep.subr.bf16.mxu0 0
        %1048 = vmatpush1.bf16.xpose.msra.mxu0 0
        %1049 = vmatprep.subr.bf16.mxu0 0
        %1050 = vmatpush1.bf16.xpose.msra.mxu0 0
        %1051 = vmatprep.subr.bf16.mxu0 0
        %1052 = vmatpush1.bf16.xpose.msra.mxu0 0
        %1053 = vmatprep.subr.bf16.mxu0 0
        %1054 = vmatpush1.bf16.xpose.msra.mxu0 0
        %1055 = vmatprep.subr.bf16.mxu0 0
        %1056 = vmatpush1.bf16.xpose.msra.mxu0 0
        %1057 = vmatprep.subr.bf16.mxu0 0
        %1058 = vmatpush1.bf16.xpose.msra.mxu0 0
        %1059 = vmatprep.mubr.bf16.mxu0 0
        %1060 = vmatmul.mubr.bf16.gmra.mrb[0].mxu0 %v1022
        %v1061 = vpop.f32.mrb[0].mxu0
        %v1062 = vadd.f32 0.0, %v1061
        %v1063 = vpop.f32.mrb[0].mxu0
        %v1064 = vpop.f32.mrb[0].mxu0
        %v1065 = vadd.f32 0.0, %v1064
        %v1066 = vpop.f32.mrb[0].mxu0
        %1067 = vdwg.mxu0
        %v1068 = vmul.f32 %v1062, 0.17677669
        %v1069 = vmul.f32 %v1065, 0.17677669
        %v1070 = vsel %vm942, %v1068, -inf
        %1071 = vmax.xlane.f32.xlu0 %v1070
        %v1072 = vpop.xlane.xlu0 %1071
        %v1073 = vsel %vm942, %v1069, -inf
        %1074 = vmax.xlane.f32.xlu0 %v1073
        %v1075 = vpop.xlane.xlu0 %1074
        %v1076 = vsub.f32 %v1068, %v1072
        %v1077 = vsub.f32 %v1069, %v1075
        %v1078 = vmul.f32 %v1076, 1.442695
        %v1079 = vpow.pop %v1078
        %v1080 = vmul.f32 %v1077, 1.442695
        %v1081 = vpow.pop %v1080
        %v1082 = vsel %vm942, %v1079, 0.0
        %1083 = vadd.xlane.f32.xlu0 %v1082
        %v1084 = vpop.xlane.xlu0 %1083
        %v1085 = vsel %vm942, %v1081, 0.0
        %1086 = vadd.xlane.f32.xlu0 %v1085
        %v1087 = vpop.xlane.xlu0 %1086
        %v1088 = vrcp.pop %v1084
        %v1089 = vrcp.pop %v1087
        %v1090 = vmul.f32 %v1079, %v1088
        %v1091 = vmul.f32 %v1081, %v1089
        %v1092 = vpack.c.bf16 %v1091, %v1090
        %1094 = vrot.lane.b32.xlu0 %v884, 96
        %v1095 = vpop.permute.xlu0 %1094
        %v1098 = vsel %vm942, %v1092, 0
        %1100 = vmatprep.subr.bf16.mxu0 0
        %1101 = vmatpush1.bf16.msra.mxu0 %v1095
        %1102 = vmatprep.subr.bf16.mxu0 0
        %1103 = vmatpush1.bf16.msra.mxu0 0
        %1104 = vmatprep.subr.bf16.mxu0 0
        %1105 = vmatpush1.bf16.msra.mxu0 0
        %1106 = vmatprep.subr.bf16.mxu0 0
        %1107 = vmatpush1.bf16.msra.mxu0 0
        %1108 = vmatprep.subr.bf16.mxu0 0
        %1109 = vmatpush1.bf16.msra.mxu0 0
        %1110 = vmatprep.subr.bf16.mxu0 0
        %1111 = vmatpush1.bf16.msra.mxu0 0
        %1112 = vmatprep.subr.bf16.mxu0 0
        %1113 = vmatpush1.bf16.msra.mxu0 0
        %1114 = vmatprep.subr.bf16.mxu0 0
        %1115 = vmatpush1.bf16.msra.mxu0 0
        %1116 = vmatprep.subr.bf16.mxu0 0
        %1117 = vmatpush1.bf16.msra.mxu0 0
        %1118 = vmatprep.subr.bf16.mxu0 0
        %1119 = vmatpush1.bf16.msra.mxu0 0
        %1120 = vmatprep.subr.bf16.mxu0 0
        %1121 = vmatpush1.bf16.msra.mxu0 0
        %1122 = vmatprep.subr.bf16.mxu0 0
        %1123 = vmatpush1.bf16.msra.mxu0 0
        %1124 = vmatprep.subr.bf16.mxu0 0
        %1125 = vmatpush1.bf16.msra.mxu0 0
        %1126 = vmatprep.subr.bf16.mxu0 0
        %1127 = vmatpush1.bf16.msra.mxu0 0
        %1128 = vmatprep.subr.bf16.mxu0 0
        %1129 = vmatpush1.bf16.msra.mxu0 0
        %1130 = vmatprep.subr.bf16.mxu0 0
        %1131 = vmatpush1.bf16.msra.mxu0 0
        %1132 = vmatprep.mubr.bf16.mxu0 0
        %1133 = vmatmul.mubr.bf16.gmra.mrb[0].mxu0 %v1098
        %v1134 = vpop.f32.mrb[0].mxu0
        %v1135 = vadd.f32 0.0, %v1134
        %v1136 = vpop.f32.mrb[0].mxu0
        %v1137 = vpop.f32.mrb[0].mxu0
        %v1138 = vadd.f32 0.0, %v1137
        %v1139 = vpop.f32.mrb[0].mxu0
        %1140 = vdwg.mxu0
        %v1141 = vpack.c.bf16 %v1138, %v1135
        %s1142 = scalar_lea.vmem [#allocation8], 16
        %v1143 = vld [vmem:[%s1142] sm:$0xf]
        %v1144 = vld [vmem:[%s1142 + $0x4] sm:$0xf]
        %v1145 = vld [vmem:[%s1142 + $0x8] sm:$0xf]
        %v1146 = vld [vmem:[%s1142 + $0xc] sm:$0xf]
        %v1151 = vunpack.c.l.b16 %v1143
        %v1152 = vunpack.c.l.b16 %v1144
        %v1153 = vunpack.c.l.b16 %v1145
        %v1154 = vunpack.c.l.b16 %v1146
        %v1155 = vpack.c.b16 %v1152, %v1151
        %v1156 = vpack.c.b16 %v1154, %v1153
        %v1160 = vsel %vm892, %v1141, 0
        %1162 = vmatprep.subr.bf16.mxu0 0
        %1163 = vmatpush1.bf16.msra.mxu0 %v1155
        %1164 = vmatprep.subr.bf16.mxu0 0
        %1165 = vmatpush1.bf16.msra.mxu0 %v1156
        %1166 = vmatprep.subr.bf16.mxu0 0
        %1167 = vmatpush1.bf16.msra.mxu0 0
        %1168 = vmatprep.subr.bf16.mxu0 0
        %1169 = vmatpush1.bf16.msra.mxu0 0
        %1170 = vmatprep.subr.bf16.mxu0 0
        %1171 = vmatpush1.bf16.msra.mxu0 0
        %1172 = vmatprep.subr.bf16.mxu0 0
        %1173 = vmatpush1.bf16.msra.mxu0 0
        %1174 = vmatprep.subr.bf16.mxu0 0
        %1175 = vmatpush1.bf16.msra.mxu0 0
        %1176 = vmatprep.subr.bf16.mxu0 0
        %1177 = vmatpush1.bf16.msra.mxu0 0
        %1178 = vmatprep.subr.bf16.mxu0 0
        %1179 = vmatpush1.bf16.msra.mxu0 0
        %1180 = vmatprep.subr.bf16.mxu0 0
        %1181 = vmatpush1.bf16.msra.mxu0 0
        %1182 = vmatprep.subr.bf16.mxu0 0
        %1183 = vmatpush1.bf16.msra.mxu0 0
        %1184 = vmatprep.subr.bf16.mxu0 0
        %1185 = vmatpush1.bf16.msra.mxu0 0
        %1186 = vmatprep.subr.bf16.mxu0 0
        %1187 = vmatpush1.bf16.msra.mxu0 0
        %1188 = vmatprep.subr.bf16.mxu0 0
        %1189 = vmatpush1.bf16.msra.mxu0 0
        %1190 = vmatprep.subr.bf16.mxu0 0
        %1191 = vmatpush1.bf16.msra.mxu0 0
        %1192 = vmatprep.subr.bf16.mxu0 0
        %1193 = vmatpush1.bf16.msra.mxu0 0
        %1194 = vmatprep.mubr.bf16.mxu0 0
        %1195 = vmatmul.mubr.bf16.gmra.mrb[0].mxu0 %v1160
        %v1196 = vpop.f32.mrb[0].mxu0
        %v1197 = vadd.f32 0.0, %v1196
        %v1198 = vpop.f32.mrb[0].mxu0
        %v1199 = vpop.f32.mrb[0].mxu0
        %v1200 = vadd.f32 0.0, %v1199
        %v1201 = vpop.f32.mrb[0].mxu0
        %1202 = vdwg.mxu0
        %v1207 = vunpack.c.l.b16 %v1011
        %v1208 = vunpack.c.l.b16 %v1012
        %v1209 = vunpack.c.l.b16 %v1013
        %v1210 = vunpack.c.l.b16 %v1014
        %v1211 = vpack.c.b16 %v1208, %v1207
        %v1212 = vpack.c.b16 %v1210, %v1209
        %v1216 = vsel %vm892, %v1010, 0
        %1218 = vmatprep.subr.bf16.mxu0 0
        %1219 = vmatpush1.bf16.msra.mxu0 %v1211
        %1220 = vmatprep.subr.bf16.mxu0 0
        %1221 = vmatpush1.bf16.msra.mxu0 %v1212
        %1222 = vmatprep.subr.bf16.mxu0 0
        %1223 = vmatpush1.bf16.msra.mxu0 0
        %1224 = vmatprep.subr.bf16.mxu0 0
        %1225 = vmatpush1.bf16.msra.mxu0 0
        %1226 = vmatprep.subr.bf16.mxu0 0
        %1227 = vmatpush1.bf16.msra.mxu0 0
        %1228 = vmatprep.subr.bf16.mxu0 0
        %1229 = vmatpush1.bf16.msra.mxu0 0
        %1230 = vmatprep.subr.bf16.mxu0 0
        %1231 = vmatpush1.bf16.msra.mxu0 0
        %1232 = vmatprep.subr.bf16.mxu0 0
        %1233 = vmatpush1.bf16.msra.mxu0 0
        %1234 = vmatprep.subr.bf16.mxu0 0
        %1235 = vmatpush1.bf16.msra.mxu0 0
        %1236 = vmatprep.subr.bf16.mxu0 0
        %1237 = vmatpush1.bf16.msra.mxu0 0
        %1238 = vmatprep.subr.bf16.mxu0 0
        %1239 = vmatpush1.bf16.msra.mxu0 0
        %1240 = vmatprep.subr.bf16.mxu0 0
        %1241 = vmatpush1.bf16.msra.mxu0 0
        %1242 = vmatprep.subr.bf16.mxu0 0
        %1243 = vmatpush1.bf16.msra.mxu0 0
        %1244 = vmatprep.subr.bf16.mxu0 0
        %1245 = vmatpush1.bf16.msra.mxu0 0
        %1246 = vmatprep.subr.bf16.mxu0 0
        %1247 = vmatpush1.bf16.msra.mxu0 0
        %1248 = vmatprep.subr.bf16.mxu0 0
        %1249 = vmatpush1.bf16.msra.mxu0 0
        %1250 = vmatprep.mubr.bf16.mxu0 0
        %1251 = vmatmul.mubr.bf16.gmra.mrb[0].mxu0 %v1216
        %v1252 = vpop.f32.mrb[0].mxu0
        %v1253 = vadd.f32 %v1197, %v1252
        %v1254 = vpop.f32.mrb[0].mxu0
        %v1255 = vpop.f32.mrb[0].mxu0
        %v1256 = vadd.f32 %v1200, %v1255
        %v1257 = vpop.f32.mrb[0].mxu0
        %1258 = vdwg.mxu0
        %1259 = vrot.lane.b32.xlu0 %v882, 64
        %v1260 = vpop.permute.xlu0 %1259
        %1261 = vrot.lane.b32.xlu0 %v883, 64
        %v1262 = vpop.permute.xlu0 %1261
        %v1264 = vsel %vm892, %v1260, 0
        %v1267 = vsel %vm892, %v1262, 0
        %1269 = vmatprep.subr.bf16.mxu0 0
        %1270 = vmatpush1.bf16.xpose.msra.mxu0 %v1267
        %1271 = vmatprep.subr.bf16.mxu0 0
        %1272 = vmatpush1.bf16.xpose.msra.mxu0 0
        %1273 = vmatprep.subr.bf16.mxu0 0
        %1274 = vmatpush1.bf16.xpose.msra.mxu0 0
        %1275 = vmatprep.subr.bf16.mxu0 0
        %1276 = vmatpush1.bf16.xpose.msra.mxu0 0
        %1277 = vmatprep.subr.bf16.mxu0 0
        %1278 = vmatpush1.bf16.xpose.msra.mxu0 0
        %1279 = vmatprep.subr.bf16.mxu0 0
        %1280 = vmatpush1.bf16.xpose.msra.mxu0 0
        %1281 = vmatprep.subr.bf16.mxu0 0
        %1282 = vmatpush1.bf16.xpose.msra.mxu0 0
        %1283 = vmatprep.subr.bf16.mxu0 0
        %1284 = vmatpush1.bf16.xpose.msra.mxu0 0
        %1285 = vmatprep.subr.bf16.mxu0 0
        %1286 = vmatpush1.bf16.xpose.msra.mxu0 0
        %1287 = vmatprep.subr.bf16.mxu0 0
        %1288 = vmatpush1.bf16.xpose.msra.mxu0 0
        %1289 = vmatprep.subr.bf16.mxu0 0
        %1290 = vmatpush1.bf16.xpose.msra.mxu0 0
        %1291 = vmatprep.subr.bf16.mxu0 0
        %1292 = vmatpush1.bf16.xpose.msra.mxu0 0
        %1293 = vmatprep.subr.bf16.mxu0 0
        %1294 = vmatpush1.bf16.xpose.msra.mxu0 0
        %1295 = vmatprep.subr.bf16.mxu0 0
        %1296 = vmatpush1.bf16.xpose.msra.mxu0 0
        %1297 = vmatprep.subr.bf16.mxu0 0
        %1298 = vmatpush1.bf16.xpose.msra.mxu0 0
        %1299 = vmatprep.subr.bf16.mxu0 0
        %1300 = vmatpush1.bf16.xpose.msra.mxu0 0
        %1301 = vmatprep.mubr.bf16.mxu0 0
        %1302 = vmatmul.mubr.bf16.gmra.mrb[0].mxu0 %v1264
        %v1303 = vpop.f32.mrb[0].mxu0
        %v1304 = vadd.f32 0.0, %v1303
        %v1305 = vpop.f32.mrb[0].mxu0
        %v1306 = vpop.f32.mrb[0].mxu0
        %v1307 = vadd.f32 0.0, %v1306
        %v1308 = vpop.f32.mrb[0].mxu0
        %1309 = vdwg.mxu0
        %v1310 = vmul.f32 %v1304, 0.17677669
        %v1311 = vmul.f32 %v1307, 0.17677669
        %v1312 = vsel %vm942, %v1310, -inf
        %1313 = vmax.xlane.f32.xlu0 %v1312
        %v1314 = vpop.xlane.xlu0 %1313
        %v1315 = vsel %vm942, %v1311, -inf
        %1316 = vmax.xlane.f32.xlu0 %v1315
        %v1317 = vpop.xlane.xlu0 %1316
        %v1318 = vsub.f32 %v1310, %v1314
        %v1319 = vsub.f32 %v1311, %v1317
        %v1320 = vmul.f32 %v1318, 1.442695
        %v1321 = vpow.pop %v1320
        %v1322 = vmul.f32 %v1319, 1.442695
        %v1323 = vpow.pop %v1322
        %v1324 = vsel %vm942, %v1321, 0.0
        %1325 = vadd.xlane.f32.xlu0 %v1324
        %v1326 = vpop.xlane.xlu0 %1325
        %v1327 = vsel %vm942, %v1323, 0.0
        %1328 = vadd.xlane.f32.xlu0 %v1327
        %v1329 = vpop.xlane.xlu0 %1328
        %v1330 = vrcp.pop %v1326
        %v1331 = vrcp.pop %v1329
        %v1332 = vmul.f32 %v1321, %v1330
        %v1333 = vmul.f32 %v1323, %v1331
        %v1334 = vpack.c.bf16 %v1333, %v1332
        %1335 = vrot.lane.b32.xlu0 %v884, 64
        %v1336 = vpop.permute.xlu0 %1335
        %v1339 = vsel %vm942, %v1334, 0
        %1341 = vmatprep.subr.bf16.mxu0 0
        %1342 = vmatpush1.bf16.msra.mxu0 %v1336
        %1343 = vmatprep.subr.bf16.mxu0 0
        %1344 = vmatpush1.bf16.msra.mxu0 0
        %1345 = vmatprep.subr.bf16.mxu0 0
        %1346 = vmatpush1.bf16.msra.mxu0 0
        %1347 = vmatprep.subr.bf16.mxu0 0
        %1348 = vmatpush1.bf16.msra.mxu0 0
        %1349 = vmatprep.subr.bf16.mxu0 0
        %1350 = vmatpush1.bf16.msra.mxu0 0
        %1351 = vmatprep.subr.bf16.mxu0 0
        %1352 = vmatpush1.bf16.msra.mxu0 0
        %1353 = vmatprep.subr.bf16.mxu0 0
        %1354 = vmatpush1.bf16.msra.mxu0 0
        %1355 = vmatprep.subr.bf16.mxu0 0
        %1356 = vmatpush1.bf16.msra.mxu0 0
        %1357 = vmatprep.subr.bf16.mxu0 0
        %1358 = vmatpush1.bf16.msra.mxu0 0
        %1359 = vmatprep.subr.bf16.mxu0 0
        %1360 = vmatpush1.bf16.msra.mxu0 0
        %1361 = vmatprep.subr.bf16.mxu0 0
        %1362 = vmatpush1.bf16.msra.mxu0 0
        %1363 = vmatprep.subr.bf16.mxu0 0
        %1364 = vmatpush1.bf16.msra.mxu0 0
        %1365 = vmatprep.subr.bf16.mxu0 0
        %1366 = vmatpush1.bf16.msra.mxu0 0
        %1367 = vmatprep.subr.bf16.mxu0 0
        %1368 = vmatpush1.bf16.msra.mxu0 0
        %1369 = vmatprep.subr.bf16.mxu0 0
        %1370 = vmatpush1.bf16.msra.mxu0 0
        %1371 = vmatprep.subr.bf16.mxu0 0
        %1372 = vmatpush1.bf16.msra.mxu0 0
        %1373 = vmatprep.mubr.bf16.mxu0 0
        %1374 = vmatmul.mubr.bf16.gmra.mrb[0].mxu0 %v1339
        %v1375 = vpop.f32.mrb[0].mxu0
        %v1376 = vadd.f32 0.0, %v1375
        %v1377 = vpop.f32.mrb[0].mxu0
        %v1378 = vpop.f32.mrb[0].mxu0
        %v1379 = vadd.f32 0.0, %v1378
        %v1380 = vpop.f32.mrb[0].mxu0
        %1381 = vdwg.mxu0
        %v1382 = vpack.c.bf16 %v1379, %v1376
        %s1383 = scalar_lea.vmem [#allocation8], 32
        %v1384 = vld [vmem:[%s1383] sm:$0xf]
        %v1385 = vld [vmem:[%s1383 + $0x4] sm:$0xf]
        %v1386 = vld [vmem:[%s1383 + $0x8] sm:$0xf]
        %v1387 = vld [vmem:[%s1383 + $0xc] sm:$0xf]
        %v1392 = vunpack.c.l.b16 %v1384
        %v1393 = vunpack.c.l.b16 %v1385
        %v1394 = vunpack.c.l.b16 %v1386
        %v1395 = vunpack.c.l.b16 %v1387
        %v1396 = vpack.c.b16 %v1393, %v1392
        %v1397 = vpack.c.b16 %v1395, %v1394
        %v1401 = vsel %vm892, %v1382, 0
        %1403 = vmatprep.subr.bf16.mxu0 0
        %1404 = vmatpush1.bf16.msra.mxu0 %v1396
        %1405 = vmatprep.subr.bf16.mxu0 0
        %1406 = vmatpush1.bf16.msra.mxu0 %v1397
        %1407 = vmatprep.subr.bf16.mxu0 0
        %1408 = vmatpush1.bf16.msra.mxu0 0
        %1409 = vmatprep.subr.bf16.mxu0 0
        %1410 = vmatpush1.bf16.msra.mxu0 0
        %1411 = vmatprep.subr.bf16.mxu0 0
        %1412 = vmatpush1.bf16.msra.mxu0 0
        %1413 = vmatprep.subr.bf16.mxu0 0
        %1414 = vmatpush1.bf16.msra.mxu0 0
        %1415 = vmatprep.subr.bf16.mxu0 0
        %1416 = vmatpush1.bf16.msra.mxu0 0
        %1417 = vmatprep.subr.bf16.mxu0 0
        %1418 = vmatpush1.bf16.msra.mxu0 0
        %1419 = vmatprep.subr.bf16.mxu0 0
        %1420 = vmatpush1.bf16.msra.mxu0 0
        %1421 = vmatprep.subr.bf16.mxu0 0
        %1422 = vmatpush1.bf16.msra.mxu0 0
        %1423 = vmatprep.subr.bf16.mxu0 0
        %1424 = vmatpush1.bf16.msra.mxu0 0
        %1425 = vmatprep.subr.bf16.mxu0 0
        %1426 = vmatpush1.bf16.msra.mxu0 0
        %1427 = vmatprep.subr.bf16.mxu0 0
        %1428 = vmatpush1.bf16.msra.mxu0 0
        %1429 = vmatprep.subr.bf16.mxu0 0
        %1430 = vmatpush1.bf16.msra.mxu0 0
        %1431 = vmatprep.subr.bf16.mxu0 0
        %1432 = vmatpush1.bf16.msra.mxu0 0
        %1433 = vmatprep.subr.bf16.mxu0 0
        %1434 = vmatpush1.bf16.msra.mxu0 0
        %1435 = vmatprep.mubr.bf16.mxu0 0
        %1436 = vmatmul.mubr.bf16.gmra.mrb[0].mxu0 %v1401
        %v1437 = vpop.f32.mrb[0].mxu0
        %v1438 = vadd.f32 0.0, %v1437
        %v1439 = vpop.f32.mrb[0].mxu0
        %v1440 = vpop.f32.mrb[0].mxu0
        %v1441 = vadd.f32 0.0, %v1440
        %v1442 = vpop.f32.mrb[0].mxu0
        %1443 = vdwg.mxu0
        %v1444 = vadd.f32 %v1253, %v1438
        %v1445 = vadd.f32 %v1256, %v1441
        %1446 = vrot.lane.b32.xlu0 %v882, 32
        %v1447 = vpop.permute.xlu0 %1446
        %1448 = vrot.lane.b32.xlu0 %v883, 32
        %v1449 = vpop.permute.xlu0 %1448
        %v1451 = vsel %vm892, %v1447, 0
        %v1454 = vsel %vm892, %v1449, 0
        %1456 = vmatprep.subr.bf16.mxu0 0
        %1457 = vmatpush1.bf16.xpose.msra.mxu0 %v1454
        %1458 = vmatprep.subr.bf16.mxu0 0
        %1459 = vmatpush1.bf16.xpose.msra.mxu0 0
        %1460 = vmatprep.subr.bf16.mxu0 0
        %1461 = vmatpush1.bf16.xpose.msra.mxu0 0
        %1462 = vmatprep.subr.bf16.mxu0 0
        %1463 = vmatpush1.bf16.xpose.msra.mxu0 0
        %1464 = vmatprep.subr.bf16.mxu0 0
        %1465 = vmatpush1.bf16.xpose.msra.mxu0 0
        %1466 = vmatprep.subr.bf16.mxu0 0
        %1467 = vmatpush1.bf16.xpose.msra.mxu0 0
        %1468 = vmatprep.subr.bf16.mxu0 0
        %1469 = vmatpush1.bf16.xpose.msra.mxu0 0
        %1470 = vmatprep.subr.bf16.mxu0 0
        %1471 = vmatpush1.bf16.xpose.msra.mxu0 0
        %1472 = vmatprep.subr.bf16.mxu0 0
        %1473 = vmatpush1.bf16.xpose.msra.mxu0 0
        %1474 = vmatprep.subr.bf16.mxu0 0
        %1475 = vmatpush1.bf16.xpose.msra.mxu0 0
        %1476 = vmatprep.subr.bf16.mxu0 0
        %1477 = vmatpush1.bf16.xpose.msra.mxu0 0
        %1478 = vmatprep.subr.bf16.mxu0 0
        %1479 = vmatpush1.bf16.xpose.msra.mxu0 0
        %1480 = vmatprep.subr.bf16.mxu0 0
        %1481 = vmatpush1.bf16.xpose.msra.mxu0 0
        %1482 = vmatprep.subr.bf16.mxu0 0
        %1483 = vmatpush1.bf16.xpose.msra.mxu0 0
        %1484 = vmatprep.subr.bf16.mxu0 0
        %1485 = vmatpush1.bf16.xpose.msra.mxu0 0
        %1486 = vmatprep.subr.bf16.mxu0 0
        %1487 = vmatpush1.bf16.xpose.msra.mxu0 0
        %1488 = vmatprep.mubr.bf16.mxu0 0
        %1489 = vmatmul.mubr.bf16.gmra.mrb[0].mxu0 %v1451
        %v1490 = vpop.f32.mrb[0].mxu0
        %v1491 = vadd.f32 0.0, %v1490
        %v1492 = vpop.f32.mrb[0].mxu0
        %v1493 = vpop.f32.mrb[0].mxu0
        %v1494 = vadd.f32 0.0, %v1493
        %v1495 = vpop.f32.mrb[0].mxu0
        %1496 = vdwg.mxu0
        %v1497 = vmul.f32 %v1491, 0.17677669
        %v1498 = vmul.f32 %v1494, 0.17677669
        %v1499 = vsel %vm942, %v1497, -inf
        %1500 = vmax.xlane.f32.xlu0 %v1499
        %v1501 = vpop.xlane.xlu0 %1500
        %v1502 = vsel %vm942, %v1498, -inf
        %1503 = vmax.xlane.f32.xlu0 %v1502
        %v1504 = vpop.xlane.xlu0 %1503
        %v1505 = vsub.f32 %v1497, %v1501
        %v1506 = vsub.f32 %v1498, %v1504
        %v1507 = vmul.f32 %v1505, 1.442695
        %v1508 = vpow.pop %v1507
        %v1509 = vmul.f32 %v1506, 1.442695
        %v1510 = vpow.pop %v1509
        %v1511 = vsel %vm942, %v1508, 0.0
        %1512 = vadd.xlane.f32.xlu0 %v1511
        %v1513 = vpop.xlane.xlu0 %1512
        %v1514 = vsel %vm942, %v1510, 0.0
        %1515 = vadd.xlane.f32.xlu0 %v1514
        %v1516 = vpop.xlane.xlu0 %1515
        %v1517 = vrcp.pop %v1513
        %v1518 = vrcp.pop %v1516
        %v1519 = vmul.f32 %v1508, %v1517
        %v1520 = vmul.f32 %v1510, %v1518
        %v1521 = vpack.c.bf16 %v1520, %v1519
        %1522 = vrot.lane.b32.xlu0 %v884, 32
        %v1523 = vpop.permute.xlu0 %1522
        %v1526 = vsel %vm942, %v1521, 0
        %1528 = vmatprep.subr.bf16.mxu0 0
        %1529 = vmatpush1.bf16.msra.mxu0 %v1523
        %1530 = vmatprep.subr.bf16.mxu0 0
        %1531 = vmatpush1.bf16.msra.mxu0 0
        %1532 = vmatprep.subr.bf16.mxu0 0
        %1533 = vmatpush1.bf16.msra.mxu0 0
        %1534 = vmatprep.subr.bf16.mxu0 0
        %1535 = vmatpush1.bf16.msra.mxu0 0
        %1536 = vmatprep.subr.bf16.mxu0 0
        %1537 = vmatpush1.bf16.msra.mxu0 0
        %1538 = vmatprep.subr.bf16.mxu0 0
        %1539 = vmatpush1.bf16.msra.mxu0 0
        %1540 = vmatprep.subr.bf16.mxu0 0
        %1541 = vmatpush1.bf16.msra.mxu0 0
        %1542 = vmatprep.subr.bf16.mxu0 0
        %1543 = vmatpush1.bf16.msra.mxu0 0
        %1544 = vmatprep.subr.bf16.mxu0 0
        %1545 = vmatpush1.bf16.msra.mxu0 0
        %1546 = vmatprep.subr.bf16.mxu0 0
        %1547 = vmatpush1.bf16.msra.mxu0 0
        %1548 = vmatprep.subr.bf16.mxu0 0
        %1549 = vmatpush1.bf16.msra.mxu0 0
        %1550 = vmatprep.subr.bf16.mxu0 0
        %1551 = vmatpush1.bf16.msra.mxu0 0
        %1552 = vmatprep.subr.bf16.mxu0 0
        %1553 = vmatpush1.bf16.msra.mxu0 0
        %1554 = vmatprep.subr.bf16.mxu0 0
        %1555 = vmatpush1.bf16.msra.mxu0 0
        %1556 = vmatprep.subr.bf16.mxu0 0
        %1557 = vmatpush1.bf16.msra.mxu0 0
        %1558 = vmatprep.subr.bf16.mxu0 0
        %1559 = vmatpush1.bf16.msra.mxu0 0
        %1560 = vmatprep.mubr.bf16.mxu0 0
        %1561 = vmatmul.mubr.bf16.gmra.mrb[0].mxu0 %v1526
        %v1562 = vpop.f32.mrb[0].mxu0
        %v1563 = vadd.f32 0.0, %v1562
        %v1564 = vpop.f32.mrb[0].mxu0
        %v1565 = vpop.f32.mrb[0].mxu0
        %v1566 = vadd.f32 0.0, %v1565
        %v1567 = vpop.f32.mrb[0].mxu0
        %1568 = vdwg.mxu0
        %v1569 = vpack.c.bf16 %v1566, %v1563
        %s1570 = scalar_lea.vmem [#allocation8], 48
        %v1571 = vld [vmem:[%s1570] sm:$0xf]
        %v1572 = vld [vmem:[%s1570 + $0x4] sm:$0xf]
        %v1573 = vld [vmem:[%s1570 + $0x8] sm:$0xf]
        %v1574 = vld [vmem:[%s1570 + $0xc] sm:$0xf]
        %v1579 = vunpack.c.l.b16 %v1571
        %v1580 = vunpack.c.l.b16 %v1572
        %v1581 = vunpack.c.l.b16 %v1573
        %v1582 = vunpack.c.l.b16 %v1574
        %v1583 = vpack.c.b16 %v1580, %v1579
        %v1584 = vpack.c.b16 %v1582, %v1581
        %v1588 = vsel %vm892, %v1569, 0
        %1590 = vmatprep.subr.bf16.mxu0 0
        %1591 = vmatpush1.bf16.msra.mxu0 %v1583
        %1592 = vmatprep.subr.bf16.mxu0 0
        %1593 = vmatpush1.bf16.msra.mxu0 %v1584
        %1594 = vmatprep.subr.bf16.mxu0 0
        %1595 = vmatpush1.bf16.msra.mxu0 0
        %1596 = vmatprep.subr.bf16.mxu0 0
        %1597 = vmatpush1.bf16.msra.mxu0 0
        %1598 = vmatprep.subr.bf16.mxu0 0
        %1599 = vmatpush1.bf16.msra.mxu0 0
        %1600 = vmatprep.subr.bf16.mxu0 0
        %1601 = vmatpush1.bf16.msra.mxu0 0
        %1602 = vmatprep.subr.bf16.mxu0 0
        %1603 = vmatpush1.bf16.msra.mxu0 0
        %1604 = vmatprep.subr.bf16.mxu0 0
        %1605 = vmatpush1.bf16.msra.mxu0 0
        %1606 = vmatprep.subr.bf16.mxu0 0
        %1607 = vmatpush1.bf16.msra.mxu0 0
        %1608 = vmatprep.subr.bf16.mxu0 0
        %1609 = vmatpush1.bf16.msra.mxu0 0
        %1610 = vmatprep.subr.bf16.mxu0 0
        %1611 = vmatpush1.bf16.msra.mxu0 0
        %1612 = vmatprep.subr.bf16.mxu0 0
        %1613 = vmatpush1.bf16.msra.mxu0 0
        %1614 = vmatprep.subr.bf16.mxu0 0
        %1615 = vmatpush1.bf16.msra.mxu0 0
        %1616 = vmatprep.subr.bf16.mxu0 0
        %1617 = vmatpush1.bf16.msra.mxu0 0
        %1618 = vmatprep.subr.bf16.mxu0 0
        %1619 = vmatpush1.bf16.msra.mxu0 0
        %1620 = vmatprep.subr.bf16.mxu0 0
        %1621 = vmatpush1.bf16.msra.mxu0 0
        %1622 = vmatprep.mubr.bf16.mxu0 0
        %1623 = vmatmul.mubr.bf16.gmra.mrb[0].mxu0 %v1588
        %v1624 = vpop.f32.mrb[0].mxu0
        %v1625 = vadd.f32 0.0, %v1624
        %v1626 = vpop.f32.mrb[0].mxu0
        %v1627 = vpop.f32.mrb[0].mxu0
        %v1628 = vadd.f32 0.0, %v1627
        %v1629 = vpop.f32.mrb[0].mxu0
        %1630 = vdwg.mxu0
        %v1631 = vadd.f32 %v1444, %v1625
        %v1632 = vadd.f32 %v1445, %v1628
        %v1633 = vadd.f32 %v618, %v1631
        %v1634 = vadd.f32 %v619, %v1632
        %v1636 = vlaneseq
        %v1637 = vshrl.u32 %v1636, 7
        %v1638 = vsub.s32 0, %v1637
        %v1639 = vrot.slane %v885, %v1638
        %v1641 = vadd.f32 %v1633, %v1639
        %v1642 = vadd.f32 %v1634, %v1639
        %1643 = vadd.xlane.f32.xlu0 %v1641
        %v1644 = vpop.xlane.xlu0 %1643
        %1645 = vadd.xlane.f32.xlu0 %v1642
        %v1646 = vpop.xlane.xlu0 %1645
        %v1647 = vrcp.pop 128.0
        %v1648 = vmul.f32 %v1644, %v1647
        %v1649 = vmul.f32 %v1646, %v1647
        %v1650 = vsub.f32 %v1641, %v1648
        %v1651 = vsub.f32 %v1642, %v1649
        %v1652 = vmul.f32 %v1650, %v1650
        %v1653 = vmul.f32 %v1651, %v1651
        %1654 = vadd.xlane.f32.xlu0 %v1652
        %v1655 = vpop.xlane.xlu0 %1654
        %1656 = vadd.xlane.f32.xlu0 %v1653
        %v1657 = vpop.xlane.xlu0 %1656
        %v1658 = vmul.f32 %v1655, %v1647
        %v1659 = vmul.f32 %v1657, %v1647
        %v1660 = vadd.f32 %v1658, 1e-05
        %v1661 = vadd.f32 %v1659, 1e-05
        %v1662 = vrsqrt.pop %v1660
        %v1663 = vrsqrt.pop %v1661
        %v1664 = vmul.f32 %v1650, %v1662
        %v1665 = vmul.f32 %v1651, %v1663
        %v1667 = vlaneseq
        %v1668 = vshrl.u32 %v1667, 7
        %v1669 = vsub.s32 0, %v1668
        %v1670 = vrot.slane %v886, %v1669
        %v1672 = vmul.f32 %v1664, %v1670
        %v1673 = vmul.f32 %v1665, %v1670
        %v1675 = vlaneseq
        %v1676 = vshrl.u32 %v1675, 7
        %v1677 = vsub.s32 0, %v1676
        %v1678 = vrot.slane %v887, %v1677
        %v1680 = vadd.f32 %v1672, %v1678
        %v1681 = vadd.f32 %v1673, %v1678
        %v1682 = vpack.c.bf16 %v1681, %v1680
        %v1683 = vld [vmem:[#allocation14] sm:$0xff]
        %v1684 = vld [vmem:[#allocation14 + $0x8] sm:$0xff]
        %v1685 = vld [vmem:[#allocation14 + $0x10] sm:$0xff]
        %v1686 = vld [vmem:[#allocation14 + $0x18] sm:$0xff]
        %v1687 = vld [vmem:[#allocation14 + $0x20] sm:$0xff]
        %v1688 = vld [vmem:[#allocation14 + $0x28] sm:$0xff]
        %v1689 = vld [vmem:[#allocation14 + $0x30] sm:$0xff]
        %v1690 = vld [vmem:[#allocation14 + $0x38] sm:$0xff]
        %v1691 = vld [vmem:[#allocation14 + $0x40] sm:$0xff]
        %v1692 = vld [vmem:[#allocation14 + $0x48] sm:$0xff]
        %v1693 = vld [vmem:[#allocation14 + $0x50] sm:$0xff]
        %v1694 = vld [vmem:[#allocation14 + $0x58] sm:$0xff]
        %v1695 = vld [vmem:[#allocation14 + $0x60] sm:$0xff]
        %v1696 = vld [vmem:[#allocation14 + $0x68] sm:$0xff]
        %v1697 = vld [vmem:[#allocation14 + $0x70] sm:$0xff]
        %v1698 = vld [vmem:[#allocation14 + $0x78] sm:$0xff]
        %v1699 = vld [vmem:[#allocation14 + $0x80] sm:$0xff]
        %v1700 = vld [vmem:[#allocation14 + $0x88] sm:$0xff]
        %v1701 = vld [vmem:[#allocation14 + $0x90] sm:$0xff]
        %v1702 = vld [vmem:[#allocation14 + $0x98] sm:$0xff]
        %v1703 = vld [vmem:[#allocation14 + $0xa0] sm:$0xff]
        %v1704 = vld [vmem:[#allocation14 + $0xa8] sm:$0xff]
        %v1705 = vld [vmem:[#allocation14 + $0xb0] sm:$0xff]
        %v1706 = vld [vmem:[#allocation14 + $0xb8] sm:$0xff]
        %v1707 = vld [vmem:[#allocation14 + $0xc0] sm:$0xff]
        %v1708 = vld [vmem:[#allocation14 + $0xc8] sm:$0xff]
        %v1709 = vld [vmem:[#allocation14 + $0xd0] sm:$0xff]
        %v1710 = vld [vmem:[#allocation14 + $0xd8] sm:$0xff]
        %v1711 = vld [vmem:[#allocation14 + $0xe0] sm:$0xff]
        %v1712 = vld [vmem:[#allocation14 + $0xe8] sm:$0xff]
        %v1713 = vld [vmem:[#allocation14 + $0xf0] sm:$0xff]
        %v1714 = vld [vmem:[#allocation14 + $0xf8] sm:$0xff]
        %v1716 = vlaneseq
        %v1717 = vshrl.u32 %v1716, 7
        %v1718 = vsub.s32 0, %v1717
        %v1719 = vrot.slane %v890, %v1718
        %v1720 = vlaneseq
        %v1721 = vshrl.u32 %v1720, 7
        %v1722 = vsub.s32 1, %v1721
        %v1723 = vrot.slane %v890, %v1722
        %v1724 = vlaneseq
        %v1725 = vshrl.u32 %v1724, 7
        %v1726 = vsub.s32 2, %v1725
        %v1727 = vrot.slane %v890, %v1726
        %v1728 = vlaneseq
        %v1729 = vshrl.u32 %v1728, 7
        %v1730 = vsub.s32 3, %v1729
        %v1731 = vrot.slane %v890, %v1730
        %v1768 = vunpack.c.l.b16 %v1683
        %v1769 = vunpack.c.h.b16 %v1683
        %v1770 = vunpack.c.l.b16 %v1684
        %v1771 = vunpack.c.h.b16 %v1684
        %v1772 = vunpack.c.l.b16 %v1685
        %v1773 = vunpack.c.h.b16 %v1685
        %v1774 = vunpack.c.l.b16 %v1686
        %v1775 = vunpack.c.h.b16 %v1686
        %v1776 = vunpack.c.l.b16 %v1687
        %v1777 = vunpack.c.h.b16 %v1687
        %v1778 = vunpack.c.l.b16 %v1688
        %v1779 = vunpack.c.h.b16 %v1688
        %v1780 = vunpack.c.l.b16 %v1689
        %v1781 = vunpack.c.h.b16 %v1689
        %v1782 = vunpack.c.l.b16 %v1690
        %v1783 = vunpack.c.h.b16 %v1690
        %v1784 = vunpack.c.l.b16 %v1691
        %v1785 = vunpack.c.h.b16 %v1691
        %v1786 = vunpack.c.l.b16 %v1692
        %v1787 = vunpack.c.h.b16 %v1692
        %v1788 = vunpack.c.l.b16 %v1693
        %v1789 = vunpack.c.h.b16 %v1693
        %v1790 = vunpack.c.l.b16 %v1694
        %v1791 = vunpack.c.h.b16 %v1694
        %v1792 = vunpack.c.l.b16 %v1695
        %v1793 = vunpack.c.h.b16 %v1695
        %v1794 = vunpack.c.l.b16 %v1696
        %v1795 = vunpack.c.h.b16 %v1696
        %v1796 = vunpack.c.l.b16 %v1697
        %v1797 = vunpack.c.h.b16 %v1697
        %v1798 = vunpack.c.l.b16 %v1698
        %v1799 = vunpack.c.h.b16 %v1698
        %v1800 = vunpack.c.l.b16 %v1699
        %v1801 = vunpack.c.h.b16 %v1699
        %v1802 = vunpack.c.l.b16 %v1700
        %v1803 = vunpack.c.h.b16 %v1700
        %v1804 = vunpack.c.l.b16 %v1701
        %v1805 = vunpack.c.h.b16 %v1701
        %v1806 = vunpack.c.l.b16 %v1702
        %v1807 = vunpack.c.h.b16 %v1702
        %v1808 = vunpack.c.l.b16 %v1703
        %v1809 = vunpack.c.h.b16 %v1703
        %v1810 = vunpack.c.l.b16 %v1704
        %v1811 = vunpack.c.h.b16 %v1704
        %v1812 = vunpack.c.l.b16 %v1705
        %v1813 = vunpack.c.h.b16 %v1705
        %v1814 = vunpack.c.l.b16 %v1706
        %v1815 = vunpack.c.h.b16 %v1706
        %v1816 = vunpack.c.l.b16 %v1707
        %v1817 = vunpack.c.h.b16 %v1707
        %v1818 = vunpack.c.l.b16 %v1708
        %v1819 = vunpack.c.h.b16 %v1708
        %v1820 = vunpack.c.l.b16 %v1709
        %v1821 = vunpack.c.h.b16 %v1709
        %v1822 = vunpack.c.l.b16 %v1710
        %v1823 = vunpack.c.h.b16 %v1710
        %v1824 = vunpack.c.l.b16 %v1711
        %v1825 = vunpack.c.h.b16 %v1711
        %v1826 = vunpack.c.l.b16 %v1712
        %v1827 = vunpack.c.h.b16 %v1712
        %v1828 = vunpack.c.l.b16 %v1713
        %v1829 = vunpack.c.h.b16 %v1713
        %v1830 = vunpack.c.l.b16 %v1714
        %v1831 = vunpack.c.h.b16 %v1714
        %v1832 = vpack.c.b16 %v1772, %v1768
        %v1833 = vpack.c.b16 %v1773, %v1769
        %v1834 = vpack.c.b16 %v1774, %v1770
        %v1835 = vpack.c.b16 %v1775, %v1771
        %v1836 = vpack.c.b16 %v1780, %v1776
        %v1837 = vpack.c.b16 %v1781, %v1777
        %v1838 = vpack.c.b16 %v1782, %v1778
        %v1839 = vpack.c.b16 %v1783, %v1779
        %v1840 = vpack.c.b16 %v1788, %v1784
        %v1841 = vpack.c.b16 %v1789, %v1785
        %v1842 = vpack.c.b16 %v1790, %v1786
        %v1843 = vpack.c.b16 %v1791, %v1787
        %v1844 = vpack.c.b16 %v1796, %v1792
        %v1845 = vpack.c.b16 %v1797, %v1793
        %v1846 = vpack.c.b16 %v1798, %v1794
        %v1847 = vpack.c.b16 %v1799, %v1795
        %v1848 = vpack.c.b16 %v1804, %v1800
        %v1849 = vpack.c.b16 %v1805, %v1801
        %v1850 = vpack.c.b16 %v1806, %v1802
        %v1851 = vpack.c.b16 %v1807, %v1803
        %v1852 = vpack.c.b16 %v1812, %v1808
        %v1853 = vpack.c.b16 %v1813, %v1809
        %v1854 = vpack.c.b16 %v1814, %v1810
        %v1855 = vpack.c.b16 %v1815, %v1811
        %v1856 = vpack.c.b16 %v1820, %v1816
        %v1857 = vpack.c.b16 %v1821, %v1817
        %v1858 = vpack.c.b16 %v1822, %v1818
        %v1859 = vpack.c.b16 %v1823, %v1819
        %v1860 = vpack.c.b16 %v1828, %v1824
        %v1861 = vpack.c.b16 %v1829, %v1825
        %v1862 = vpack.c.b16 %v1830, %v1826
        %v1863 = vpack.c.b16 %v1831, %v1827
        %1896 = vmatprep.subr.bf16.mxu0 %v1833
        %1897 = vmatpush1.bf16.msra.mxu0 %v1832
        %1898 = vmatprep.subr.bf16.mxu0 %v1837
        %1899 = vmatpush1.bf16.msra.mxu0 %v1836
        %1900 = vmatprep.subr.bf16.mxu0 %v1841
        %1901 = vmatpush1.bf16.msra.mxu0 %v1840
        %1902 = vmatprep.subr.bf16.mxu0 %v1845
        %1903 = vmatpush1.bf16.msra.mxu0 %v1844
        %1904 = vmatprep.subr.bf16.mxu0 %v1849
        %1905 = vmatpush1.bf16.msra.mxu0 %v1848
        %1906 = vmatprep.subr.bf16.mxu0 %v1853
        %1907 = vmatpush1.bf16.msra.mxu0 %v1852
        %1908 = vmatprep.subr.bf16.mxu0 %v1857
        %1909 = vmatpush1.bf16.msra.mxu0 %v1856
        %1910 = vmatprep.subr.bf16.mxu0 %v1861
        %1911 = vmatpush1.bf16.msra.mxu0 %v1860
        %1912 = vmatprep.subr.bf16.mxu0 0
        %1913 = vmatpush1.bf16.msra.mxu0 0
        %1914 = vmatprep.subr.bf16.mxu0 0
        %1915 = vmatpush1.bf16.msra.mxu0 0
        %1916 = vmatprep.subr.bf16.mxu0 0
        %1917 = vmatpush1.bf16.msra.mxu0 0
        %1918 = vmatprep.subr.bf16.mxu0 0
        %1919 = vmatpush1.bf16.msra.mxu0 0
        %1920 = vmatprep.subr.bf16.mxu0 0
        %1921 = vmatpush1.bf16.msra.mxu0 0
        %1922 = vmatprep.subr.bf16.mxu0 0
        %1923 = vmatpush1.bf16.msra.mxu0 0
        %1924 = vmatprep.subr.bf16.mxu0 0
        %1925 = vmatpush1.bf16.msra.mxu0 0
        %1926 = vmatprep.subr.bf16.mxu0 0
        %1927 = vmatpush1.bf16.msra.mxu0 0
        %1928 = vmatprep.mubr.bf16.mxu0 0
        %1929 = vmatmul.mubr.bf16.gmra.mrb[0].mxu0 %v1682
        %v1930 = vpop.f32.mrb[0].mxu0
        %v1931 = vadd.f32 %v1719, %v1930
        %v1932 = vpop.f32.mrb[0].mxu0
        %v1933 = vadd.f32 %v1723, %v1932
        %v1934 = vpop.f32.mrb[0].mxu0
        %v1935 = vadd.f32 %v1719, %v1934
        %v1936 = vpop.f32.mrb[0].mxu0
        %v1937 = vadd.f32 %v1723, %v1936
        %1938 = vdwg.mxu0
        %1939 = vmatprep.subr.bf16.mxu0 %v1835
        %1940 = vmatpush1.bf16.msra.mxu0 %v1834
        %1941 = vmatprep.subr.bf16.mxu0 %v1839
        %1942 = vmatpush1.bf16.msra.mxu0 %v1838
        %1943 = vmatprep.subr.bf16.mxu0 %v1843
        %1944 = vmatpush1.bf16.msra.mxu0 %v1842
        %1945 = vmatprep.subr.bf16.mxu0 %v1847
        %1946 = vmatpush1.bf16.msra.mxu0 %v1846
        %1947 = vmatprep.subr.bf16.mxu0 %v1851
        %1948 = vmatpush1.bf16.msra.mxu0 %v1850
        %1949 = vmatprep.subr.bf16.mxu0 %v1855
        %1950 = vmatpush1.bf16.msra.mxu0 %v1854
        %1951 = vmatprep.subr.bf16.mxu0 %v1859
        %1952 = vmatpush1.bf16.msra.mxu0 %v1858
        %1953 = vmatprep.subr.bf16.mxu0 %v1863
        %1954 = vmatpush1.bf16.msra.mxu0 %v1862
        %1955 = vmatprep.subr.bf16.mxu0 0
        %1956 = vmatpush1.bf16.msra.mxu0 0
        %1957 = vmatprep.subr.bf16.mxu0 0
        %1958 = vmatpush1.bf16.msra.mxu0 0
        %1959 = vmatprep.subr.bf16.mxu0 0
        %1960 = vmatpush1.bf16.msra.mxu0 0
        %1961 = vmatprep.subr.bf16.mxu0 0
        %1962 = vmatpush1.bf16.msra.mxu0 0
        %1963 = vmatprep.subr.bf16.mxu0 0
        %1964 = vmatpush1.bf16.msra.mxu0 0
        %1965 = vmatprep.subr.bf16.mxu0 0
        %1966 = vmatpush1.bf16.msra.mxu0 0
        %1967 = vmatprep.subr.bf16.mxu0 0
        %1968 = vmatpush1.bf16.msra.mxu0 0
        %1969 = vmatprep.subr.bf16.mxu0 0
        %1970 = vmatpush1.bf16.msra.mxu0 0
        %1971 = vmatprep.mubr.bf16.mxu0 0
        %1972 = vmatmul.mubr.bf16.gmra.mrb[0].mxu0 %v1682
        %v1973 = vpop.f32.mrb[0].mxu0
        %v1974 = vadd.f32 %v1727, %v1973
        %v1975 = vpop.f32.mrb[0].mxu0
        %v1976 = vadd.f32 %v1731, %v1975
        %v1977 = vpop.f32.mrb[0].mxu0
        %v1978 = vadd.f32 %v1727, %v1977
        %v1979 = vpop.f32.mrb[0].mxu0
        %v1980 = vadd.f32 %v1731, %v1979
        %1981 = vdwg.mxu0
        %v1982 = vmax.f32 %v1931, 0.0
        %v1983 = vmax.f32 %v1933, 0.0
        %v1984 = vmax.f32 %v1974, 0.0
        %v1985 = vmax.f32 %v1976, 0.0
        %v1986 = vmax.f32 %v1935, 0.0
        %v1987 = vmax.f32 %v1937, 0.0
        %v1988 = vmax.f32 %v1978, 0.0
        %v1989 = vmax.f32 %v1980, 0.0
        %v1990 = vpack.c.bf16 %v1986, %v1982
        %v1991 = vpack.c.bf16 %v1987, %v1983
        %v1992 = vpack.c.bf16 %v1988, %v1984
        %v1993 = vpack.c.bf16 %v1989, %v1985
        %v1994 = vld [vmem:[#allocation17] sm:$0xf]
        %v1995 = vld [vmem:[#allocation17 + $0x4] sm:$0xf]
        %v1996 = vld [vmem:[#allocation17 + $0x8] sm:$0xf]
        %v1997 = vld [vmem:[#allocation17 + $0xc] sm:$0xf]
        %v1998 = vld [vmem:[#allocation17 + $0x10] sm:$0xf]
        %v1999 = vld [vmem:[#allocation17 + $0x14] sm:$0xf]
        %v2000 = vld [vmem:[#allocation17 + $0x18] sm:$0xf]
        %v2001 = vld [vmem:[#allocation17 + $0x1c] sm:$0xf]
        %v2002 = vld [vmem:[#allocation17 + $0x20] sm:$0xf]
        %v2003 = vld [vmem:[#allocation17 + $0x24] sm:$0xf]
        %v2004 = vld [vmem:[#allocation17 + $0x28] sm:$0xf]
        %v2005 = vld [vmem:[#allocation17 + $0x2c] sm:$0xf]
        %v2006 = vld [vmem:[#allocation17 + $0x30] sm:$0xf]
        %v2007 = vld [vmem:[#allocation17 + $0x34] sm:$0xf]
        %v2008 = vld [vmem:[#allocation17 + $0x38] sm:$0xf]
        %v2009 = vld [vmem:[#allocation17 + $0x3c] sm:$0xf]
        %v2010 = vld [vmem:[#allocation17 + $0x40] sm:$0xf]
        %v2011 = vld [vmem:[#allocation17 + $0x44] sm:$0xf]
        %v2012 = vld [vmem:[#allocation17 + $0x48] sm:$0xf]
        %v2013 = vld [vmem:[#allocation17 + $0x4c] sm:$0xf]
        %v2014 = vld [vmem:[#allocation17 + $0x50] sm:$0xf]
        %v2015 = vld [vmem:[#allocation17 + $0x54] sm:$0xf]
        %v2016 = vld [vmem:[#allocation17 + $0x58] sm:$0xf]
        %v2017 = vld [vmem:[#allocation17 + $0x5c] sm:$0xf]
        %v2018 = vld [vmem:[#allocation17 + $0x60] sm:$0xf]
        %v2019 = vld [vmem:[#allocation17 + $0x64] sm:$0xf]
        %v2020 = vld [vmem:[#allocation17 + $0x68] sm:$0xf]
        %v2021 = vld [vmem:[#allocation17 + $0x6c] sm:$0xf]
        %v2022 = vld [vmem:[#allocation17 + $0x70] sm:$0xf]
        %v2023 = vld [vmem:[#allocation17 + $0x74] sm:$0xf]
        %v2024 = vld [vmem:[#allocation17 + $0x78] sm:$0xf]
        %v2025 = vld [vmem:[#allocation17 + $0x7c] sm:$0xf]
        %v2026 = vld [vmem:[#allocation17 + $0x80] sm:$0xf]
        %v2027 = vld [vmem:[#allocation17 + $0x84] sm:$0xf]
        %v2028 = vld [vmem:[#allocation17 + $0x88] sm:$0xf]
        %v2029 = vld [vmem:[#allocation17 + $0x8c] sm:$0xf]
        %v2030 = vld [vmem:[#allocation17 + $0x90] sm:$0xf]
        %v2031 = vld [vmem:[#allocation17 + $0x94] sm:$0xf]
        %v2032 = vld [vmem:[#allocation17 + $0x98] sm:$0xf]
        %v2033 = vld [vmem:[#allocation17 + $0x9c] sm:$0xf]
        %v2034 = vld [vmem:[#allocation17 + $0xa0] sm:$0xf]
        %v2035 = vld [vmem:[#allocation17 + $0xa4] sm:$0xf]
        %v2036 = vld [vmem:[#allocation17 + $0xa8] sm:$0xf]
        %v2037 = vld [vmem:[#allocation17 + $0xac] sm:$0xf]
        %v2038 = vld [vmem:[#allocation17 + $0xb0] sm:$0xf]
        %v2039 = vld [vmem:[#allocation17 + $0xb4] sm:$0xf]
        %v2040 = vld [vmem:[#allocation17 + $0xb8] sm:$0xf]
        %v2041 = vld [vmem:[#allocation17 + $0xbc] sm:$0xf]
        %v2042 = vld [vmem:[#allocation17 + $0xc0] sm:$0xf]
        %v2043 = vld [vmem:[#allocation17 + $0xc4] sm:$0xf]
        %v2044 = vld [vmem:[#allocation17 + $0xc8] sm:$0xf]
        %v2045 = vld [vmem:[#allocation17 + $0xcc] sm:$0xf]
        %v2046 = vld [vmem:[#allocation17 + $0xd0] sm:$0xf]
        %v2047 = vld [vmem:[#allocation17 + $0xd4] sm:$0xf]
        %v2048 = vld [vmem:[#allocation17 + $0xd8] sm:$0xf]
        %v2049 = vld [vmem:[#allocation17 + $0xdc] sm:$0xf]
        %v2050 = vld [vmem:[#allocation17 + $0xe0] sm:$0xf]
        %v2051 = vld [vmem:[#allocation17 + $0xe4] sm:$0xf]
        %v2052 = vld [vmem:[#allocation17 + $0xe8] sm:$0xf]
        %v2053 = vld [vmem:[#allocation17 + $0xec] sm:$0xf]
        %v2054 = vld [vmem:[#allocation17 + $0xf0] sm:$0xf]
        %v2055 = vld [vmem:[#allocation17 + $0xf4] sm:$0xf]
        %v2056 = vld [vmem:[#allocation17 + $0xf8] sm:$0xf]
        %v2057 = vld [vmem:[#allocation17 + $0xfc] sm:$0xf]
        %v2059 = vlaneseq
        %v2060 = vshrl.u32 %v2059, 7
        %v2061 = vsub.s32 0, %v2060
        %v2062 = vrot.slane %v891, %v2061
        %v2128 = vunpack.c.l.b16 %v1994
        %v2129 = vunpack.c.l.b16 %v1995
        %v2130 = vunpack.c.l.b16 %v1996
        %v2131 = vunpack.c.l.b16 %v1997
        %v2132 = vunpack.c.l.b16 %v1998
        %v2133 = vunpack.c.l.b16 %v1999
        %v2134 = vunpack.c.l.b16 %v2000
        %v2135 = vunpack.c.l.b16 %v2001
        %v2136 = vunpack.c.l.b16 %v2002
        %v2137 = vunpack.c.l.b16 %v2003
        %v2138 = vunpack.c.l.b16 %v2004
        %v2139 = vunpack.c.l.b16 %v2005
        %v2140 = vunpack.c.l.b16 %v2006
        %v2141 = vunpack.c.l.b16 %v2007
        %v2142 = vunpack.c.l.b16 %v2008
        %v2143 = vunpack.c.l.b16 %v2009
        %v2144 = vunpack.c.l.b16 %v2010
        %v2145 = vunpack.c.l.b16 %v2011
        %v2146 = vunpack.c.l.b16 %v2012
        %v2147 = vunpack.c.l.b16 %v2013
        %v2148 = vunpack.c.l.b16 %v2014
        %v2149 = vunpack.c.l.b16 %v2015
        %v2150 = vunpack.c.l.b16 %v2016
        %v2151 = vunpack.c.l.b16 %v2017
        %v2152 = vunpack.c.l.b16 %v2018
        %v2153 = vunpack.c.l.b16 %v2019
        %v2154 = vunpack.c.l.b16 %v2020
        %v2155 = vunpack.c.l.b16 %v2021
        %v2156 = vunpack.c.l.b16 %v2022
        %v2157 = vunpack.c.l.b16 %v2023
        %v2158 = vunpack.c.l.b16 %v2024
        %v2159 = vunpack.c.l.b16 %v2025
        %v2160 = vunpack.c.l.b16 %v2026
        %v2161 = vunpack.c.l.b16 %v2027
        %v2162 = vunpack.c.l.b16 %v2028
        %v2163 = vunpack.c.l.b16 %v2029
        %v2164 = vunpack.c.l.b16 %v2030
        %v2165 = vunpack.c.l.b16 %v2031
        %v2166 = vunpack.c.l.b16 %v2032
        %v2167 = vunpack.c.l.b16 %v2033
        %v2168 = vunpack.c.l.b16 %v2034
        %v2169 = vunpack.c.l.b16 %v2035
        %v2170 = vunpack.c.l.b16 %v2036
        %v2171 = vunpack.c.l.b16 %v2037
        %v2172 = vunpack.c.l.b16 %v2038
        %v2173 = vunpack.c.l.b16 %v2039
        %v2174 = vunpack.c.l.b16 %v2040
        %v2175 = vunpack.c.l.b16 %v2041
        %v2176 = vunpack.c.l.b16 %v2042
        %v2177 = vunpack.c.l.b16 %v2043
        %v2178 = vunpack.c.l.b16 %v2044
        %v2179 = vunpack.c.l.b16 %v2045
        %v2180 = vunpack.c.l.b16 %v2046
        %v2181 = vunpack.c.l.b16 %v2047
        %v2182 = vunpack.c.l.b16 %v2048
        %v2183 = vunpack.c.l.b16 %v2049
        %v2184 = vunpack.c.l.b16 %v2050
        %v2185 = vunpack.c.l.b16 %v2051
        %v2186 = vunpack.c.l.b16 %v2052
        %v2187 = vunpack.c.l.b16 %v2053
        %v2188 = vunpack.c.l.b16 %v2054
        %v2189 = vunpack.c.l.b16 %v2055
        %v2190 = vunpack.c.l.b16 %v2056
        %v2191 = vunpack.c.l.b16 %v2057
        %v2192 = vpack.c.b16 %v2129, %v2128
        %v2193 = vpack.c.b16 %v2131, %v2130
        %v2194 = vpack.c.b16 %v2133, %v2132
        %v2195 = vpack.c.b16 %v2135, %v2134
        %v2196 = vpack.c.b16 %v2137, %v2136
        %v2197 = vpack.c.b16 %v2139, %v2138
        %v2198 = vpack.c.b16 %v2141, %v2140
        %v2199 = vpack.c.b16 %v2143, %v2142
        %v2200 = vpack.c.b16 %v2145, %v2144
        %v2201 = vpack.c.b16 %v2147, %v2146
        %v2202 = vpack.c.b16 %v2149, %v2148
        %v2203 = vpack.c.b16 %v2151, %v2150
        %v2204 = vpack.c.b16 %v2153, %v2152
        %v2205 = vpack.c.b16 %v2155, %v2154
        %v2206 = vpack.c.b16 %v2157, %v2156
        %v2207 = vpack.c.b16 %v2159, %v2158
        %v2208 = vpack.c.b16 %v2161, %v2160
        %v2209 = vpack.c.b16 %v2163, %v2162
        %v2210 = vpack.c.b16 %v2165, %v2164
        %v2211 = vpack.c.b16 %v2167, %v2166
        %v2212 = vpack.c.b16 %v2169, %v2168
        %v2213 = vpack.c.b16 %v2171, %v2170
        %v2214 = vpack.c.b16 %v2173, %v2172
        %v2215 = vpack.c.b16 %v2175, %v2174
        %v2216 = vpack.c.b16 %v2177, %v2176
        %v2217 = vpack.c.b16 %v2179, %v2178
        %v2218 = vpack.c.b16 %v2181, %v2180
        %v2219 = vpack.c.b16 %v2183, %v2182
        %v2220 = vpack.c.b16 %v2185, %v2184
        %v2221 = vpack.c.b16 %v2187, %v2186
        %v2222 = vpack.c.b16 %v2189, %v2188
        %v2223 = vpack.c.b16 %v2191, %v2190
        %2256 = vmatprep.subr.bf16.mxu0 0
        %2257 = vmatpush1.bf16.msra.mxu0 %v2192
        %2258 = vmatprep.subr.bf16.mxu0 0
        %2259 = vmatpush1.bf16.msra.mxu0 %v2193
        %2260 = vmatprep.subr.bf16.mxu0 0
        %2261 = vmatpush1.bf16.msra.mxu0 %v2194
        %2262 = vmatprep.subr.bf16.mxu0 0
        %2263 = vmatpush1.bf16.msra.mxu0 %v2195
        %2264 = vmatprep.subr.bf16.mxu0 0
        %2265 = vmatpush1.bf16.msra.mxu0 %v2196
        %2266 = vmatprep.subr.bf16.mxu0 0
        %2267 = vmatpush1.bf16.msra.mxu0 %v2197
        %2268 = vmatprep.subr.bf16.mxu0 0
        %2269 = vmatpush1.bf16.msra.mxu0 %v2198
        %2270 = vmatprep.subr.bf16.mxu0 0
        %2271 = vmatpush1.bf16.msra.mxu0 %v2199
        %2272 = vmatprep.subr.bf16.mxu0 0
        %2273 = vmatpush1.bf16.msra.mxu0 %v2200
        %2274 = vmatprep.subr.bf16.mxu0 0
        %2275 = vmatpush1.bf16.msra.mxu0 %v2201
        %2276 = vmatprep.subr.bf16.mxu0 0
        %2277 = vmatpush1.bf16.msra.mxu0 %v2202
        %2278 = vmatprep.subr.bf16.mxu0 0
        %2279 = vmatpush1.bf16.msra.mxu0 %v2203
        %2280 = vmatprep.subr.bf16.mxu0 0
        %2281 = vmatpush1.bf16.msra.mxu0 %v2204
        %2282 = vmatprep.subr.bf16.mxu0 0
        %2283 = vmatpush1.bf16.msra.mxu0 %v2205
        %2284 = vmatprep.subr.bf16.mxu0 0
        %2285 = vmatpush1.bf16.msra.mxu0 %v2206
        %2286 = vmatprep.subr.bf16.mxu0 0
        %2287 = vmatpush1.bf16.msra.mxu0 %v2207
        %2288 = vmatprep.mubr.bf16.mxu0 %v1991
        %2289 = vmatmul.mubr.bf16.gmra.mrb[0].mxu0 %v1990
        %v2290 = vpop.f32.mrb[0].mxu0
        %v2291 = vadd.f32 %v2062, %v2290
        %v2292 = vpop.f32.mrb[0].mxu0
        %v2293 = vpop.f32.mrb[0].mxu0
        %v2294 = vadd.f32 %v2062, %v2293
        %v2295 = vpop.f32.mrb[0].mxu0
        %2296 = vdwg.mxu0
        %2297 = vmatprep.subr.bf16.mxu0 0
        %2298 = vmatpush1.bf16.msra.mxu0 %v2208
        %2299 = vmatprep.subr.bf16.mxu0 0
        %2300 = vmatpush1.bf16.msra.mxu0 %v2209
        %2301 = vmatprep.subr.bf16.mxu0 0
        %2302 = vmatpush1.bf16.msra.mxu0 %v2210
        %2303 = vmatprep.subr.bf16.mxu0 0
        %2304 = vmatpush1.bf16.msra.mxu0 %v2211
        %2305 = vmatprep.subr.bf16.mxu0 0
        %2306 = vmatpush1.bf16.msra.mxu0 %v2212
        %2307 = vmatprep.subr.bf16.mxu0 0
        %2308 = vmatpush1.bf16.msra.mxu0 %v2213
        %2309 = vmatprep.subr.bf16.mxu0 0
        %2310 = vmatpush1.bf16.msra.mxu0 %v2214
        %2311 = vmatprep.subr.bf16.mxu0 0
        %2312 = vmatpush1.bf16.msra.mxu0 %v2215
        %2313 = vmatprep.subr.bf16.mxu0 0
        %2314 = vmatpush1.bf16.msra.mxu0 %v2216
        %2315 = vmatprep.subr.bf16.mxu0 0
        %2316 = vmatpush1.bf16.msra.mxu0 %v2217
        %2317 = vmatprep.subr.bf16.mxu0 0
        %2318 = vmatpush1.bf16.msra.mxu0 %v2218
        %2319 = vmatprep.subr.bf16.mxu0 0
        %2320 = vmatpush1.bf16.msra.mxu0 %v2219
        %2321 = vmatprep.subr.bf16.mxu0 0
        %2322 = vmatpush1.bf16.msra.mxu0 %v2220
        %2323 = vmatprep.subr.bf16.mxu0 0
        %2324 = vmatpush1.bf16.msra.mxu0 %v2221
        %2325 = vmatprep.subr.bf16.mxu0 0
        %2326 = vmatpush1.bf16.msra.mxu0 %v2222
        %2327 = vmatprep.subr.bf16.mxu0 0
        %2328 = vmatpush1.bf16.msra.mxu0 %v2223
        %2329 = vmatprep.mubr.bf16.mxu0 %v1993
        %2330 = vmatmul.mubr.bf16.gmra.mrb[0].mxu0 %v1992
        %v2331 = vpop.f32.mrb[0].mxu0
        %v2332 = vadd.f32 %v2291, %v2331
        %v2333 = vpop.f32.mrb[0].mxu0
        %v2334 = vpop.f32.mrb[0].mxu0
        %v2335 = vadd.f32 %v2294, %v2334
        %v2336 = vpop.f32.mrb[0].mxu0
        %2337 = vdwg.mxu0
        %v2338 = vadd.f32 %v1680, %v2332
        %v2339 = vadd.f32 %v1681, %v2335
        %2340 = vadd.xlane.f32.xlu0 %v2338
        %v2341 = vpop.xlane.xlu0 %2340
        %2342 = vadd.xlane.f32.xlu0 %v2339
        %v2343 = vpop.xlane.xlu0 %2342
        %v2344 = vmul.f32 %v2341, %v1647
        %v2345 = vmul.f32 %v2343, %v1647
        %v2346 = vsub.f32 %v2338, %v2344
        %v2347 = vsub.f32 %v2339, %v2345
        %v2348 = vmul.f32 %v2346, %v2346
        %v2349 = vmul.f32 %v2347, %v2347
        %2350 = vadd.xlane.f32.xlu0 %v2348
        %v2351 = vpop.xlane.xlu0 %2350
        %2352 = vadd.xlane.f32.xlu0 %v2349
        %v2353 = vpop.xlane.xlu0 %2352
        %v2354 = vmul.f32 %v2351, %v1647
        %v2355 = vmul.f32 %v2353, %v1647
        %v2356 = vadd.f32 %v2354, 1e-05
        %v2357 = vadd.f32 %v2355, 1e-05
        %v2358 = vrsqrt.pop %v2356
        %v2359 = vrsqrt.pop %v2357
        %v2360 = vmul.f32 %v2346, %v2358
        %v2361 = vmul.f32 %v2347, %v2359
        %v2363 = vlaneseq
        %v2364 = vshrl.u32 %v2363, 7
        %v2365 = vsub.s32 0, %v2364
        %v2366 = vrot.slane %v888, %v2365
        %v2368 = vmul.f32 %v2360, %v2366
        %v2369 = vmul.f32 %v2361, %v2366
        %v2371 = vlaneseq
        %v2372 = vshrl.u32 %v2371, 7
        %v2373 = vsub.s32 0, %v2372
        %v2374 = vrot.slane %v889, %v2373
        %v2376 = vadd.f32 %v2368, %v2374
        %v2377 = vadd.f32 %v2369, %v2374
        %2378 = vst [vmem:[%s616] sm:$0xff] %v2376
        %2379 = vst [vmem:[%s616 + $0x8] sm:$0xff] %v2377
        %s2380 = sand.u32 %s322, 1
        %s2381 = scalar_lea.sflag [#allocation4], %s2380
        %s2382 = sand.u32 %s322, 1
        %s2383 = smul.addr %s2382, 16
        %s2384 = scalar_lea.vmem [#allocation23], %s2383
        // Predicated region
        $region125: #{forward.9} parent=71 // pred_check
          %p2385 = pneg %p332
        $region126: #{forward.9} parent=71 // pred_check_branch
          %2387 = sbr.rel (%p2385) target = $region128
        $region127: #{forward.9} parent=71 // pred_region
          %s2389 = ssub.s32 256, 256
          %2390 = vsyncadd %s2381, %s2389
          %s2391 = smul.addr %s36, 2
          %s2392 = smul.addr %s2391, 128
          %s2393 = scalar_lea.hbm %s13, %s2392
          %s2394 = sshll.u32 %s2384, 4
          %s2395 = int_to_ptr.vmem [resolvable:$true] %s2394
          %2400 = dma.vmem_to_hbm [thread:$0]  %s2395, 256, %s2393, %s2381, 128, 128, 8
        $region128: #{forward.9} parent=71 // pred_fallthru
          _
      $region72: #{forward.9} parent=5 // pred_fallthru
        _
      %p2401 = scmp.le.s32.totalorder 2, %s31
      // Predicated region
      $region129: #{forward.9} parent=5 // pred_check
        %p2402 = pneg %p2401
      $region130: #{forward.9} parent=5 // pred_check_branch
        %2404 = sbr.rel (%p2402) target = $region132
      $region131: #{forward.9} parent=5 // pred_region
        %s2405 = ssub.s32 %s31, 2
        // Predicated region
        $region133: #{forward.9} parent=131 // pred_check
          %p2406 = pneg %p338
        $region134: #{forward.9} parent=131 // pred_check_branch
          %2408 = sbr.rel (%p2406) target = $region136
        $region135: #{forward.9} parent=131 // pred_region
          %s2409 = sand.u32 %s323, 1
          %s2410 = scalar_lea.sflag [#allocation4], %s2409
          %s2411 = sand.u32 %s323, 1
          %s2412 = smul.addr %s2411, 16
          %s2413 = scalar_lea.vmem [#allocation23], %s2412
          %2414 = dma.done %s2410, 256
        $region136: #{forward.9} parent=131 // pred_fallthru
          _
      $region132: #{forward.9} parent=5 // pred_fallthru
        _
    $region6: #{forward.9} parent=1 // loop_footer
      %s35 = sadd.s32 1, %s31
    $region7: #{forward.9} parent=1 // loop_footer_branch
      %30 = sbr.rel target = $region3
    $region8: #{forward.9} parent=1 // loop_exit
      _
    %2415 = vsyncpa [#allocation3], 1
    %s2416 = scalar_lea.sflag [#allocation3], 1
    %2417 = vsyncpa %s2416, 1
    %2418 = vsyncpa [#allocation6], 1
    %2419 = vsyncpa [#allocation9], 1
    %2420 = vsyncpa [#allocation12], 1
    %2421 = vsyncpa [#allocation15], 1
    %2422 = vsyncpa [#allocation18], 1
    %2423 = vsyncpa [#allocation21], 1
    %2424 = vsyncpa [#allocation4], 1
    %s2425 = scalar_lea.sflag [#allocation4], 1
    %2426 = vsyncpa %s2425, 1

</llo_original>
